<compile_context>
chip_gen: v7x
topology: tpu7x:2x2x1
jax: 0.10.0
libtpu: 0.0.40
codegen_flags: <defaults>
</compile_context>

<pallas_src>
import functools

import jax
import jax.numpy as jnp
from jax.experimental import pallas as pl
from jax.experimental.pallas import tpu as pltpu


# ----------------------------------------------------------------------------
# Pallas kernel: one grid step == `block_b` batch elements x `tile_n` points.
# ----------------------------------------------------------------------------
def stn3d_kernel(block_b, tile_n, n_real, has_pad,
                 x_ref,
                 w1_ref, t1_ref,
                 w2_ref, t2_ref,
                 w3_ref, t3_ref,
                 wf1_ref, t4_ref,
                 wf2_ref, t5_ref,
                 wf3_ref, bf3_ref,
                 out_ref,
                 gmax_ref):
    n_idx = pl.program_id(1)
    rows = block_b * tile_n

    # (block_b, tile_n, C) bf16 -> (rows, C); tile_n % 8 == 0 so this is free.
    x = x_ref[...].reshape(rows, x_ref.shape[-1])

    # conv1 (1x1) + folded bn1 + relu  -> (rows, 64)
    h = jnp.dot(x, w1_ref[...], preferred_element_type=jnp.float32)
    h = jnp.maximum(h + t1_ref[...], 0.0)
    # conv2 (1x1) + folded bn2 + relu  -> (rows, 128)
    h = jnp.dot(h.astype(jnp.bfloat16), w2_ref[...],
                preferred_element_type=jnp.float32)
    h = jnp.maximum(h + t2_ref[...], 0.0)
    # conv3 (1x1) + folded bn3 + relu  -> (rows, 1024); stored bf16 (VMEM win)
    h = jnp.dot(h.astype(jnp.bfloat16), w3_ref[...],
                preferred_element_type=jnp.float32)
    h = jnp.maximum(h + t3_ref[...], 0.0).astype(jnp.bfloat16)

    # per-tile max over the points axis
    h = h.reshape(block_b, tile_n, h.shape[-1])
    if has_pad:
        # zero out padded points; real points' relu output is >= 0, so padded
        # zeros never win the max.
        pt = n_idx * tile_n + jax.lax.broadcasted_iota(
            jnp.int32, (block_b, tile_n, 1), 1)
        h = jnp.where(pt < n_real, h, jnp.zeros_like(h))
    tile_max = jnp.max(h, axis=1).astype(jnp.float32)          # (block_b, 1024)

    # running global max over all point tiles (torch.max(x, 2))
    @pl.when(n_idx == 0)
    def _():
        gmax_ref[...] = jnp.zeros_like(gmax_ref)
    gmax_ref[...] = jnp.maximum(gmax_ref[...], tile_max)

    # FC head only on the last point tile
    @pl.when(n_idx == pl.num_programs(1) - 1)
    def _():
        g = gmax_ref[...]                                       # (block_b, 1024)
        # fc1 + folded bn4 + relu -> (block_b, 512)
        f = jnp.dot(g.astype(jnp.bfloat16), wf1_ref[...],
                    preferred_element_type=jnp.float32)
        f = jnp.maximum(f + t4_ref[...], 0.0)
        # fc2 + folded bn5 + relu -> (block_b, 256)
        f = jnp.dot(f.astype(jnp.bfloat16), wf2_ref[...],
                    preferred_element_type=jnp.float32)
        f = jnp.maximum(f + t5_ref[...], 0.0)
        # fc3 (+ bias + folded 3x3 identity), 128-lane padded output
        out_ref[...] = (jnp.dot(f, wf3_ref[...],
                                preferred_element_type=jnp.float32)
                        + bf3_ref[...])


# ----------------------------------------------------------------------------
# Generation-aware tiling heuristic.
# ----------------------------------------------------------------------------
def _vmem_capacity_bytes():
    try:
        info = pltpu.get_tpu_info()
        cap = getattr(info, "vmem_capacity_bytes", None)
        if cap:
            return int(cap)
    except Exception:
        pass
    return 64 * 1024 * 1024          # conservative fallback (v7x per-TC VMEM)


def _choose_tiling(B, N, vmem_cap):
    # Conservative per-row VMEM estimate (row == one point of one batch elem):
    #   bf16 input block (128-lane padded, x2 pipeline buffers)   ~512 B
    #   h64/h128 f32 + their bf16 copies                          ~1.5 KiB
    #   h1024 f32 dot result + bf16 stored copy                   ~6 KiB
    bytes_per_row = 8 * 1024
    reserved = 7 * 1024 * 1024       # double-buffered folded weights + scratch + slack
    act_budget = max(4 * 1024 * 1024, int(0.6 * vmem_cap) - reserved)
    # multiple of 256 rows -> full MXU passes on the 256-wide units (v6e/v7x)
    max_rows = max(256, (act_budget // bytes_per_row // 256) * 256)

    # block_b: divisor of B that is a multiple of 8 (sublane-aligned output block)
    # or B itself; prefer an even batch grid >= 2 so v7x's two TCs stay busy.
    cands = [d for d in range(B, 0, -1) if B % d == 0 and (d % 8 == 0 or d == B)]
    pref = ([d for d in cands if (B // d) >= 2 and (B // d) % 2 == 0]
            or [d for d in cands if (B // d) >= 2]
            or cands)
    fits = [d for d in pref if d * 8 <= max_rows]
    block_b = fits[0] if fits else min(cands)

    # tile_n: largest multiple of 8 such that block_b*tile_n <= max_rows, then
    # rebalanced so the last tile carries minimal padding.
    n_pad8 = -(-N // 8) * 8
    tn_max = min(n_pad8, max(8, (max_rows // block_b // 8) * 8))
    n_tiles = -(-n_pad8 // tn_max)
    q = -(-N // n_tiles)
    tile_n = -(-q // 8) * 8
    return block_b, tile_n


# ----------------------------------------------------------------------------
# Wrapper (glue): layout transpose, point padding, BlockSpecs, output slicing.
# ----------------------------------------------------------------------------
def stn3d_forward(x_ncl, params, *, block_b=None, tile_n=None):
    B, C, N = x_ncl.shape
    vmem_cap = _vmem_capacity_bytes()
    auto_bb, auto_tn = _choose_tiling(B, N, vmem_cap)
    if block_b is None:
        block_b = auto_bb
    if tile_n is None:
        tile_n = auto_tn
    assert B % block_b == 0, "block_b must divide the batch size"
    assert block_b % 8 == 0 or block_b == B, "block_b must be 8-aligned or == B"
    assert tile_n % 8 == 0, "tile_n must be a multiple of 8"

    n_tiles = -(-N // tile_n)
    n_pad = n_tiles * tile_n
    has_pad = n_pad > N

    # channels-last bf16 activations; pad the points axis (masked in-kernel)
    x = jnp.transpose(x_ncl, (0, 2, 1)).astype(jnp.bfloat16)      # (B, N, C)
    if has_pad:
        x = jnp.pad(x, ((0, 0), (0, n_pad - N), (0, 0)))

    in_specs = [pl.BlockSpec((block_b, tile_n, C), lambda b, n: (b, n, 0))]
    in_specs += [pl.BlockSpec(p.shape, lambda b, n: (0, 0)) for p in params]

    vmem_limit = max(32 * 1024 * 1024,
                     min(int(vmem_cap * 0.8), 112 * 1024 * 1024))

    out = pl.pallas_call(
        functools.partial(stn3d_kernel, block_b, tile_n, N, has_pad),
        out_shape=jax.ShapeDtypeStruct((B, 128), jnp.float32),
        grid_spec=pltpu.PrefetchScalarGridSpec(
            num_scalar_prefetch=0,
            grid=(B // block_b, n_tiles),
            in_specs=in_specs,
            out_specs=pl.BlockSpec((block_b, 128), lambda b, n: (b, 0)),
            scratch_shapes=[pltpu.VMEM((block_b, 1024), jnp.float32)],
        ),
        compiler_params=pltpu.CompilerParams(
            dimension_semantics=("parallel", "arbitrary"),
            vmem_limit_bytes=vmem_limit,
        ),
    )(x, *params)
    return out[:, :9].reshape(B, 3, 3)


# ----------------------------------------------------------------------------
# Deterministic PyTorch-style raw parameters (shapes from STN3d.__init__).
# ----------------------------------------------------------------------------
def init_raw_params(channel, key):
    keys = iter(jax.random.split(key, 64))

    def nrm(shape, s=0.05):
        return s * jax.random.normal(next(keys), shape, dtype=jnp.float32)

    def layer(cout, cin):
        return {"w": nrm((cout, cin)), "b": nrm((cout,), 0.05)}

    def bn(c):
        return {
            "gamma": 1.0 + 0.1 * jax.random.normal(next(keys), (c,), jnp.float32),
            "beta": nrm((c,), 0.1),
            "mean": nrm((c,), 0.1),
            "var": 1.0 + 0.1 * jnp.abs(jax.random.normal(next(keys), (c,), jnp.float32)),
        }

    return {
        "conv1": layer(64, channel),  "bn1": bn(64),
        "conv2": layer(128, 64),      "bn2": bn(128),
        "conv3": layer(1024, 128),    "bn3": bn(1024),
        "fc1":   layer(512, 1024),    "bn4": bn(512),
        "fc2":   layer(256, 512),     "bn5": bn(256),
        "fc3":   layer(9, 256),
    }


# ----------------------------------------------------------------------------
# Glue: fold bias + inference BN into (bf16 weight, f32 shift); pad fc3 to 128
# output lanes and fold the flattened 3x3 identity into its bias.
# ----------------------------------------------------------------------------
def fold_params(raw, eps=1e-5):
    def fold(layer_name, bn_name):
        w, b = raw[layer_name]["w"], raw[layer_name]["b"]
        p = raw[bn_name]
        scale = p["gamma"] / jnp.sqrt(p["var"] + eps)
        w_folded = (w.T * scale[None, :]).astype(jnp.bfloat16)      # [in, out]
        shift = (scale * (b - p["mean"]) + p["beta"]).reshape(1, -1).astype(jnp.float32)
        return w_folded, shift

    params = []
    for layer_name, bn_name in [("conv1", "bn1"), ("conv2", "bn2"),
                                ("conv3", "bn3"), ("fc1", "bn4"), ("fc2", "bn5")]:
        params += list(fold(layer_name, bn_name))

    # fc3: plain affine; pad to 128 output lanes (lane-dense store), fold bias+identity.
    w3, b3 = raw["fc3"]["w"], raw["fc3"]["b"]                       # (9, 256), (9,)
    iden = jnp.array([1, 0, 0, 0, 1, 0, 0, 0, 1], jnp.float32)
    wf3 = jnp.zeros((256, 128), jnp.float32).at[:, :9].set(w3.T)
    bf3 = jnp.zeros((1, 128), jnp.float32).at[0, :9].set(b3 + iden)
    params += [wf3, bf3]
    return tuple(params)


# ----------------------------------------------------------------------------
# Pure-JAX reference (PyTorch eval-mode math, f32) for the correctness check.
# ----------------------------------------------------------------------------
def reference(x_ncl, raw, eps=1e-5):
    def bn(h, p):
        return p["gamma"] * (h - p["mean"]) / jnp.sqrt(p["var"] + eps) + p["beta"]

    x = jnp.transpose(x_ncl, (0, 2, 1))                             # (B, N, C)
    h = jax.nn.relu(bn(x @ raw["conv1"]["w"].T + raw["conv1"]["b"], raw["bn1"]))
    h = jax.nn.relu(bn(h @ raw["conv2"]["w"].T + raw["conv2"]["b"], raw["bn2"]))
    h = jax.nn.relu(bn(h @ raw["conv3"]["w"].T + raw["conv3"]["b"], raw["bn3"]))
    g = jnp.max(h, axis=1)                                          # (B, 1024)
    f = jax.nn.relu(bn(g @ raw["fc1"]["w"].T + raw["fc1"]["b"], raw["bn4"]))
    f = jax.nn.relu(bn(f @ raw["fc2"]["w"].T + raw["fc2"]["b"], raw["bn5"]))
    f = f @ raw["fc3"]["w"].T + raw["fc3"]["b"]
    iden = jnp.array([1, 0, 0, 0, 1, 0, 0, 0, 1], jnp.float32)
    return (f + iden).reshape(-1, 3, 3)


if __name__ == "__main__":
    # Small test: N=20 is deliberately not a multiple of 8, and tile_n=8 forces
    # n_tiles=3, exercising point padding/masking and the running-max accumulator.
    B, C, N = 16, 3, 20
    key = jax.random.PRNGKey(0)
    kx, kp = jax.random.split(key)
    x = jax.random.normal(kx, (B, C, N), dtype=jnp.float32)   # PyTorch (B, C, N) layout
    raw = init_raw_params(C, kp)
    params = fold_params(raw)

    out = stn3d_forward(x, params, tile_n=8)                  # grid = (2, 3)
    out = jax.block_until_ready(out)
    assert out.shape == (B, 3, 3)

    ref = reference(x, raw)
    if not jnp.allclose(out, ref, rtol=2e-2, atol=2e-2):
        raise AssertionError("Pallas kernel output mismatches JAX reference")

    print("KERNEL_OK")
</pallas_src>

<mosaic_0001>
module attributes {stable_mosaic.version = 11 : i64} {
  func.func @stn3d_kernel(%arg0: i32, %arg1: i32, %arg2: memref<8x8x3xbf16, #tpu.memory_space<vmem>>, %arg3: memref<3x64xbf16, #tpu.memory_space<vmem>>, %arg4: memref<1x64xf32, #tpu.memory_space<vmem>>, %arg5: memref<64x128xbf16, #tpu.memory_space<vmem>>, %arg6: memref<1x128xf32, #tpu.memory_space<vmem>>, %arg7: memref<128x1024xbf16, #tpu.memory_space<vmem>>, %arg8: memref<1x1024xf32, #tpu.memory_space<vmem>>, %arg9: memref<1024x512xbf16, #tpu.memory_space<vmem>>, %arg10: memref<1x512xf32, #tpu.memory_space<vmem>>, %arg11: memref<512x256xbf16, #tpu.memory_space<vmem>>, %arg12: memref<1x256xf32, #tpu.memory_space<vmem>>, %arg13: memref<256x128xf32, #tpu.memory_space<vmem>>, %arg14: memref<1x128xf32, #tpu.memory_space<vmem>>, %arg15: memref<8x128xf32, #tpu.memory_space<vmem>>, %arg16: memref<8x1024xf32, #tpu.memory_space<vmem>>) attributes {dimension_semantics = [#tpu.dimension_semantics<parallel>, #tpu.dimension_semantics<arbitrary>], iteration_bounds = array<i64: 2, 3>, scalar_prefetch = 0 : i64, scratch_operands = 1 : i64, tpu.core_type = #tpu.core_type<tc>, window_params = [{transform_indices = @transform_0, window_bounds = array<i64: 8, 8, 3>}, {pipeline_mode = #tpu.pipeline_mode<synchronous>, transform_indices = @transform_1, window_bounds = array<i64: 3, 64>}, {pipeline_mode = #tpu.pipeline_mode<synchronous>, transform_indices = @transform_2, window_bounds = array<i64: 1, 64>}, {pipeline_mode = #tpu.pipeline_mode<synchronous>, transform_indices = @transform_3, window_bounds = array<i64: 64, 128>}, {pipeline_mode = #tpu.pipeline_mode<synchronous>, transform_indices = @transform_4, window_bounds = array<i64: 1, 128>}, {pipeline_mode = #tpu.pipeline_mode<synchronous>, transform_indices = @transform_5, window_bounds = array<i64: 128, 1024>}, {pipeline_mode = #tpu.pipeline_mode<synchronous>, transform_indices = @transform_6, window_bounds = array<i64: 1, 1024>}, {pipeline_mode = #tpu.pipeline_mode<synchronous>, transform_indices = @transform_7, window_bounds = array<i64: 1024, 512>}, {pipeline_mode = #tpu.pipeline_mode<synchronous>, transform_indices = @transform_8, window_bounds = array<i64: 1, 512>}, {pipeline_mode = #tpu.pipeline_mode<synchronous>, transform_indices = @transform_9, window_bounds = array<i64: 512, 256>}, {pipeline_mode = #tpu.pipeline_mode<synchronous>, transform_indices = @transform_10, window_bounds = array<i64: 1, 256>}, {pipeline_mode = #tpu.pipeline_mode<synchronous>, transform_indices = @transform_11, window_bounds = array<i64: 256, 128>}, {pipeline_mode = #tpu.pipeline_mode<synchronous>, transform_indices = @transform_12, window_bounds = array<i64: 1, 128>}, {transform_indices = @transform_13, window_bounds = array<i64: 8, 128>}]} {
    %c0 = arith.constant 0 : index
    %c0_0 = arith.constant 0 : index
    %c0_1 = arith.constant 0 : index
    %0 = vector.load %arg2[%c0, %c0_0, %c0_1] : memref<8x8x3xbf16, #tpu.memory_space<vmem>>, vector<8x8x3xbf16>
    %1 = vector.shape_cast %0 : vector<8x8x3xbf16> to vector<64x3xbf16>
    %c0_2 = arith.constant 0 : index
    %c0_3 = arith.constant 0 : index
    %2 = vector.load %arg3[%c0_2, %c0_3] : memref<3x64xbf16, #tpu.memory_space<vmem>>, vector<3x64xbf16>
    %cst = arith.constant dense<0.000000e+00> : vector<64x64xf32>
    %3 = tpu.matmul %1, %2, %cst {dimension_numbers = #tpu.dot_dimension_numbers<[1], [0], [0], [1], [0, 0, 1, 1], [], []>} : vector<64x3xbf16>, vector<3x64xbf16>, vector<64x64xf32> -> vector<64x64xf32>
    %c0_4 = arith.constant 0 : index
    %c0_5 = arith.constant 0 : index
    %4 = vector.load %arg4[%c0_4, %c0_5] : memref<1x64xf32, #tpu.memory_space<vmem>>, vector<1x64xf32>
    %5 = vector.broadcast %4 : vector<1x64xf32> to vector<64x64xf32>
    %6 = arith.addf %3, %5 : vector<64x64xf32>
    %cst_6 = arith.constant 0.000000e+00 : f32
    %7 = vector.broadcast %cst_6 : f32 to vector<64x64xf32>
    %8 = arith.maximumf %6, %7 : vector<64x64xf32>
    %9 = arith.truncf %8 : vector<64x64xf32> to vector<64x64xbf16>
    %c0_7 = arith.constant 0 : index
    %c0_8 = arith.constant 0 : index
    %10 = vector.load %arg5[%c0_7, %c0_8] : memref<64x128xbf16, #tpu.memory_space<vmem>>, vector<64x128xbf16>
    %cst_9 = arith.constant dense<0.000000e+00> : vector<64x128xf32>
    %11 = tpu.matmul %9, %10, %cst_9 {dimension_numbers = #tpu.dot_dimension_numbers<[1], [0], [0], [1], [0, 0, 1, 1], [], []>} : vector<64x64xbf16>, vector<64x128xbf16>, vector<64x128xf32> -> vector<64x128xf32>
    %c0_10 = arith.constant 0 : index
    %c0_11 = arith.constant 0 : index
    %12 = vector.load %arg6[%c0_10, %c0_11] : memref<1x128xf32, #tpu.memory_space<vmem>>, vector<1x128xf32>
    %13 = vector.broadcast %12 : vector<1x128xf32> to vector<64x128xf32>
    %14 = arith.addf %11, %13 : vector<64x128xf32>
    %cst_12 = arith.constant 0.000000e+00 : f32
    %15 = vector.broadcast %cst_12 : f32 to vector<64x128xf32>
    %16 = arith.maximumf %14, %15 : vector<64x128xf32>
    %17 = arith.truncf %16 : vector<64x128xf32> to vector<64x128xbf16>
    %c0_13 = arith.constant 0 : index
    %c0_14 = arith.constant 0 : index
    %18 = vector.load %arg7[%c0_13, %c0_14] : memref<128x1024xbf16, #tpu.memory_space<vmem>>, vector<128x1024xbf16>
    %cst_15 = arith.constant dense<0.000000e+00> : vector<64x1024xf32>
    %19 = tpu.matmul %17, %18, %cst_15 {dimension_numbers = #tpu.dot_dimension_numbers<[1], [0], [0], [1], [0, 0, 1, 1], [], []>} : vector<64x128xbf16>, vector<128x1024xbf16>, vector<64x1024xf32> -> vector<64x1024xf32>
    %c0_16 = arith.constant 0 : index
    %c0_17 = arith.constant 0 : index
    %20 = vector.load %arg8[%c0_16, %c0_17] : memref<1x1024xf32, #tpu.memory_space<vmem>>, vector<1x1024xf32>
    %21 = vector.broadcast %20 : vector<1x1024xf32> to vector<64x1024xf32>
    %22 = arith.addf %19, %21 : vector<64x1024xf32>
    %cst_18 = arith.constant 0.000000e+00 : f32
    %23 = vector.broadcast %cst_18 : f32 to vector<64x1024xf32>
    %24 = arith.maximumf %22, %23 : vector<64x1024xf32>
    %25 = arith.truncf %24 : vector<64x1024xf32> to vector<64x1024xbf16>
    %26 = vector.shape_cast %25 : vector<64x1024xbf16> to vector<8x8x1024xbf16>
    %c8_i32 = arith.constant 8 : i32
    %27 = arith.muli %arg1, %c8_i32 : i32
    %28 = tpu.iota {dimensions = array<i32: 1>} : vector<8x8x1xi32>
    %29 = vector.broadcast %27 : i32 to vector<8x8x1xi32>
    %30 = arith.addi %29, %28 : vector<8x8x1xi32>
    %c20_i32 = arith.constant 20 : i32
    %31 = vector.broadcast %c20_i32 : i32 to vector<8x8x1xi32>
    %32 = arith.cmpi slt, %30, %31 : vector<8x8x1xi32>
    %cst_19 = arith.constant 0.000000e+00 : bf16
    %33 = vector.broadcast %cst_19 : bf16 to vector<8x8x1024xbf16>
    %34 = vector.shape_cast %32 : vector<8x8x1xi1> to vector<8x8x1xi1>
    %35 = vector.broadcast %34 : vector<8x8x1xi1> to vector<8x8x1024xi1>
    %36 = arith.select %35, %26, %33 : vector<8x8x1024xi1>, vector<8x8x1024xbf16>
    %cst_20 = arith.constant dense<0xFF80> : vector<8x1024xbf16>
    %37 = vector.multi_reduction <maximumf>, %36, %cst_20 [1] : vector<8x8x1024xbf16> to vector<8x1024xbf16>
    %38 = arith.extf %37 : vector<8x1024xbf16> to vector<8x1024xf32>
    %c0_i32 = arith.constant 0 : i32
    %39 = arith.cmpi eq, %arg1, %c0_i32 : i32
    %40 = arith.extui %39 : i1 to i32
    %c0_i32_21 = arith.constant 0 : i32
    %41 = arith.cmpi ne, %40, %c0_i32_21 : i32
    scf.if %41 {
      %cst_27 = arith.constant 0.000000e+00 : f32
      %48 = vector.broadcast %cst_27 : f32 to vector<8x1024xf32>
      %c0_28 = arith.constant 0 : index
      %c0_29 = arith.constant 0 : index
      %49 = vector.load %arg16[%c0_28, %c0_29] : memref<8x1024xf32, #tpu.memory_space<vmem>>, vector<8x1024xf32>
      tpu.vector_store %arg16[%c0_28, %c0_29], %48 {strides = array<i32>} : memref<8x1024xf32, #tpu.memory_space<vmem>>, vector<8x1024xf32>,
    } else {
    }
    %c0_22 = arith.constant 0 : index
    %c0_23 = arith.constant 0 : index
    %42 = vector.load %arg16[%c0_22, %c0_23] : memref<8x1024xf32, #tpu.memory_space<vmem>>, vector<8x1024xf32>
    %43 = arith.maximumf %42, %38 : vector<8x1024xf32>
    %c0_24 = arith.constant 0 : index
    %c0_25 = arith.constant 0 : index
    %44 = vector.load %arg16[%c0_24, %c0_25] : memref<8x1024xf32, #tpu.memory_space<vmem>>, vector<8x1024xf32>
    tpu.vector_store %arg16[%c0_24, %c0_25], %43 {strides = array<i32>} : memref<8x1024xf32, #tpu.memory_space<vmem>>, vector<8x1024xf32>,
    %c2_i32 = arith.constant 2 : i32
    %45 = arith.cmpi eq, %arg1, %c2_i32 : i32
    %46 = arith.extui %45 : i1 to i32
    %c0_i32_26 = arith.constant 0 : i32
    %47 = arith.cmpi ne, %46, %c0_i32_26 : i32
    scf.if %47 {
      %c0_27 = arith.constant 0 : index
      %c0_28 = arith.constant 0 : index
      %48 = vector.load %arg16[%c0_27, %c0_28] : memref<8x1024xf32, #tpu.memory_space<vmem>>, vector<8x1024xf32>
      %49 = arith.truncf %48 : vector<8x1024xf32> to vector<8x1024xbf16>
      %c0_29 = arith.constant 0 : index
      %c0_30 = arith.constant 0 : index
      %50 = vector.load %arg9[%c0_29, %c0_30] : memref<1024x512xbf16, #tpu.memory_space<vmem>>, vector<1024x512xbf16>
      %cst_31 = arith.constant dense<0.000000e+00> : vector<8x512xf32>
      %51 = tpu.matmul %49, %50, %cst_31 {dimension_numbers = #tpu.dot_dimension_numbers<[1], [0], [0], [1], [0, 0, 1, 1], [], []>} : vector<8x1024xbf16>, vector<1024x512xbf16>, vector<8x512xf32> -> vector<8x512xf32>
      %c0_32 = arith.constant 0 : index
      %c0_33 = arith.constant 0 : index
      %52 = vector.load %arg10[%c0_32, %c0_33] : memref<1x512xf32, #tpu.memory_space<vmem>>, vector<1x512xf32>
      %53 = vector.broadcast %52 : vector<1x512xf32> to vector<8x512xf32>
      %54 = arith.addf %51, %53 : vector<8x512xf32>
      %cst_34 = arith.constant 0.000000e+00 : f32
      %55 = vector.broadcast %cst_34 : f32 to vector<8x512xf32>
      %56 = arith.maximumf %54, %55 : vector<8x512xf32>
      %57 = arith.truncf %56 : vector<8x512xf32> to vector<8x512xbf16>
      %c0_35 = arith.constant 0 : index
      %c0_36 = arith.constant 0 : index
      %58 = vector.load %arg11[%c0_35, %c0_36] : memref<512x256xbf16, #tpu.memory_space<vmem>>, vector<512x256xbf16>
      %cst_37 = arith.constant dense<0.000000e+00> : vector<8x256xf32>
      %59 = tpu.matmul %57, %58, %cst_37 {dimension_numbers = #tpu.dot_dimension_numbers<[1], [0], [0], [1], [0, 0, 1, 1], [], []>} : vector<8x512xbf16>, vector<512x256xbf16>, vector<8x256xf32> -> vector<8x256xf32>
      %c0_38 = arith.constant 0 : index
      %c0_39 = arith.constant 0 : index
      %60 = vector.load %arg12[%c0_38, %c0_39] : memref<1x256xf32, #tpu.memory_space<vmem>>, vector<1x256xf32>
      %61 = vector.broadcast %60 : vector<1x256xf32> to vector<8x256xf32>
      %62 = arith.addf %59, %61 : vector<8x256xf32>
      %cst_40 = arith.constant 0.000000e+00 : f32
      %63 = vector.broadcast %cst_40 : f32 to vector<8x256xf32>
      %64 = arith.maximumf %62, %63 : vector<8x256xf32>
      %c0_41 = arith.constant 0 : index
      %c0_42 = arith.constant 0 : index
      %65 = vector.load %arg13[%c0_41, %c0_42] : memref<256x128xf32, #tpu.memory_space<vmem>>, vector<256x128xf32>
      %cst_43 = arith.constant dense<0.000000e+00> : vector<8x128xf32>
      %66 = tpu.matmul %64, %65, %cst_43 {dimension_numbers = #tpu.dot_dimension_numbers<[1], [0], [0], [1], [0, 0, 1, 1], [], []>} : vector<8x256xf32>, vector<256x128xf32>, vector<8x128xf32> -> vector<8x128xf32>
      %c0_44 = arith.constant 0 : index
      %c0_45 = arith.constant 0 : index
      %67 = vector.load %arg14[%c0_44, %c0_45] : memref<1x128xf32, #tpu.memory_space<vmem>>, vector<1x128xf32>
      %68 = vector.broadcast %67 : vector<1x128xf32> to vector<8x128xf32>
      %69 = arith.addf %66, %68 : vector<8x128xf32>
      %c0_46 = arith.constant 0 : index
      %c0_47 = arith.constant 0 : index
      %70 = vector.load %arg15[%c0_46, %c0_47] : memref<8x128xf32, #tpu.memory_space<vmem>>, vector<8x128xf32>
      tpu.vector_store %arg15[%c0_46, %c0_47], %69 {strides = array<i32>} : memref<8x128xf32, #tpu.memory_space<vmem>>, vector<8x128xf32>,
    } else {
    }
    return
  }
  func.func @transform_0(%arg0: i32, %arg1: i32) -> (i32, i32, i32) {
    %c0_i32 = arith.constant 0 : i32
    %c0_i32_0 = arith.constant 0 : i32
    return %arg0, %arg1, %c0_i32 : i32, i32, i32
  }
  func.func @transform_1(%arg0: i32, %arg1: i32) -> (i32, i32) {
    %c0_i32 = arith.constant 0 : i32
    %c0_i32_0 = arith.constant 0 : i32
    %c0_i32_1 = arith.constant 0 : i32
    return %c0_i32, %c0_i32_0 : i32, i32
  }
  func.func @transform_2(%arg0: i32, %arg1: i32) -> (i32, i32) {
    %c0_i32 = arith.constant 0 : i32
    %c0_i32_0 = arith.constant 0 : i32
    %c0_i32_1 = arith.constant 0 : i32
    return %c0_i32, %c0_i32_0 : i32, i32
  }
  func.func @transform_3(%arg0: i32, %arg1: i32) -> (i32, i32) {
    %c0_i32 = arith.constant 0 : i32
    %c0_i32_0 = arith.constant 0 : i32
    %c0_i32_1 = arith.constant 0 : i32
    return %c0_i32, %c0_i32_0 : i32, i32
  }
  func.func @transform_4(%arg0: i32, %arg1: i32) -> (i32, i32) {
    %c0_i32 = arith.constant 0 : i32
    %c0_i32_0 = arith.constant 0 : i32
    %c0_i32_1 = arith.constant 0 : i32
    return %c0_i32, %c0_i32_0 : i32, i32
  }
  func.func @transform_5(%arg0: i32, %arg1: i32) -> (i32, i32) {
    %c0_i32 = arith.constant 0 : i32
    %c0_i32_0 = arith.constant 0 : i32
    %c0_i32_1 = arith.constant 0 : i32
    return %c0_i32, %c0_i32_0 : i32, i32
  }
  func.func @transform_6(%arg0: i32, %arg1: i32) -> (i32, i32) {
    %c0_i32 = arith.constant 0 : i32
    %c0_i32_0 = arith.constant 0 : i32
    %c0_i32_1 = arith.constant 0 : i32
    return %c0_i32, %c0_i32_0 : i32, i32
  }
  func.func @transform_7(%arg0: i32, %arg1: i32) -> (i32, i32) {
    %c0_i32 = arith.constant 0 : i32
    %c0_i32_0 = arith.constant 0 : i32
    %c0_i32_1 = arith.constant 0 : i32
    return %c0_i32, %c0_i32_0 : i32, i32
  }
  func.func @transform_8(%arg0: i32, %arg1: i32) -> (i32, i32) {
    %c0_i32 = arith.constant 0 : i32
    %c0_i32_0 = arith.constant 0 : i32
    %c0_i32_1 = arith.constant 0 : i32
    return %c0_i32, %c0_i32_0 : i32, i32
  }
  func.func @transform_9(%arg0: i32, %arg1: i32) -> (i32, i32) {
    %c0_i32 = arith.constant 0 : i32
    %c0_i32_0 = arith.constant 0 : i32
    %c0_i32_1 = arith.constant 0 : i32
    return %c0_i32, %c0_i32_0 : i32, i32
  }
  func.func @transform_10(%arg0: i32, %arg1: i32) -> (i32, i32) {
    %c0_i32 = arith.constant 0 : i32
    %c0_i32_0 = arith.constant 0 : i32
    %c0_i32_1 = arith.constant 0 : i32
    return %c0_i32, %c0_i32_0 : i32, i32
  }
  func.func @transform_11(%arg0: i32, %arg1: i32) -> (i32, i32) {
    %c0_i32 = arith.constant 0 : i32
    %c0_i32_0 = arith.constant 0 : i32
    %c0_i32_1 = arith.constant 0 : i32
    return %c0_i32, %c0_i32_0 : i32, i32
  }
  func.func @transform_12(%arg0: i32, %arg1: i32) -> (i32, i32) {
    %c0_i32 = arith.constant 0 : i32
    %c0_i32_0 = arith.constant 0 : i32
    %c0_i32_1 = arith.constant 0 : i32
    return %c0_i32, %c0_i32_0 : i32, i32
  }
  func.func @transform_13(%arg0: i32, %arg1: i32) -> (i32, i32) {
    %c0_i32 = arith.constant 0 : i32
    %c0_i32_0 = arith.constant 0 : i32
    return %arg0, %c0_i32 : i32, i32
  }
}

</mosaic_0001>

<llo_original>
// kernel: tpu_custom_call.1
$region0: #{tpu_custom_call.1}
  #allocation0 [shape = 'u32[]', space=smem, size = 0x4, offset = 0x4, fixed_abs, tag = 'smem constant byte address 0x4 - core index']
  #allocation1 [shape = 'u32[144,128]{1,0:T(1,128)}', space=vmem, size = 0x12000, scoped, tag = 'internal scratch']
  #allocation2 [shape = 'f32[8,1024]{1,0:T(8,128)}', space=vmem, size = 0x8000, scoped, tag = 'scratch operand']
  %s0 = inlined_call_operand.vmem [shape: bf16[16,24,3], index: 0, kind: input, shape index: {}]
  %s1 = inlined_call_operand.hbm [shape: bf16[3,64], index: 1, kind: input, shape index: {}]
  %s2 = inlined_call_operand.vmem [shape: f32[1,64], index: 2, kind: input, shape index: {}]
  %s3 = inlined_call_operand.hbm [shape: bf16[64,128], index: 3, kind: input, shape index: {}]
  %s4 = inlined_call_operand.hbm [shape: f32[1,128], index: 4, kind: input, shape index: {}]
  %s5 = inlined_call_operand.hbm [shape: bf16[128,1024], index: 5, kind: input, shape index: {}]
  %s6 = inlined_call_operand.hbm [shape: f32[1,1024], index: 6, kind: input, shape index: {}]
  %s7 = inlined_call_operand.hbm [shape: bf16[1024,512], index: 7, kind: input, shape index: {}]
  %s8 = inlined_call_operand.hbm [shape: f32[1,512], index: 8, kind: input, shape index: {}]
  %s9 = inlined_call_operand.hbm [shape: bf16[512,256], index: 9, kind: input, shape index: {}]
  %s10 = inlined_call_operand.hbm [shape: f32[1,256], index: 10, kind: input, shape index: {}]
  %s11 = inlined_call_operand.vmem [shape: f32[256,128], index: 11, kind: input, shape index: {}]
  %s12 = inlined_call_operand.vmem [shape: f32[1,128], index: 12, kind: input, shape index: {}]
  %s13 = inlined_call_operand.hbm [shape: f32[16,128], index: 13, kind: output, shape index: {}]
  %s14 = sld [smem:[#allocation0]]
  $region170: #{tpu_custom_call.1} parent=0
    _
  %s16 = ssub.s32 1, %s14
  %s17 = scalar_select 0, %s16, %s14
  $region1: #{tpu_custom_call.1} parent=0
    #allocation3 [shape = 'u8[32768]{0}', space=vmem, size = 0x8000, scoped, tag = 'input window, operand 0']
    #allocation4 [shape = 'u8[1024]{0}', space=vmem, size = 0x400, scoped, tag = 'input window, operand 1, single buffered']
    #allocation5 [shape = 's32[2]{0}', space=sflag, size = 0x8, scoped, tag = 'scoped memory for tpu_custom_call.1']
    #allocation6 [shape = 's32[2]{0}', space=sflag, size = 0x8, scoped, tag = 'scoped memory for tpu_custom_call.1']
    #allocation7 [shape = 'u8[16384]{0}', space=vmem, size = 0x4000, scoped, tag = 'input window, operand 3, single buffered']
    #allocation8 [shape = 's32[1]{0}', space=sflag, size = 0x4, scoped, tag = 'scoped memory for tpu_custom_call.1']
    #allocation9 [shape = 'u8[512]{0}', space=vmem, size = 0x400, scoped, tag = 'input window, operand 4, single buffered']
    #allocation10 [shape = 'u8[262144]{0}', space=vmem, size = 0x40000, scoped, tag = 'input window, operand 5, single buffered']
    #allocation11 [shape = 's32[1]{0}', space=sflag, size = 0x4, scoped, tag = 'scoped memory for tpu_custom_call.1']
    #allocation12 [shape = 'u8[4096]{0}', space=vmem, size = 0x1000, scoped, tag = 'input window, operand 6, single buffered']
    #allocation13 [shape = 'u8[1048576]{0}', space=vmem, size = 0x100000, scoped, tag = 'input window, operand 7, single buffered']
    #allocation14 [shape = 's32[1]{0}', space=sflag, size = 0x4, scoped, tag = 'scoped memory for tpu_custom_call.1']
    #allocation15 [shape = 'u8[2048]{0}', space=vmem, size = 0x800, scoped, tag = 'input window, operand 8, single buffered']
    #allocation16 [shape = 'u8[262144]{0}', space=vmem, size = 0x40000, scoped, tag = 'input window, operand 9, single buffered']
    #allocation17 [shape = 's32[1]{0}', space=sflag, size = 0x4, scoped, tag = 'scoped memory for tpu_custom_call.1']
    #allocation18 [shape = 'u8[1024]{0}', space=vmem, size = 0x400, scoped, tag = 'input window, operand 10, single buffered']
    #allocation19 [shape = 'u8[8192]{0}', space=vmem, size = 0x2000, scoped, tag = 'output window, operand 0']
    %18 = vsyncpa [#allocation5], 0
    %19 = vsyncpa [#allocation8], 0
    %20 = vsyncpa [#allocation11], 0
    %21 = vsyncpa [#allocation14], 0
    %22 = vsyncpa [#allocation17], 0
    %23 = vsyncpa [#allocation6], 0
    %s24 = scalar_lea.sflag [#allocation6], 1
    %25 = vsyncpa %s24, 0
    loop: start=0, step=1, limit=8
    $region2: #{tpu_custom_call.1} parent=1 // loop_pre_header
      _
    $region3: #{tpu_custom_call.1} parent=1 // loop_header
      %s27 = sphi 0, %s31
      %p28 = scmp.ge.s32.totalorder %s27, 8
      %s34 = sphi 0, %s46
      %s35 = sphi 0, %s42
      %s36 = sphi 0, %s34
      %s37 = sphi 0, %s35
      %s38 = sphi 0, %s36
      %s39 = sphi 0, %s37
      %s51 = sphi 0, %s53
      %s54 = sphi 0, %s51
      %s55 = sphi 0, %s54
      %s71 = sphi 0, %s55
      %s75 = sphi 0, %s75
      %s77 = sphi 0, %s75
      %s78 = sphi 0, %s77
      %s92 = sphi 0, %s78
      %s96 = sphi 0, %s96
      %s98 = sphi 0, %s96
      %s99 = sphi 0, %s98
      %s113 = sphi 0, %s99
      %s117 = sphi 0, %s117
      %s119 = sphi 0, %s117
      %s120 = sphi 0, %s119
      %s134 = sphi 0, %s120
      %s138 = sphi 0, %s138
      %s140 = sphi 0, %s138
      %s141 = sphi 0, %s140
      %s155 = sphi 0, %s141
      %s159 = sphi 0, %s159
      %s161 = sphi 0, %s159
      %s162 = sphi 0, %s161
      %s176 = sphi 0, %s162
      %s180 = sphi 0, %s180
      %s182 = sphi 0, %s180
      %s183 = sphi 0, %s182
      %s197 = sphi 0, %s183
      %s201 = sphi 0, %s201
      %s203 = sphi 0, %s201
      %s204 = sphi 0, %s203
      %s218 = sphi 0, %s204
      %s222 = sphi 0, %s222
      %s224 = sphi 0, %s222
      %s225 = sphi 0, %s224
      %s239 = sphi 0, %s225
      %s243 = sphi 0, %s243
      %s245 = sphi 0, %s243
      %s246 = sphi 0, %s245
      %s260 = sphi 0, %s246
      %s264 = sphi 0, %s264
      %s266 = sphi 0, %s264
      %s267 = sphi 0, %s266
      %s281 = sphi 0, %s267
      %s285 = sphi 0, %s285
      %s287 = sphi 0, %s285
      %s288 = sphi 0, %s287
      %s302 = sphi 0, %s288
      %s306 = sphi 0, %s306
      %s308 = sphi 0, %s306
      %s309 = sphi 0, %s308
      %s323 = sphi 0, %s309
      %s329 = sphi 0, %s331
      %s332 = sphi 0, %s329
      %s333 = sphi 0, %s332
      %s349 = sphi 0, %s333
    $region4: #{tpu_custom_call.1} parent=1 // loop_header_branch
      %30 = sbr.rel (%p28) target = $region8
    $region5: #{tpu_custom_call.1} parent=1 // loop_body
      %s32 = ssub.s32 %s27, 1
      %s33 = ssub.s32 %s27, 2
      %s40 = sadd.s32 1, %s35
      %p41 = scmp.ge.s32.totalorder %s40, 3
      %s42 = scalar_select %p41, 0, %s40
      %s43 = sadd.s32 1, %s34
      %s44 = scalar_select %p41, %s43, %s34
      %p45 = scmp.ge.s32.totalorder %s44, 2
      %s46 = scalar_select %p45, 0, %s44
      %s47 = ssub.s32 %s34, %s46
      %s48 = ssub.s32 %s35, %s42
      %s49 = sor.u32 %s47, %s48
      %p50 = scmp.eq.s32.totalorder %s49, 0
      %s52 = sadd.s32 %s51, 1
      %s53 = scalar_select %p50, %s51, %s52
      %p56 = pneg %p50
      %p57 = scmp.eq.s32.totalorder %s27, 5
      %p58 = por %p56, %p57
      %p59 = scmp.ne.s32.totalorder %s51, %s54
      %p60 = scmp.eq.s32.totalorder %s27, 0
      %p61 = por %p59, %p60
      %p62 = scmp.ne.s32.totalorder %s51, %s54
      %p63 = scmp.eq.s32.totalorder %s32, 5
      %p64 = por %p62, %p63
      %p65 = scmp.ne.s32.totalorder %s54, %s55
      %p66 = scmp.eq.s32.totalorder %s32, 0
      %p67 = por %p65, %p66
      %p68 = scmp.ne.s32.totalorder %s54, %s55
      %p69 = scmp.eq.s32.totalorder %s33, 5
      %p70 = por %p68, %p69
      %p72 = scmp.ne.s32.totalorder %s55, %s71
      %p73 = scmp.eq.s32.totalorder %s33, 0
      %p74 = por %p72, %p73
      %s76 = sadd.s32 %s75, 1
      %p79 = scmp.eq.s32.totalorder %s27, 5
      %p80 = scmp.ne.s32.totalorder %s75, %s77
      %p81 = scmp.eq.s32.totalorder %s27, 0
      %p82 = por %p80, %p81
      %p83 = scmp.ne.s32.totalorder %s75, %s77
      %p84 = scmp.eq.s32.totalorder %s32, 5
      %p85 = por %p83, %p84
      %p86 = scmp.ne.s32.totalorder %s77, %s78
      %p87 = scmp.eq.s32.totalorder %s32, 0
      %p88 = por %p86, %p87
      %p89 = scmp.ne.s32.totalorder %s77, %s78
      %p90 = scmp.eq.s32.totalorder %s33, 5
      %p91 = por %p89, %p90
      %p93 = scmp.ne.s32.totalorder %s78, %s92
      %p94 = scmp.eq.s32.totalorder %s33, 0
      %p95 = por %p93, %p94
      %s97 = sadd.s32 %s96, 1
      %p100 = scmp.eq.s32.totalorder %s27, 5
      %p101 = scmp.ne.s32.totalorder %s96, %s98
      %p102 = scmp.eq.s32.totalorder %s27, 0
      %p103 = por %p101, %p102
      %p104 = scmp.ne.s32.totalorder %s96, %s98
      %p105 = scmp.eq.s32.totalorder %s32, 5
      %p106 = por %p104, %p105
      %p107 = scmp.ne.s32.totalorder %s98, %s99
      %p108 = scmp.eq.s32.totalorder %s32, 0
      %p109 = por %p107, %p108
      %p110 = scmp.ne.s32.totalorder %s98, %s99
      %p111 = scmp.eq.s32.totalorder %s33, 5
      %p112 = por %p110, %p111
      %p114 = scmp.ne.s32.totalorder %s99, %s113
      %p115 = scmp.eq.s32.totalorder %s33, 0
      %p116 = por %p114, %p115
      %s118 = sadd.s32 %s117, 1
      %p121 = scmp.eq.s32.totalorder %s27, 5
      %p122 = scmp.ne.s32.totalorder %s117, %s119
      %p123 = scmp.eq.s32.totalorder %s27, 0
      %p124 = por %p122, %p123
      %p125 = scmp.ne.s32.totalorder %s117, %s119
      %p126 = scmp.eq.s32.totalorder %s32, 5
      %p127 = por %p125, %p126
      %p128 = scmp.ne.s32.totalorder %s119, %s120
      %p129 = scmp.eq.s32.totalorder %s32, 0
      %p130 = por %p128, %p129
      %p131 = scmp.ne.s32.totalorder %s119, %s120
      %p132 = scmp.eq.s32.totalorder %s33, 5
      %p133 = por %p131, %p132
      %p135 = scmp.ne.s32.totalorder %s120, %s134
      %p136 = scmp.eq.s32.totalorder %s33, 0
      %p137 = por %p135, %p136
      %s139 = sadd.s32 %s138, 1
      %p142 = scmp.eq.s32.totalorder %s27, 5
      %p143 = scmp.ne.s32.totalorder %s138, %s140
      %p144 = scmp.eq.s32.totalorder %s27, 0
      %p145 = por %p143, %p144
      %p146 = scmp.ne.s32.totalorder %s138, %s140
      %p147 = scmp.eq.s32.totalorder %s32, 5
      %p148 = por %p146, %p147
      %p149 = scmp.ne.s32.totalorder %s140, %s141
      %p150 = scmp.eq.s32.totalorder %s32, 0
      %p151 = por %p149, %p150
      %p152 = scmp.ne.s32.totalorder %s140, %s141
      %p153 = scmp.eq.s32.totalorder %s33, 5
      %p154 = por %p152, %p153
      %p156 = scmp.ne.s32.totalorder %s141, %s155
      %p157 = scmp.eq.s32.totalorder %s33, 0
      %p158 = por %p156, %p157
      %s160 = sadd.s32 %s159, 1
      %p163 = scmp.eq.s32.totalorder %s27, 5
      %p164 = scmp.ne.s32.totalorder %s159, %s161
      %p165 = scmp.eq.s32.totalorder %s27, 0
      %p166 = por %p164, %p165
      %p167 = scmp.ne.s32.totalorder %s159, %s161
      %p168 = scmp.eq.s32.totalorder %s32, 5
      %p169 = por %p167, %p168
      %p170 = scmp.ne.s32.totalorder %s161, %s162
      %p171 = scmp.eq.s32.totalorder %s32, 0
      %p172 = por %p170, %p171
      %p173 = scmp.ne.s32.totalorder %s161, %s162
      %p174 = scmp.eq.s32.totalorder %s33, 5
      %p175 = por %p173, %p174
      %p177 = scmp.ne.s32.totalorder %s162, %s176
      %p178 = scmp.eq.s32.totalorder %s33, 0
      %p179 = por %p177, %p178
      %s181 = sadd.s32 %s180, 1
      %p184 = scmp.eq.s32.totalorder %s27, 5
      %p185 = scmp.ne.s32.totalorder %s180, %s182
      %p186 = scmp.eq.s32.totalorder %s27, 0
      %p187 = por %p185, %p186
      %p188 = scmp.ne.s32.totalorder %s180, %s182
      %p189 = scmp.eq.s32.totalorder %s32, 5
      %p190 = por %p188, %p189
      %p191 = scmp.ne.s32.totalorder %s182, %s183
      %p192 = scmp.eq.s32.totalorder %s32, 0
      %p193 = por %p191, %p192
      %p194 = scmp.ne.s32.totalorder %s182, %s183
      %p195 = scmp.eq.s32.totalorder %s33, 5
      %p196 = por %p194, %p195
      %p198 = scmp.ne.s32.totalorder %s183, %s197
      %p199 = scmp.eq.s32.totalorder %s33, 0
      %p200 = por %p198, %p199
      %s202 = sadd.s32 %s201, 1
      %p205 = scmp.eq.s32.totalorder %s27, 5
      %p206 = scmp.ne.s32.totalorder %s201, %s203
      %p207 = scmp.eq.s32.totalorder %s27, 0
      %p208 = por %p206, %p207
      %p209 = scmp.ne.s32.totalorder %s201, %s203
      %p210 = scmp.eq.s32.totalorder %s32, 5
      %p211 = por %p209, %p210
      %p212 = scmp.ne.s32.totalorder %s203, %s204
      %p213 = scmp.eq.s32.totalorder %s32, 0
      %p214 = por %p212, %p213
      %p215 = scmp.ne.s32.totalorder %s203, %s204
      %p216 = scmp.eq.s32.totalorder %s33, 5
      %p217 = por %p215, %p216
      %p219 = scmp.ne.s32.totalorder %s204, %s218
      %p220 = scmp.eq.s32.totalorder %s33, 0
      %p221 = por %p219, %p220
      %s223 = sadd.s32 %s222, 1
      %p226 = scmp.eq.s32.totalorder %s27, 5
      %p227 = scmp.ne.s32.totalorder %s222, %s224
      %p228 = scmp.eq.s32.totalorder %s27, 0
      %p229 = por %p227, %p228
      %p230 = scmp.ne.s32.totalorder %s222, %s224
      %p231 = scmp.eq.s32.totalorder %s32, 5
      %p232 = por %p230, %p231
      %p233 = scmp.ne.s32.totalorder %s224, %s225
      %p234 = scmp.eq.s32.totalorder %s32, 0
      %p235 = por %p233, %p234
      %p236 = scmp.ne.s32.totalorder %s224, %s225
      %p237 = scmp.eq.s32.totalorder %s33, 5
      %p238 = por %p236, %p237
      %p240 = scmp.ne.s32.totalorder %s225, %s239
      %p241 = scmp.eq.s32.totalorder %s33, 0
      %p242 = por %p240, %p241
      %s244 = sadd.s32 %s243, 1
      %p247 = scmp.eq.s32.totalorder %s27, 5
      %p248 = scmp.ne.s32.totalorder %s243, %s245
      %p249 = scmp.eq.s32.totalorder %s27, 0
      %p250 = por %p248, %p249
      %p251 = scmp.ne.s32.totalorder %s243, %s245
      %p252 = scmp.eq.s32.totalorder %s32, 5
      %p253 = por %p251, %p252
      %p254 = scmp.ne.s32.totalorder %s245, %s246
      %p255 = scmp.eq.s32.totalorder %s32, 0
      %p256 = por %p254, %p255
      %p257 = scmp.ne.s32.totalorder %s245, %s246
      %p258 = scmp.eq.s32.totalorder %s33, 5
      %p259 = por %p257, %p258
      %p261 = scmp.ne.s32.totalorder %s246, %s260
      %p262 = scmp.eq.s32.totalorder %s33, 0
      %p263 = por %p261, %p262
      %s265 = sadd.s32 %s264, 1
      %p268 = scmp.eq.s32.totalorder %s27, 5
      %p269 = scmp.ne.s32.totalorder %s264, %s266
      %p270 = scmp.eq.s32.totalorder %s27, 0
      %p271 = por %p269, %p270
      %p272 = scmp.ne.s32.totalorder %s264, %s266
      %p273 = scmp.eq.s32.totalorder %s32, 5
      %p274 = por %p272, %p273
      %p275 = scmp.ne.s32.totalorder %s266, %s267
      %p276 = scmp.eq.s32.totalorder %s32, 0
      %p277 = por %p275, %p276
      %p278 = scmp.ne.s32.totalorder %s266, %s267
      %p279 = scmp.eq.s32.totalorder %s33, 5
      %p280 = por %p278, %p279
      %p282 = scmp.ne.s32.totalorder %s267, %s281
      %p283 = scmp.eq.s32.totalorder %s33, 0
      %p284 = por %p282, %p283
      %s286 = sadd.s32 %s285, 1
      %p289 = scmp.eq.s32.totalorder %s27, 5
      %p290 = scmp.ne.s32.totalorder %s285, %s287
      %p291 = scmp.eq.s32.totalorder %s27, 0
      %p292 = por %p290, %p291
      %p293 = scmp.ne.s32.totalorder %s285, %s287
      %p294 = scmp.eq.s32.totalorder %s32, 5
      %p295 = por %p293, %p294
      %p296 = scmp.ne.s32.totalorder %s287, %s288
      %p297 = scmp.eq.s32.totalorder %s32, 0
      %p298 = por %p296, %p297
      %p299 = scmp.ne.s32.totalorder %s287, %s288
      %p300 = scmp.eq.s32.totalorder %s33, 5
      %p301 = por %p299, %p300
      %p303 = scmp.ne.s32.totalorder %s288, %s302
      %p304 = scmp.eq.s32.totalorder %s33, 0
      %p305 = por %p303, %p304
      %s307 = sadd.s32 %s306, 1
      %p310 = scmp.eq.s32.totalorder %s27, 5
      %p311 = scmp.ne.s32.totalorder %s306, %s308
      %p312 = scmp.eq.s32.totalorder %s27, 0
      %p313 = por %p311, %p312
      %p314 = scmp.ne.s32.totalorder %s306, %s308
      %p315 = scmp.eq.s32.totalorder %s32, 5
      %p316 = por %p314, %p315
      %p317 = scmp.ne.s32.totalorder %s308, %s309
      %p318 = scmp.eq.s32.totalorder %s32, 0
      %p319 = por %p317, %p318
      %p320 = scmp.ne.s32.totalorder %s308, %s309
      %p321 = scmp.eq.s32.totalorder %s33, 5
      %p322 = por %p320, %p321
      %p324 = scmp.ne.s32.totalorder %s309, %s323
      %p325 = scmp.eq.s32.totalorder %s33, 0
      %p326 = por %p324, %p325
      %s327 = ssub.s32 %s34, %s46
      %p328 = scmp.eq.s32.totalorder %s327, 0
      %s330 = sadd.s32 %s329, 1
      %s331 = scalar_select %p328, %s329, %s330
      %p334 = pneg %p328
      %p335 = scmp.eq.s32.totalorder %s27, 5
      %p336 = por %p334, %p335
      %p337 = scmp.ne.s32.totalorder %s329, %s332
      %p338 = scmp.eq.s32.totalorder %s27, 0
      %p339 = por %p337, %p338
      %p340 = scmp.ne.s32.totalorder %s329, %s332
      %p341 = scmp.eq.s32.totalorder %s32, 5
      %p342 = por %p340, %p341
      %p343 = scmp.ne.s32.totalorder %s332, %s333
      %p344 = scmp.eq.s32.totalorder %s32, 0
      %p345 = por %p343, %p344
      %p346 = scmp.ne.s32.totalorder %s332, %s333
      %p347 = scmp.eq.s32.totalorder %s33, 5
      %p348 = por %p346, %p347
      %p350 = scmp.ne.s32.totalorder %s333, %s349
      %p351 = scmp.eq.s32.totalorder %s33, 0
      %p352 = por %p350, %p351
      %p353 = scmp.le.s32.totalorder 1, %s27
      %p354 = scmp.lt.s32.totalorder %s27, 7
      %p355 = pnand %p353, %p354
      %p356 = pneg %p355
      // Predicated region
      $region9: #{tpu_custom_call.1} parent=5 // pred_check
        _
      $region10: #{tpu_custom_call.1} parent=5 // pred_check_branch
        %358 = sbr.rel (%p355) target = $region12
      $region11: #{tpu_custom_call.1} parent=5 // pred_region
        %s359 = ssub.s32 %s27, 1
        // Predicated region
        $region13: #{tpu_custom_call.1} parent=11 // pred_check
          %p360 = pneg %p88
        $region14: #{tpu_custom_call.1} parent=11 // pred_check_branch
          %362 = sbr.rel (%p360) target = $region16
        $region15: #{tpu_custom_call.1} parent=11 // pred_region
          %s364 = ssub.s32 32, 32
          %365 = vsyncadd [#allocation5], %s364
          %s367 = sshll.u32 [#allocation4], 4
          %s368 = int_to_ptr.vmem [resolvable:$true] %s367
          %370 = dma.hbm_to_vmem [thread:$0]  %s1, 32, %s368, [#allocation5]
        $region16: #{tpu_custom_call.1} parent=11 // pred_fallthru
          _
        // Predicated region
        $region17: #{tpu_custom_call.1} parent=11 // pred_check
          %p371 = pneg %p109
        $region18: #{tpu_custom_call.1} parent=11 // pred_check_branch
          %373 = sbr.rel (%p371) target = $region20
        $region19: #{tpu_custom_call.1} parent=11 // pred_region
          _
        $region20: #{tpu_custom_call.1} parent=11 // pred_fallthru
          _
        // Predicated region
        $region21: #{tpu_custom_call.1} parent=11 // pred_check
          %p374 = pneg %p130
        $region22: #{tpu_custom_call.1} parent=11 // pred_check_branch
          %376 = sbr.rel (%p374) target = $region24
        $region23: #{tpu_custom_call.1} parent=11 // pred_region
          %s378 = ssub.s32 512, 512
          %379 = vsyncadd [#allocation8], %s378
          %s380 = sshll.u32 [#allocation7], 4
          %s381 = int_to_ptr.vmem [resolvable:$true] %s380
          %386 = dma.hbm_to_vmem [thread:$0]  %s3, 512, %s381, [#allocation8], 64, 64, 4
        $region24: #{tpu_custom_call.1} parent=11 // pred_fallthru
          _
        // Predicated region
        $region25: #{tpu_custom_call.1} parent=11 // pred_check
          %p387 = pneg %p151
        $region26: #{tpu_custom_call.1} parent=11 // pred_check_branch
          %389 = sbr.rel (%p387) target = $region28
        $region27: #{tpu_custom_call.1} parent=11 // pred_region
          %s391 = ssub.s32 16, 16
          %392 = vsyncadd [#allocation8], %s391
          %s394 = sshll.u32 [#allocation9], 4
          %s395 = int_to_ptr.vmem [resolvable:$true] %s394
          %397 = dma.hbm_to_vmem [thread:$0]  %s4, 16, %s395, [#allocation8]
        $region28: #{tpu_custom_call.1} parent=11 // pred_fallthru
          _
        // Predicated region
        $region29: #{tpu_custom_call.1} parent=11 // pred_check
          %p398 = pneg %p172
        $region30: #{tpu_custom_call.1} parent=11 // pred_check_branch
          %400 = sbr.rel (%p398) target = $region32
        $region31: #{tpu_custom_call.1} parent=11 // pred_region
          %s402 = ssub.s32 8192, 8192
          %403 = vsyncadd [#allocation11], %s402
          %s404 = sshll.u32 [#allocation10], 4
          %s405 = int_to_ptr.vmem [resolvable:$true] %s404
          %410 = dma.hbm_to_vmem [thread:$0]  %s5, 8192, %s405, [#allocation11], 512, 512, 32
        $region32: #{tpu_custom_call.1} parent=11 // pred_fallthru
          _
        // Predicated region
        $region33: #{tpu_custom_call.1} parent=11 // pred_check
          %p411 = pneg %p193
        $region34: #{tpu_custom_call.1} parent=11 // pred_check_branch
          %413 = sbr.rel (%p411) target = $region36
        $region35: #{tpu_custom_call.1} parent=11 // pred_region
          %s415 = ssub.s32 128, 128
          %416 = vsyncadd [#allocation11], %s415
          %s418 = sshll.u32 [#allocation12], 4
          %s419 = int_to_ptr.vmem [resolvable:$true] %s418
          %421 = dma.hbm_to_vmem [thread:$0]  %s6, 128, %s419, [#allocation11]
        $region36: #{tpu_custom_call.1} parent=11 // pred_fallthru
          _
        // Predicated region
        $region37: #{tpu_custom_call.1} parent=11 // pred_check
          %p422 = pneg %p214
        $region38: #{tpu_custom_call.1} parent=11 // pred_check_branch
          %424 = sbr.rel (%p422) target = $region40
        $region39: #{tpu_custom_call.1} parent=11 // pred_region
          %s426 = ssub.s32 32768, 32768
          %427 = vsyncadd [#allocation14], %s426
          %s428 = sshll.u32 [#allocation13], 4
          %s429 = int_to_ptr.vmem [resolvable:$true] %s428
          %434 = dma.hbm_to_vmem [thread:$0]  %s7, 32768, %s429, [#allocation14], 256, 256, 16
        $region40: #{tpu_custom_call.1} parent=11 // pred_fallthru
          _
        // Predicated region
        $region41: #{tpu_custom_call.1} parent=11 // pred_check
          %p435 = pneg %p235
        $region42: #{tpu_custom_call.1} parent=11 // pred_check_branch
          %437 = sbr.rel (%p435) target = $region44
        $region43: #{tpu_custom_call.1} parent=11 // pred_region
          %s439 = ssub.s32 64, 64
          %440 = vsyncadd [#allocation14], %s439
          %s442 = sshll.u32 [#allocation15], 4
          %s443 = int_to_ptr.vmem [resolvable:$true] %s442
          %445 = dma.hbm_to_vmem [thread:$0]  %s8, 64, %s443, [#allocation14]
        $region44: #{tpu_custom_call.1} parent=11 // pred_fallthru
          _
        // Predicated region
        $region45: #{tpu_custom_call.1} parent=11 // pred_check
          %p446 = pneg %p256
        $region46: #{tpu_custom_call.1} parent=11 // pred_check_branch
          %448 = sbr.rel (%p446) target = $region48
        $region47: #{tpu_custom_call.1} parent=11 // pred_region
          %s450 = ssub.s32 8192, 8192
          %451 = vsyncadd [#allocation17], %s450
          %s452 = sshll.u32 [#allocation16], 4
          %s453 = int_to_ptr.vmem [resolvable:$true] %s452
          %458 = dma.hbm_to_vmem [thread:$0]  %s9, 8192, %s453, [#allocation17], 128, 128, 8
        $region48: #{tpu_custom_call.1} parent=11 // pred_fallthru
          _
        // Predicated region
        $region49: #{tpu_custom_call.1} parent=11 // pred_check
          %p459 = pneg %p277
        $region50: #{tpu_custom_call.1} parent=11 // pred_check_branch
          %461 = sbr.rel (%p459) target = $region52
        $region51: #{tpu_custom_call.1} parent=11 // pred_region
          %s463 = ssub.s32 32, 32
          %464 = vsyncadd [#allocation17], %s463
          %s466 = sshll.u32 [#allocation18], 4
          %s467 = int_to_ptr.vmem [resolvable:$true] %s466
          %469 = dma.hbm_to_vmem [thread:$0]  %s10, 32, %s467, [#allocation17]
        $region52: #{tpu_custom_call.1} parent=11 // pred_fallthru
          _
        // Predicated region
        $region53: #{tpu_custom_call.1} parent=11 // pred_check
          %p470 = pneg %p298
        $region54: #{tpu_custom_call.1} parent=11 // pred_check_branch
          %472 = sbr.rel (%p470) target = $region56
        $region55: #{tpu_custom_call.1} parent=11 // pred_region
          _
        $region56: #{tpu_custom_call.1} parent=11 // pred_fallthru
          _
        // Predicated region
        $region57: #{tpu_custom_call.1} parent=11 // pred_check
          %p473 = pneg %p319
        $region58: #{tpu_custom_call.1} parent=11 // pred_check_branch
          %475 = sbr.rel (%p473) target = $region60
        $region59: #{tpu_custom_call.1} parent=11 // pred_region
          _
        $region60: #{tpu_custom_call.1} parent=11 // pred_fallthru
          _
      $region12: #{tpu_custom_call.1} parent=5 // pred_fallthru
        _
      %p476 = scmp.lt.s32.totalorder %s27, 6
      // Predicated region
      $region61: #{tpu_custom_call.1} parent=5 // pred_check
        %p477 = pneg %p476
      $region62: #{tpu_custom_call.1} parent=5 // pred_check_branch
        %479 = sbr.rel (%p477) target = $region64
      $region63: #{tpu_custom_call.1} parent=5 // pred_region
        // Predicated region
        $region65: #{tpu_custom_call.1} parent=63 // pred_check
          %p480 = pneg %p61
        $region66: #{tpu_custom_call.1} parent=63 // pred_check_branch
          %482 = sbr.rel (%p480) target = $region68
        $region67: #{tpu_custom_call.1} parent=63 // pred_region
          %s483 = sand.u32 %s51, 1
          %s484 = sand.u32 %s51, 1
          %s485 = smul.addr %s484, 32
          %s486 = scalar_lea.vmem [#allocation3], %s485
          %s487 = smul.u32 8, %s34
          %s488 = smul.addr %s487, 3
          %s489 = sadd.s32 %s35, %s488
          %s490 = smul.addr %s489, 4
          %s491 = scalar_lea.vmem %s0, %s490
          // Predicated region
          $region69: #{tpu_custom_call.1} parent=67 // pred_check
            _
          $region70: #{tpu_custom_call.1} parent=67 // pred_check_branch
            %493 = sbr.rel (0) target = $region72
          $region71: #{tpu_custom_call.1} parent=67 // pred_region
            // Predicated region
            $region73: #{tpu_custom_call.1} parent=71 // pred_check
              _
            $region74: #{tpu_custom_call.1} parent=71 // pred_check_branch
              %495 = sbr.rel target = $region76
            $region75: #{tpu_custom_call.1} parent=71 // pred_region
              // Predicated region
              $region88: #{tpu_custom_call.1} parent=75 // pred_check
                _
              $region89: #{tpu_custom_call.1} parent=75 // pred_check_branch
                %524 = sbr.rel (0) target = $region91
              $region90: #{tpu_custom_call.1} parent=75 // pred_region
                loop: start=0, step=1, limit=1
                $region92: #{tpu_custom_call.1} parent=90 // loop_pre_header
                  _
                $region93: #{tpu_custom_call.1} parent=90 // loop_header
                  %s526 = sphi 0, %s530
                  %p527 = scmp.ge.s32.totalorder %s526, 1
                  %s531 = sphi %s491, %s491
                  %s532 = sphi %s486, %s486
                $region94: #{tpu_custom_call.1} parent=90 // loop_header_branch
                  %529 = sbr.rel (%p527) target = $region98
                $region95: #{tpu_custom_call.1} parent=90 // loop_body
                  _
                $region96: #{tpu_custom_call.1} parent=90 // loop_footer
                  %s530 = sadd.s32 1, %s526
                $region97: #{tpu_custom_call.1} parent=90 // loop_footer_branch
                  %525 = sbr.rel target = $region93
                $region98: #{tpu_custom_call.1} parent=90 // loop_exit
                  _
                loop: start=0, step=1, limit=1
                $region99: #{tpu_custom_call.1} parent=90 // loop_pre_header
                  _
                $region100: #{tpu_custom_call.1} parent=90 // loop_header
                  %s535 = sphi 0, %s539
                  %p536 = scmp.ge.s32.totalorder %s535, 1
                  %s540 = sphi %s491, %s491
                  %s541 = sphi %s486, %s486
                $region101: #{tpu_custom_call.1} parent=90 // loop_header_branch
                  %538 = sbr.rel (%p536) target = $region105
                $region102: #{tpu_custom_call.1} parent=90 // loop_body
                  %v542 = vld [vmem:[%s540] sm:$0xf]
                  %543 = vst [vmem:[%s541] sm:$0xf] %v542
                  %v544 = vld [vmem:[%s540 + $0xc] sm:$0xf]
                  %545 = vst [vmem:[%s541 + $0x4] sm:$0xf] %v544
                  %v546 = vld [vmem:[%s540 + $0x18] sm:$0xf]
                  %547 = vst [vmem:[%s541 + $0x8] sm:$0xf] %v546
                  %v548 = vld [vmem:[%s540 + $0x24] sm:$0xf]
                  %549 = vst [vmem:[%s541 + $0xc] sm:$0xf] %v548
                  %v550 = vld [vmem:[%s540 + $0x30] sm:$0xf]
                  %551 = vst [vmem:[%s541 + $0x10] sm:$0xf] %v550
                  %v552 = vld [vmem:[%s540 + $0x3c] sm:$0xf]
                  %553 = vst [vmem:[%s541 + $0x14] sm:$0xf] %v552
                  %v554 = vld [vmem:[%s540 + $0x48] sm:$0xf]
                  %555 = vst [vmem:[%s541 + $0x18] sm:$0xf] %v554
                  %v556 = vld [vmem:[%s540 + $0x54] sm:$0xf]
                  %557 = vst [vmem:[%s541 + $0x1c] sm:$0xf] %v556
                $region103: #{tpu_custom_call.1} parent=90 // loop_footer
                  %s539 = sadd.s32 1, %s535
                $region104: #{tpu_custom_call.1} parent=90 // loop_footer_branch
                  %534 = sbr.rel target = $region100
                $region105: #{tpu_custom_call.1} parent=90 // loop_exit
                  _
              $region91: #{tpu_custom_call.1} parent=75 // pred_fallthru
                _
            $region76: #{tpu_custom_call.1} parent=71 // pred_fallthru
              _
            // Predicated region
            $region77: #{tpu_custom_call.1} parent=71 // pred_check
              _
            $region78: #{tpu_custom_call.1} parent=71 // pred_check_branch
              %497 = sbr.rel (0) target = $region80
            $region79: #{tpu_custom_call.1} parent=71 // pred_region
              loop: start=0, step=1, limit=1
              $region81: #{tpu_custom_call.1} parent=79 // loop_pre_header
                _
              $region82: #{tpu_custom_call.1} parent=79 // loop_header
                %s500 = sphi 0, %s504
                %p501 = scmp.ge.s32.totalorder %s500, 1
                %s505 = sphi %s491, %s491
                %s506 = sphi %s486, %s486
              $region83: #{tpu_custom_call.1} parent=79 // loop_header_branch
                %503 = sbr.rel (%p501) target = $region87
              $region84: #{tpu_custom_call.1} parent=79 // loop_body
                %v507 = vld [vmem:[%s505] sm:$0xf]
                %508 = vst [vmem:[%s506] sm:$0xf] %v507
                %v509 = vld [vmem:[%s505 + $0xc] sm:$0xf]
                %510 = vst [vmem:[%s506 + $0x4] sm:$0xf] %v509
                %v511 = vld [vmem:[%s505 + $0x18] sm:$0xf]
                %512 = vst [vmem:[%s506 + $0x8] sm:$0xf] %v511
                %v513 = vld [vmem:[%s505 + $0x24] sm:$0xf]
                %514 = vst [vmem:[%s506 + $0xc] sm:$0xf] %v513
                %v515 = vld [vmem:[%s505 + $0x30] sm:$0xf]
                %516 = vst [vmem:[%s506 + $0x10] sm:$0xf] %v515
                %v517 = vld [vmem:[%s505 + $0x3c] sm:$0xf]
                %518 = vst [vmem:[%s506 + $0x14] sm:$0xf] %v517
                %v519 = vld [vmem:[%s505 + $0x48] sm:$0xf]
                %520 = vst [vmem:[%s506 + $0x18] sm:$0xf] %v519
                %v521 = vld [vmem:[%s505 + $0x54] sm:$0xf]
                %522 = vst [vmem:[%s506 + $0x1c] sm:$0xf] %v521
              $region85: #{tpu_custom_call.1} parent=79 // loop_footer
                %s504 = sadd.s32 1, %s500
              $region86: #{tpu_custom_call.1} parent=79 // loop_footer_branch
                %499 = sbr.rel target = $region82
              $region87: #{tpu_custom_call.1} parent=79 // loop_exit
                _
            $region80: #{tpu_custom_call.1} parent=71 // pred_fallthru
              _
          $region72: #{tpu_custom_call.1} parent=67 // pred_fallthru
            _
          %558 = vnop
        $region68: #{tpu_custom_call.1} parent=63 // pred_fallthru
          _
      $region64: #{tpu_custom_call.1} parent=5 // pred_fallthru
        _
      %p559 = scmp.le.s32.totalorder 1, %s27
      %p560 = scmp.lt.s32.totalorder %s27, 7
      %p561 = pnand %p559, %p560
      %p562 = pneg %p561
      // Predicated region
      $region106: #{tpu_custom_call.1} parent=5 // pred_check
        _
      $region107: #{tpu_custom_call.1} parent=5 // pred_check_branch
        %564 = sbr.rel (%p561) target = $region109
      $region108: #{tpu_custom_call.1} parent=5 // pred_region
        %s565 = ssub.s32 %s27, 1
        %s566 = sand.u32 %s54, 1
        %s567 = sand.u32 %s54, 1
        %s568 = smul.addr %s567, 32
        %s569 = scalar_lea.vmem [#allocation3], %s568
        // Predicated region
        $region110: #{tpu_custom_call.1} parent=108 // pred_check
          %p570 = pneg %p67
        $region111: #{tpu_custom_call.1} parent=108 // pred_check_branch
          %572 = sbr.rel (%p570) target = $region113
        $region112: #{tpu_custom_call.1} parent=108 // pred_region
          _
        $region113: #{tpu_custom_call.1} parent=108 // pred_fallthru
          _
        // Predicated region
        $region114: #{tpu_custom_call.1} parent=108 // pred_check
          %p573 = pneg %p88
        $region115: #{tpu_custom_call.1} parent=108 // pred_check_branch
          %575 = sbr.rel (%p573) target = $region117
        $region116: #{tpu_custom_call.1} parent=108 // pred_region
          %576 = dma.done [#allocation5], 32
        $region117: #{tpu_custom_call.1} parent=108 // pred_fallthru
          _
        // Predicated region
        $region118: #{tpu_custom_call.1} parent=108 // pred_check
          %p577 = pneg %p130
        $region119: #{tpu_custom_call.1} parent=108 // pred_check_branch
          %579 = sbr.rel (%p577) target = $region121
        $region120: #{tpu_custom_call.1} parent=108 // pred_region
          %580 = dma.done [#allocation8], 512
        $region121: #{tpu_custom_call.1} parent=108 // pred_fallthru
          _
        // Predicated region
        $region122: #{tpu_custom_call.1} parent=108 // pred_check
          %p581 = pneg %p151
        $region123: #{tpu_custom_call.1} parent=108 // pred_check_branch
          %583 = sbr.rel (%p581) target = $region125
        $region124: #{tpu_custom_call.1} parent=108 // pred_region
          %584 = dma.done [#allocation8], 16
        $region125: #{tpu_custom_call.1} parent=108 // pred_fallthru
          _
        // Predicated region
        $region126: #{tpu_custom_call.1} parent=108 // pred_check
          %p585 = pneg %p172
        $region127: #{tpu_custom_call.1} parent=108 // pred_check_branch
          %587 = sbr.rel (%p585) target = $region129
        $region128: #{tpu_custom_call.1} parent=108 // pred_region
          %588 = dma.done [#allocation11], 8192
        $region129: #{tpu_custom_call.1} parent=108 // pred_fallthru
          _
        // Predicated region
        $region130: #{tpu_custom_call.1} parent=108 // pred_check
          %p589 = pneg %p193
        $region131: #{tpu_custom_call.1} parent=108 // pred_check_branch
          %591 = sbr.rel (%p589) target = $region133
        $region132: #{tpu_custom_call.1} parent=108 // pred_region
          %592 = dma.done [#allocation11], 128
        $region133: #{tpu_custom_call.1} parent=108 // pred_fallthru
          _
        // Predicated region
        $region134: #{tpu_custom_call.1} parent=108 // pred_check
          %p593 = pneg %p214
        $region135: #{tpu_custom_call.1} parent=108 // pred_check_branch
          %595 = sbr.rel (%p593) target = $region137
        $region136: #{tpu_custom_call.1} parent=108 // pred_region
          %596 = dma.done [#allocation14], 32768
        $region137: #{tpu_custom_call.1} parent=108 // pred_fallthru
          _
        // Predicated region
        $region138: #{tpu_custom_call.1} parent=108 // pred_check
          %p597 = pneg %p235
        $region139: #{tpu_custom_call.1} parent=108 // pred_check_branch
          %599 = sbr.rel (%p597) target = $region141
        $region140: #{tpu_custom_call.1} parent=108 // pred_region
          %600 = dma.done [#allocation14], 64
        $region141: #{tpu_custom_call.1} parent=108 // pred_fallthru
          _
        // Predicated region
        $region142: #{tpu_custom_call.1} parent=108 // pred_check
          %p601 = pneg %p256
        $region143: #{tpu_custom_call.1} parent=108 // pred_check_branch
          %603 = sbr.rel (%p601) target = $region145
        $region144: #{tpu_custom_call.1} parent=108 // pred_region
          %604 = dma.done [#allocation17], 8192
        $region145: #{tpu_custom_call.1} parent=108 // pred_fallthru
          _
        // Predicated region
        $region146: #{tpu_custom_call.1} parent=108 // pred_check
          %p605 = pneg %p277
        $region147: #{tpu_custom_call.1} parent=108 // pred_check_branch
          %607 = sbr.rel (%p605) target = $region149
        $region148: #{tpu_custom_call.1} parent=108 // pred_region
          %608 = dma.done [#allocation17], 32
        $region149: #{tpu_custom_call.1} parent=108 // pred_fallthru
          _
        %s609 = sand.u32 %s54, 1
        %s610 = sand.u32 %s54, 1
        %s611 = smul.addr %s610, 32
        %s612 = scalar_lea.vmem [#allocation3], %s611
        %p613 = pneg %p67
        %p614 = pneg %p64
        %p615 = pneg %p88
        %p616 = pneg %p85
        %p617 = pneg %p109
        %p618 = pneg %p106
        %p619 = pneg %p130
        %p620 = pneg %p127
        %p621 = pneg %p151
        %p622 = pneg %p148
        %p623 = pneg %p172
        %p624 = pneg %p169
        %p625 = pneg %p193
        %p626 = pneg %p190
        %p627 = pneg %p214
        %p628 = pneg %p211
        %p629 = pneg %p235
        %p630 = pneg %p232
        %p631 = pneg %p256
        %p632 = pneg %p253
        %p633 = pneg %p277
        %p634 = pneg %p274
        %p635 = pneg %p298
        %p636 = pneg %p295
        %p637 = pneg %p319
        %p638 = pneg %p316
        %p639 = pneg %p345
        %p640 = pneg %p342
        %s641 = sand.u32 %s332, 1
        %s642 = scalar_lea.sflag [#allocation6], %s641
        %s643 = sand.u32 %s332, 1
        %s644 = smul.addr %s643, 8
        %s645 = scalar_lea.vmem [#allocation19], %s644
        %s646 = smul.u32 8, %s36
        %v649 = vld [vmem:[%s569] sm:$0xf]
        %v650 = vld [vmem:[%s569 + $0x4] sm:$0xf]
        %v651 = vld [vmem:[%s569 + $0x8] sm:$0xf]
        %v652 = vld [vmem:[%s569 + $0xc] sm:$0xf]
        %v653 = vld [vmem:[%s569 + $0x10] sm:$0xf]
        %v654 = vld [vmem:[%s569 + $0x14] sm:$0xf]
        %v655 = vld [vmem:[%s569 + $0x18] sm:$0xf]
        %v656 = vld [vmem:[%s569 + $0x1c] sm:$0xf]
        %v657 = vld [vmem:[#allocation4] sm:$0x3]
        %v658 = vld [vmem:[%s2] sm:$0x1]
        %v660 = vlaneseq
        %v661 = vshrl.u32 %v660, 7
        %v662 = vsub.s32 0, %v661
        %v663 = vrot.slane %v658, %v662
        %v673 = vunpack.c.l.b16 %v649
        %v674 = vunpack.c.l.b16 %v650
        %v675 = vunpack.c.l.b16 %v651
        %v676 = vunpack.c.l.b16 %v652
        %v677 = vunpack.c.l.b16 %v653
        %v678 = vunpack.c.l.b16 %v654
        %v679 = vunpack.c.l.b16 %v655
        %v680 = vunpack.c.l.b16 %v656
        %v681 = vpack.c.b16 %v674, %v673
        %v682 = vpack.c.b16 %v676, %v675
        %v683 = vpack.c.b16 %v678, %v677
        %v684 = vpack.c.b16 %v680, %v679
        %vm685 = vcmask 23552
        %v687 = vsel %vm685, %v681, 0
        %v690 = vsel %vm685, %v682, 0
        %v693 = vsel %vm685, %v683, 0
        %v696 = vsel %vm685, %v684, 0
        %vm698 = vcmask 1040384
        %vm699 = vcmask 1041408
        %v700 = vsel %vm698, 4294967295, 65535
        %v701 = vsel %vm699, %v700, 0
        %v703 = vand.u32 %v657, %v701
        %705 = vmatprep.subr.bf16.mxu0 0
        %706 = vmatpush1.bf16.msra.mxu0 %v703
        %707 = vmatprep.subr.bf16.mxu0 0
        %708 = vmatpush1.bf16.msra.mxu0 0
        %709 = vmatprep.subr.bf16.mxu0 0
        %710 = vmatpush1.bf16.msra.mxu0 0
        %711 = vmatprep.subr.bf16.mxu0 0
        %712 = vmatpush1.bf16.msra.mxu0 0
        %713 = vmatprep.subr.bf16.mxu0 0
        %714 = vmatpush1.bf16.msra.mxu0 0
        %715 = vmatprep.subr.bf16.mxu0 0
        %716 = vmatpush1.bf16.msra.mxu0 0
        %717 = vmatprep.subr.bf16.mxu0 0
        %718 = vmatpush1.bf16.msra.mxu0 0
        %719 = vmatprep.subr.bf16.mxu0 0
        %720 = vmatpush1.bf16.msra.mxu0 0
        %721 = vmatprep.subr.bf16.mxu0 0
        %722 = vmatpush1.bf16.msra.mxu0 0
        %723 = vmatprep.subr.bf16.mxu0 0
        %724 = vmatpush1.bf16.msra.mxu0 0
        %725 = vmatprep.subr.bf16.mxu0 0
        %726 = vmatpush1.bf16.msra.mxu0 0
        %727 = vmatprep.subr.bf16.mxu0 0
        %728 = vmatpush1.bf16.msra.mxu0 0
        %729 = vmatprep.subr.bf16.mxu0 0
        %730 = vmatpush1.bf16.msra.mxu0 0
        %731 = vmatprep.subr.bf16.mxu0 0
        %732 = vmatpush1.bf16.msra.mxu0 0
        %733 = vmatprep.subr.bf16.mxu0 0
        %734 = vmatpush1.bf16.msra.mxu0 0
        %735 = vmatprep.subr.bf16.mxu0 0
        %736 = vmatpush1.bf16.msra.mxu0 0
        %737 = vmatprep.mubr.bf16.mxu0 0
        %738 = vmatmul.mubr.bf16.gmra.mrb[0].mxu0 %v687
        %v739 = vpop.f32.mrb[0].mxu0
        %v740 = vadd.f32 %v663, %v739
        %v741 = vpop.f32.mrb[0].mxu0
        %v742 = vpop.f32.mrb[0].mxu0
        %v743 = vadd.f32 %v663, %v742
        %v744 = vpop.f32.mrb[0].mxu0
        %745 = vmatprep.mubr.bf16.mxu0 0
        %746 = vmatmul.mubr.bf16.gmra.mrb[0].mxu0 %v690
        %v747 = vpop.f32.mrb[0].mxu0
        %v748 = vadd.f32 %v663, %v747
        %v749 = vpop.f32.mrb[0].mxu0
        %v750 = vpop.f32.mrb[0].mxu0
        %v751 = vadd.f32 %v663, %v750
        %v752 = vpop.f32.mrb[0].mxu0
        %753 = vmatprep.mubr.bf16.mxu0 0
        %754 = vmatmul.mubr.bf16.gmra.mrb[0].mxu0 %v693
        %v755 = vpop.f32.mrb[0].mxu0
        %v756 = vadd.f32 %v663, %v755
        %v757 = vpop.f32.mrb[0].mxu0
        %v758 = vpop.f32.mrb[0].mxu0
        %v759 = vadd.f32 %v663, %v758
        %v760 = vpop.f32.mrb[0].mxu0
        %761 = vmatprep.mubr.bf16.mxu0 0
        %762 = vmatmul.mubr.bf16.gmra.mrb[0].mxu0 %v696
        %v763 = vpop.f32.mrb[0].mxu0
        %v764 = vadd.f32 %v663, %v763
        %v765 = vpop.f32.mrb[0].mxu0
        %v766 = vpop.f32.mrb[0].mxu0
        %v767 = vadd.f32 %v663, %v766
        %v768 = vpop.f32.mrb[0].mxu0
        %769 = vdwg.mxu0
        %v770 = vmax.f32 %v740, 0.0
        %v771 = vmax.f32 %v743, 0.0
        %v772 = vmax.f32 %v748, 0.0
        %v773 = vmax.f32 %v751, 0.0
        %v774 = vmax.f32 %v756, 0.0
        %v775 = vmax.f32 %v759, 0.0
        %v776 = vmax.f32 %v764, 0.0
        %v777 = vmax.f32 %v767, 0.0
        %v778 = vpack.c.bf16 %v771, %v770
        %v779 = vpack.c.bf16 %v773, %v772
        %v780 = vpack.c.bf16 %v775, %v774
        %v781 = vpack.c.bf16 %v777, %v776
        %v782 = vld [vmem:[#allocation7] sm:$0xf]
        %v783 = vld [vmem:[#allocation7 + $0x4] sm:$0xf]
        %v784 = vld [vmem:[#allocation7 + $0x8] sm:$0xf]
        %v785 = vld [vmem:[#allocation7 + $0xc] sm:$0xf]
        %v786 = vld [vmem:[#allocation7 + $0x10] sm:$0xf]
        %v787 = vld [vmem:[#allocation7 + $0x14] sm:$0xf]
        %v788 = vld [vmem:[#allocation7 + $0x18] sm:$0xf]
        %v789 = vld [vmem:[#allocation7 + $0x1c] sm:$0xf]
        %v790 = vld [vmem:[#allocation9] sm:$0x1]
        %v792 = vlaneseq
        %v793 = vshrl.u32 %v792, 7
        %v794 = vsub.s32 0, %v793
        %v795 = vrot.slane %v790, %v794
        %v805 = vunpack.c.l.b16 %v782
        %v806 = vunpack.c.l.b16 %v783
        %v807 = vunpack.c.l.b16 %v784
        %v808 = vunpack.c.l.b16 %v785
        %v809 = vunpack.c.l.b16 %v786
        %v810 = vunpack.c.l.b16 %v787
        %v811 = vunpack.c.l.b16 %v788
        %v812 = vunpack.c.l.b16 %v789
        %v813 = vpack.c.b16 %v806, %v805
        %v814 = vpack.c.b16 %v808, %v807
        %v815 = vpack.c.b16 %v810, %v809
        %v816 = vpack.c.b16 %v812, %v811
        %vm821 = vcmask 523264
        %v823 = vsel %vm821, %v778, 0
        %v826 = vsel %vm821, %v779, 0
        %v829 = vsel %vm821, %v780, 0
        %v832 = vsel %vm821, %v781, 0
        %834 = vmatprep.subr.bf16.mxu0 0
        %835 = vmatpush1.bf16.msra.mxu0 %v813
        %836 = vmatprep.subr.bf16.mxu0 0
        %837 = vmatpush1.bf16.msra.mxu0 %v814
        %838 = vmatprep.subr.bf16.mxu0 0
        %839 = vmatpush1.bf16.msra.mxu0 %v815
        %840 = vmatprep.subr.bf16.mxu0 0
        %841 = vmatpush1.bf16.msra.mxu0 %v816
        %842 = vmatprep.subr.bf16.mxu0 0
        %843 = vmatpush1.bf16.msra.mxu0 0
        %844 = vmatprep.subr.bf16.mxu0 0
        %845 = vmatpush1.bf16.msra.mxu0 0
        %846 = vmatprep.subr.bf16.mxu0 0
        %847 = vmatpush1.bf16.msra.mxu0 0
        %848 = vmatprep.subr.bf16.mxu0 0
        %849 = vmatpush1.bf16.msra.mxu0 0
        %850 = vmatprep.subr.bf16.mxu0 0
        %851 = vmatpush1.bf16.msra.mxu0 0
        %852 = vmatprep.subr.bf16.mxu0 0
        %853 = vmatpush1.bf16.msra.mxu0 0
        %854 = vmatprep.subr.bf16.mxu0 0
        %855 = vmatpush1.bf16.msra.mxu0 0
        %856 = vmatprep.subr.bf16.mxu0 0
        %857 = vmatpush1.bf16.msra.mxu0 0
        %858 = vmatprep.subr.bf16.mxu0 0
        %859 = vmatpush1.bf16.msra.mxu0 0
        %860 = vmatprep.subr.bf16.mxu0 0
        %861 = vmatpush1.bf16.msra.mxu0 0
        %862 = vmatprep.subr.bf16.mxu0 0
        %863 = vmatpush1.bf16.msra.mxu0 0
        %864 = vmatprep.subr.bf16.mxu0 0
        %865 = vmatpush1.bf16.msra.mxu0 0
        %866 = vmatprep.mubr.bf16.mxu0 0
        %867 = vmatmul.mubr.bf16.gmra.mrb[0].mxu0 %v823
        %v868 = vpop.f32.mrb[0].mxu0
        %v869 = vadd.f32 %v795, %v868
        %v870 = vpop.f32.mrb[0].mxu0
        %v871 = vpop.f32.mrb[0].mxu0
        %v872 = vadd.f32 %v795, %v871
        %v873 = vpop.f32.mrb[0].mxu0
        %874 = vmatprep.mubr.bf16.mxu0 0
        %875 = vmatmul.mubr.bf16.gmra.mrb[0].mxu0 %v826
        %v876 = vpop.f32.mrb[0].mxu0
        %v877 = vadd.f32 %v795, %v876
        %v878 = vpop.f32.mrb[0].mxu0
        %v879 = vpop.f32.mrb[0].mxu0
        %v880 = vadd.f32 %v795, %v879
        %v881 = vpop.f32.mrb[0].mxu0
        %882 = vmatprep.mubr.bf16.mxu0 0
        %883 = vmatmul.mubr.bf16.gmra.mrb[0].mxu0 %v829
        %v884 = vpop.f32.mrb[0].mxu0
        %v885 = vadd.f32 %v795, %v884
        %v886 = vpop.f32.mrb[0].mxu0
        %v887 = vpop.f32.mrb[0].mxu0
        %v888 = vadd.f32 %v795, %v887
        %v889 = vpop.f32.mrb[0].mxu0
        %890 = vmatprep.mubr.bf16.mxu0 0
        %891 = vmatmul.mubr.bf16.gmra.mrb[0].mxu0 %v832
        %v892 = vpop.f32.mrb[0].mxu0
        %v893 = vadd.f32 %v795, %v892
        %v894 = vpop.f32.mrb[0].mxu0
        %v895 = vpop.f32.mrb[0].mxu0
        %v896 = vadd.f32 %v795, %v895
        %v897 = vpop.f32.mrb[0].mxu0
        %898 = vdwg.mxu0
        %v899 = vmax.f32 %v869, 0.0
        %v900 = vmax.f32 %v872, 0.0
        %v901 = vmax.f32 %v877, 0.0
        %v902 = vmax.f32 %v880, 0.0
        %v903 = vmax.f32 %v885, 0.0
        %v904 = vmax.f32 %v888, 0.0
        %v905 = vmax.f32 %v893, 0.0
        %v906 = vmax.f32 %v896, 0.0
        %v907 = vpack.c.bf16 %v900, %v899
        %v908 = vpack.c.bf16 %v902, %v901
        %v909 = vpack.c.bf16 %v904, %v903
        %v910 = vpack.c.bf16 %v906, %v905
        %v911 = vld [vmem:[#allocation10] sm:$0xff]
        %v912 = vld [vmem:[#allocation10 + $0x8] sm:$0xff]
        %v913 = vld [vmem:[#allocation10 + $0x10] sm:$0xff]
        %v914 = vld [vmem:[#allocation10 + $0x18] sm:$0xff]
        %v915 = vld [vmem:[#allocation10 + $0x20] sm:$0xff]
        %v916 = vld [vmem:[#allocation10 + $0x28] sm:$0xff]
        %v917 = vld [vmem:[#allocation10 + $0x30] sm:$0xff]
        %v918 = vld [vmem:[#allocation10 + $0x38] sm:$0xff]
        %v919 = vld [vmem:[#allocation10 + $0x40] sm:$0xff]
        %v920 = vld [vmem:[#allocation10 + $0x48] sm:$0xff]
        %v921 = vld [vmem:[#allocation10 + $0x50] sm:$0xff]
        %v922 = vld [vmem:[#allocation10 + $0x58] sm:$0xff]
        %v923 = vld [vmem:[#allocation10 + $0x60] sm:$0xff]
        %v924 = vld [vmem:[#allocation10 + $0x68] sm:$0xff]
        %v925 = vld [vmem:[#allocation10 + $0x70] sm:$0xff]
        %v926 = vld [vmem:[#allocation10 + $0x78] sm:$0xff]
        %v927 = vld [vmem:[#allocation10 + $0x80] sm:$0xff]
        %v928 = vld [vmem:[#allocation10 + $0x88] sm:$0xff]
        %v929 = vld [vmem:[#allocation10 + $0x90] sm:$0xff]
        %v930 = vld [vmem:[#allocation10 + $0x98] sm:$0xff]
        %v931 = vld [vmem:[#allocation10 + $0xa0] sm:$0xff]
        %v932 = vld [vmem:[#allocation10 + $0xa8] sm:$0xff]
        %v933 = vld [vmem:[#allocation10 + $0xb0] sm:$0xff]
        %v934 = vld [vmem:[#allocation10 + $0xb8] sm:$0xff]
        %v935 = vld [vmem:[#allocation10 + $0xc0] sm:$0xff]
        %v936 = vld [vmem:[#allocation10 + $0xc8] sm:$0xff]
        %v937 = vld [vmem:[#allocation10 + $0xd0] sm:$0xff]
        %v938 = vld [vmem:[#allocation10 + $0xd8] sm:$0xff]
        %v939 = vld [vmem:[#allocation10 + $0xe0] sm:$0xff]
        %v940 = vld [vmem:[#allocation10 + $0xe8] sm:$0xff]
        %v941 = vld [vmem:[#allocation10 + $0xf0] sm:$0xff]
        %v942 = vld [vmem:[#allocation10 + $0xf8] sm:$0xff]
        %v943 = vld [vmem:[#allocation10 + $0x100] sm:$0xff]
        %v944 = vld [vmem:[#allocation10 + $0x108] sm:$0xff]
        %v945 = vld [vmem:[#allocation10 + $0x110] sm:$0xff]
        %v946 = vld [vmem:[#allocation10 + $0x118] sm:$0xff]
        %v947 = vld [vmem:[#allocation10 + $0x120] sm:$0xff]
        %v948 = vld [vmem:[#allocation10 + $0x128] sm:$0xff]
        %v949 = vld [vmem:[#allocation10 + $0x130] sm:$0xff]
        %v950 = vld [vmem:[#allocation10 + $0x138] sm:$0xff]
        %v951 = vld [vmem:[#allocation10 + $0x140] sm:$0xff]
        %v952 = vld [vmem:[#allocation10 + $0x148] sm:$0xff]
        %v953 = vld [vmem:[#allocation10 + $0x150] sm:$0xff]
        %v954 = vld [vmem:[#allocation10 + $0x158] sm:$0xff]
        %v955 = vld [vmem:[#allocation10 + $0x160] sm:$0xff]
        %v956 = vld [vmem:[#allocation10 + $0x168] sm:$0xff]
        %v957 = vld [vmem:[#allocation10 + $0x170] sm:$0xff]
        %v958 = vld [vmem:[#allocation10 + $0x178] sm:$0xff]
        %v959 = vld [vmem:[#allocation10 + $0x180] sm:$0xff]
        %v960 = vld [vmem:[#allocation10 + $0x188] sm:$0xff]
        %v961 = vld [vmem:[#allocation10 + $0x190] sm:$0xff]
        %v962 = vld [vmem:[#allocation10 + $0x198] sm:$0xff]
        %v963 = vld [vmem:[#allocation10 + $0x1a0] sm:$0xff]
        %v964 = vld [vmem:[#allocation10 + $0x1a8] sm:$0xff]
        %v965 = vld [vmem:[#allocation10 + $0x1b0] sm:$0xff]
        %v966 = vld [vmem:[#allocation10 + $0x1b8] sm:$0xff]
        %v967 = vld [vmem:[#allocation10 + $0x1c0] sm:$0xff]
        %v968 = vld [vmem:[#allocation10 + $0x1c8] sm:$0xff]
        %v969 = vld [vmem:[#allocation10 + $0x1d0] sm:$0xff]
        %v970 = vld [vmem:[#allocation10 + $0x1d8] sm:$0xff]
        %v971 = vld [vmem:[#allocation10 + $0x1e0] sm:$0xff]
        %v972 = vld [vmem:[#allocation10 + $0x1e8] sm:$0xff]
        %v973 = vld [vmem:[#allocation10 + $0x1f0] sm:$0xff]
        %v974 = vld [vmem:[#allocation10 + $0x1f8] sm:$0xff]
        %v975 = vld [vmem:[#allocation12] sm:$0xff]
        %v977 = vlaneseq
        %v978 = vshrl.u32 %v977, 7
        %v979 = vsub.s32 0, %v978
        %v980 = vrot.slane %v975, %v979
        %v981 = vlaneseq
        %v982 = vshrl.u32 %v981, 7
        %v983 = vsub.s32 1, %v982
        %v984 = vrot.slane %v975, %v983
        %v985 = vlaneseq
        %v986 = vshrl.u32 %v985, 7
        %v987 = vsub.s32 2, %v986
        %v988 = vrot.slane %v975, %v987
        %v989 = vlaneseq
        %v990 = vshrl.u32 %v989, 7
        %v991 = vsub.s32 3, %v990
        %v992 = vrot.slane %v975, %v991
        %v993 = vlaneseq
        %v994 = vshrl.u32 %v993, 7
        %v995 = vsub.s32 4, %v994
        %v996 = vrot.slane %v975, %v995
        %v997 = vlaneseq
        %v998 = vshrl.u32 %v997, 7
        %v999 = vsub.s32 5, %v998
        %v1000 = vrot.slane %v975, %v999
        %v1001 = vlaneseq
        %v1002 = vshrl.u32 %v1001, 7
        %v1003 = vsub.s32 6, %v1002
        %v1004 = vrot.slane %v975, %v1003
        %v1005 = vlaneseq
        %v1006 = vshrl.u32 %v1005, 7
        %v1007 = vsub.s32 7, %v1006
        %v1008 = vrot.slane %v975, %v1007
        %v1081 = vunpack.c.l.b16 %v911
        %v1082 = vunpack.c.h.b16 %v911
        %v1083 = vunpack.c.l.b16 %v912
        %v1084 = vunpack.c.h.b16 %v912
        %v1085 = vunpack.c.l.b16 %v913
        %v1086 = vunpack.c.h.b16 %v913
        %v1087 = vunpack.c.l.b16 %v914
        %v1088 = vunpack.c.h.b16 %v914
        %v1089 = vunpack.c.l.b16 %v915
        %v1090 = vunpack.c.h.b16 %v915
        %v1091 = vunpack.c.l.b16 %v916
        %v1092 = vunpack.c.h.b16 %v916
        %v1093 = vunpack.c.l.b16 %v917
        %v1094 = vunpack.c.h.b16 %v917
        %v1095 = vunpack.c.l.b16 %v918
        %v1096 = vunpack.c.h.b16 %v918
        %v1097 = vunpack.c.l.b16 %v919
        %v1098 = vunpack.c.h.b16 %v919
        %v1099 = vunpack.c.l.b16 %v920
        %v1100 = vunpack.c.h.b16 %v920
        %v1101 = vunpack.c.l.b16 %v921
        %v1102 = vunpack.c.h.b16 %v921
        %v1103 = vunpack.c.l.b16 %v922
        %v1104 = vunpack.c.h.b16 %v922
        %v1105 = vunpack.c.l.b16 %v923
        %v1106 = vunpack.c.h.b16 %v923
        %v1107 = vunpack.c.l.b16 %v924
        %v1108 = vunpack.c.h.b16 %v924
        %v1109 = vunpack.c.l.b16 %v925
        %v1110 = vunpack.c.h.b16 %v925
        %v1111 = vunpack.c.l.b16 %v926
        %v1112 = vunpack.c.h.b16 %v926
        %v1113 = vunpack.c.l.b16 %v927
        %v1114 = vunpack.c.h.b16 %v927
        %v1115 = vunpack.c.l.b16 %v928
        %v1116 = vunpack.c.h.b16 %v928
        %v1117 = vunpack.c.l.b16 %v929
        %v1118 = vunpack.c.h.b16 %v929
        %v1119 = vunpack.c.l.b16 %v930
        %v1120 = vunpack.c.h.b16 %v930
        %v1121 = vunpack.c.l.b16 %v931
        %v1122 = vunpack.c.h.b16 %v931
        %v1123 = vunpack.c.l.b16 %v932
        %v1124 = vunpack.c.h.b16 %v932
        %v1125 = vunpack.c.l.b16 %v933
        %v1126 = vunpack.c.h.b16 %v933
        %v1127 = vunpack.c.l.b16 %v934
        %v1128 = vunpack.c.h.b16 %v934
        %v1129 = vunpack.c.l.b16 %v935
        %v1130 = vunpack.c.h.b16 %v935
        %v1131 = vunpack.c.l.b16 %v936
        %v1132 = vunpack.c.h.b16 %v936
        %v1133 = vunpack.c.l.b16 %v937
        %v1134 = vunpack.c.h.b16 %v937
        %v1135 = vunpack.c.l.b16 %v938
        %v1136 = vunpack.c.h.b16 %v938
        %v1137 = vunpack.c.l.b16 %v939
        %v1138 = vunpack.c.h.b16 %v939
        %v1139 = vunpack.c.l.b16 %v940
        %v1140 = vunpack.c.h.b16 %v940
        %v1141 = vunpack.c.l.b16 %v941
        %v1142 = vunpack.c.h.b16 %v941
        %v1143 = vunpack.c.l.b16 %v942
        %v1144 = vunpack.c.h.b16 %v942
        %v1145 = vunpack.c.l.b16 %v943
        %v1146 = vunpack.c.h.b16 %v943
        %v1147 = vunpack.c.l.b16 %v944
        %v1148 = vunpack.c.h.b16 %v944
        %v1149 = vunpack.c.l.b16 %v945
        %v1150 = vunpack.c.h.b16 %v945
        %v1151 = vunpack.c.l.b16 %v946
        %v1152 = vunpack.c.h.b16 %v946
        %v1153 = vunpack.c.l.b16 %v947
        %v1154 = vunpack.c.h.b16 %v947
        %v1155 = vunpack.c.l.b16 %v948
        %v1156 = vunpack.c.h.b16 %v948
        %v1157 = vunpack.c.l.b16 %v949
        %v1158 = vunpack.c.h.b16 %v949
        %v1159 = vunpack.c.l.b16 %v950
        %v1160 = vunpack.c.h.b16 %v950
        %v1161 = vunpack.c.l.b16 %v951
        %v1162 = vunpack.c.h.b16 %v951
        %v1163 = vunpack.c.l.b16 %v952
        %v1164 = vunpack.c.h.b16 %v952
        %v1165 = vunpack.c.l.b16 %v953
        %v1166 = vunpack.c.h.b16 %v953
        %v1167 = vunpack.c.l.b16 %v954
        %v1168 = vunpack.c.h.b16 %v954
        %v1169 = vunpack.c.l.b16 %v955
        %v1170 = vunpack.c.h.b16 %v955
        %v1171 = vunpack.c.l.b16 %v956
        %v1172 = vunpack.c.h.b16 %v956
        %v1173 = vunpack.c.l.b16 %v957
        %v1174 = vunpack.c.h.b16 %v957
        %v1175 = vunpack.c.l.b16 %v958
        %v1176 = vunpack.c.h.b16 %v958
        %v1177 = vunpack.c.l.b16 %v959
        %v1178 = vunpack.c.h.b16 %v959
        %v1179 = vunpack.c.l.b16 %v960
        %v1180 = vunpack.c.h.b16 %v960
        %v1181 = vunpack.c.l.b16 %v961
        %v1182 = vunpack.c.h.b16 %v961
        %v1183 = vunpack.c.l.b16 %v962
        %v1184 = vunpack.c.h.b16 %v962
        %v1185 = vunpack.c.l.b16 %v963
        %v1186 = vunpack.c.h.b16 %v963
        %v1187 = vunpack.c.l.b16 %v964
        %v1188 = vunpack.c.h.b16 %v964
        %v1189 = vunpack.c.l.b16 %v965
        %v1190 = vunpack.c.h.b16 %v965
        %v1191 = vunpack.c.l.b16 %v966
        %v1192 = vunpack.c.h.b16 %v966
        %v1193 = vunpack.c.l.b16 %v967
        %v1194 = vunpack.c.h.b16 %v967
        %v1195 = vunpack.c.l.b16 %v968
        %v1196 = vunpack.c.h.b16 %v968
        %v1197 = vunpack.c.l.b16 %v969
        %v1198 = vunpack.c.h.b16 %v969
        %v1199 = vunpack.c.l.b16 %v970
        %v1200 = vunpack.c.h.b16 %v970
        %v1201 = vunpack.c.l.b16 %v971
        %v1202 = vunpack.c.h.b16 %v971
        %v1203 = vunpack.c.l.b16 %v972
        %v1204 = vunpack.c.h.b16 %v972
        %v1205 = vunpack.c.l.b16 %v973
        %v1206 = vunpack.c.h.b16 %v973
        %v1207 = vunpack.c.l.b16 %v974
        %v1208 = vunpack.c.h.b16 %v974
        %v1209 = vpack.c.b16 %v1089, %v1081
        %v1210 = vpack.c.b16 %v1090, %v1082
        %v1211 = vpack.c.b16 %v1091, %v1083
        %v1212 = vpack.c.b16 %v1092, %v1084
        %v1213 = vpack.c.b16 %v1093, %v1085
        %v1214 = vpack.c.b16 %v1094, %v1086
        %v1215 = vpack.c.b16 %v1095, %v1087
        %v1216 = vpack.c.b16 %v1096, %v1088
        %v1217 = vpack.c.b16 %v1105, %v1097
        %v1218 = vpack.c.b16 %v1106, %v1098
        %v1219 = vpack.c.b16 %v1107, %v1099
        %v1220 = vpack.c.b16 %v1108, %v1100
        %v1221 = vpack.c.b16 %v1109, %v1101
        %v1222 = vpack.c.b16 %v1110, %v1102
        %v1223 = vpack.c.b16 %v1111, %v1103
        %v1224 = vpack.c.b16 %v1112, %v1104
        %v1225 = vpack.c.b16 %v1121, %v1113
        %v1226 = vpack.c.b16 %v1122, %v1114
        %v1227 = vpack.c.b16 %v1123, %v1115
        %v1228 = vpack.c.b16 %v1124, %v1116
        %v1229 = vpack.c.b16 %v1125, %v1117
        %v1230 = vpack.c.b16 %v1126, %v1118
        %v1231 = vpack.c.b16 %v1127, %v1119
        %v1232 = vpack.c.b16 %v1128, %v1120
        %v1233 = vpack.c.b16 %v1137, %v1129
        %v1234 = vpack.c.b16 %v1138, %v1130
        %v1235 = vpack.c.b16 %v1139, %v1131
        %v1236 = vpack.c.b16 %v1140, %v1132
        %v1237 = vpack.c.b16 %v1141, %v1133
        %v1238 = vpack.c.b16 %v1142, %v1134
        %v1239 = vpack.c.b16 %v1143, %v1135
        %v1240 = vpack.c.b16 %v1144, %v1136
        %v1241 = vpack.c.b16 %v1153, %v1145
        %v1242 = vpack.c.b16 %v1154, %v1146
        %v1243 = vpack.c.b16 %v1155, %v1147
        %v1244 = vpack.c.b16 %v1156, %v1148
        %v1245 = vpack.c.b16 %v1157, %v1149
        %v1246 = vpack.c.b16 %v1158, %v1150
        %v1247 = vpack.c.b16 %v1159, %v1151
        %v1248 = vpack.c.b16 %v1160, %v1152
        %v1249 = vpack.c.b16 %v1169, %v1161
        %v1250 = vpack.c.b16 %v1170, %v1162
        %v1251 = vpack.c.b16 %v1171, %v1163
        %v1252 = vpack.c.b16 %v1172, %v1164
        %v1253 = vpack.c.b16 %v1173, %v1165
        %v1254 = vpack.c.b16 %v1174, %v1166
        %v1255 = vpack.c.b16 %v1175, %v1167
        %v1256 = vpack.c.b16 %v1176, %v1168
        %v1257 = vpack.c.b16 %v1185, %v1177
        %v1258 = vpack.c.b16 %v1186, %v1178
        %v1259 = vpack.c.b16 %v1187, %v1179
        %v1260 = vpack.c.b16 %v1188, %v1180
        %v1261 = vpack.c.b16 %v1189, %v1181
        %v1262 = vpack.c.b16 %v1190, %v1182
        %v1263 = vpack.c.b16 %v1191, %v1183
        %v1264 = vpack.c.b16 %v1192, %v1184
        %v1265 = vpack.c.b16 %v1201, %v1193
        %v1266 = vpack.c.b16 %v1202, %v1194
        %v1267 = vpack.c.b16 %v1203, %v1195
        %v1268 = vpack.c.b16 %v1204, %v1196
        %v1269 = vpack.c.b16 %v1205, %v1197
        %v1270 = vpack.c.b16 %v1206, %v1198
        %v1271 = vpack.c.b16 %v1207, %v1199
        %v1272 = vpack.c.b16 %v1208, %v1200
        %1337 = vmatprep.subr.bf16.mxu0 %v1210
        %1338 = vmatpush1.bf16.msra.mxu0 %v1209
        %1339 = vmatprep.subr.bf16.mxu0 %v1218
        %1340 = vmatpush1.bf16.msra.mxu0 %v1217
        %1341 = vmatprep.subr.bf16.mxu0 %v1226
        %1342 = vmatpush1.bf16.msra.mxu0 %v1225
        %1343 = vmatprep.subr.bf16.mxu0 %v1234
        %1344 = vmatpush1.bf16.msra.mxu0 %v1233
        %1345 = vmatprep.subr.bf16.mxu0 %v1242
        %1346 = vmatpush1.bf16.msra.mxu0 %v1241
        %1347 = vmatprep.subr.bf16.mxu0 %v1250
        %1348 = vmatpush1.bf16.msra.mxu0 %v1249
        %1349 = vmatprep.subr.bf16.mxu0 %v1258
        %1350 = vmatpush1.bf16.msra.mxu0 %v1257
        %1351 = vmatprep.subr.bf16.mxu0 %v1266
        %1352 = vmatpush1.bf16.msra.mxu0 %v1265
        %1353 = vmatprep.subr.bf16.mxu0 0
        %1354 = vmatpush1.bf16.msra.mxu0 0
        %1355 = vmatprep.subr.bf16.mxu0 0
        %1356 = vmatpush1.bf16.msra.mxu0 0
        %1357 = vmatprep.subr.bf16.mxu0 0
        %1358 = vmatpush1.bf16.msra.mxu0 0
        %1359 = vmatprep.subr.bf16.mxu0 0
        %1360 = vmatpush1.bf16.msra.mxu0 0
        %1361 = vmatprep.subr.bf16.mxu0 0
        %1362 = vmatpush1.bf16.msra.mxu0 0
        %1363 = vmatprep.subr.bf16.mxu0 0
        %1364 = vmatpush1.bf16.msra.mxu0 0
        %1365 = vmatprep.subr.bf16.mxu0 0
        %1366 = vmatpush1.bf16.msra.mxu0 0
        %1367 = vmatprep.subr.bf16.mxu0 0
        %1368 = vmatpush1.bf16.msra.mxu0 0
        %1369 = vmatprep.mubr.bf16.mxu0 0
        %1370 = vmatmul.mubr.bf16.gmra.mrb[0].mxu0 %v907
        %v1371 = vpop.f32.mrb[0].mxu0
        %v1372 = vadd.f32 %v980, %v1371
        %v1373 = vpop.f32.mrb[0].mxu0
        %v1374 = vadd.f32 %v984, %v1373
        %v1375 = vpop.f32.mrb[0].mxu0
        %v1376 = vadd.f32 %v980, %v1375
        %v1377 = vpop.f32.mrb[0].mxu0
        %v1378 = vadd.f32 %v984, %v1377
        %1379 = vmatprep.mubr.bf16.mxu0 0
        %1380 = vmatmul.mubr.bf16.gmra.mrb[0].mxu0 %v908
        %v1381 = vpop.f32.mrb[0].mxu0
        %v1382 = vadd.f32 %v980, %v1381
        %v1383 = vpop.f32.mrb[0].mxu0
        %v1384 = vadd.f32 %v984, %v1383
        %v1385 = vpop.f32.mrb[0].mxu0
        %v1386 = vadd.f32 %v980, %v1385
        %v1387 = vpop.f32.mrb[0].mxu0
        %v1388 = vadd.f32 %v984, %v1387
        %1389 = vmatprep.mubr.bf16.mxu0 0
        %1390 = vmatmul.mubr.bf16.gmra.mrb[0].mxu0 %v909
        %v1391 = vpop.f32.mrb[0].mxu0
        %v1392 = vadd.f32 %v980, %v1391
        %v1393 = vpop.f32.mrb[0].mxu0
        %v1394 = vadd.f32 %v984, %v1393
        %v1395 = vpop.f32.mrb[0].mxu0
        %v1396 = vadd.f32 %v980, %v1395
        %v1397 = vpop.f32.mrb[0].mxu0
        %v1398 = vadd.f32 %v984, %v1397
        %1399 = vmatprep.mubr.bf16.mxu0 0
        %1400 = vmatmul.mubr.bf16.gmra.mrb[0].mxu0 %v910
        %v1401 = vpop.f32.mrb[0].mxu0
        %v1402 = vadd.f32 %v980, %v1401
        %v1403 = vpop.f32.mrb[0].mxu0
        %v1404 = vadd.f32 %v984, %v1403
        %v1405 = vpop.f32.mrb[0].mxu0
        %v1406 = vadd.f32 %v980, %v1405
        %v1407 = vpop.f32.mrb[0].mxu0
        %v1408 = vadd.f32 %v984, %v1407
        %1409 = vdwg.mxu0
        %1410 = vmatprep.subr.bf16.mxu0 %v1212
        %1411 = vmatpush1.bf16.msra.mxu0 %v1211
        %1412 = vmatprep.subr.bf16.mxu0 %v1220
        %1413 = vmatpush1.bf16.msra.mxu0 %v1219
        %1414 = vmatprep.subr.bf16.mxu0 %v1228
        %1415 = vmatpush1.bf16.msra.mxu0 %v1227
        %1416 = vmatprep.subr.bf16.mxu0 %v1236
        %1417 = vmatpush1.bf16.msra.mxu0 %v1235
        %1418 = vmatprep.subr.bf16.mxu0 %v1244
        %1419 = vmatpush1.bf16.msra.mxu0 %v1243
        %1420 = vmatprep.subr.bf16.mxu0 %v1252
        %1421 = vmatpush1.bf16.msra.mxu0 %v1251
        %1422 = vmatprep.subr.bf16.mxu0 %v1260
        %1423 = vmatpush1.bf16.msra.mxu0 %v1259
        %1424 = vmatprep.subr.bf16.mxu0 %v1268
        %1425 = vmatpush1.bf16.msra.mxu0 %v1267
        %1426 = vmatprep.subr.bf16.mxu0 0
        %1427 = vmatpush1.bf16.msra.mxu0 0
        %1428 = vmatprep.subr.bf16.mxu0 0
        %1429 = vmatpush1.bf16.msra.mxu0 0
        %1430 = vmatprep.subr.bf16.mxu0 0
        %1431 = vmatpush1.bf16.msra.mxu0 0
        %1432 = vmatprep.subr.bf16.mxu0 0
        %1433 = vmatpush1.bf16.msra.mxu0 0
        %1434 = vmatprep.subr.bf16.mxu0 0
        %1435 = vmatpush1.bf16.msra.mxu0 0
        %1436 = vmatprep.subr.bf16.mxu0 0
        %1437 = vmatpush1.bf16.msra.mxu0 0
        %1438 = vmatprep.subr.bf16.mxu0 0
        %1439 = vmatpush1.bf16.msra.mxu0 0
        %1440 = vmatprep.subr.bf16.mxu0 0
        %1441 = vmatpush1.bf16.msra.mxu0 0
        %1442 = vmatprep.mubr.bf16.mxu0 0
        %1443 = vmatmul.mubr.bf16.gmra.mrb[0].mxu0 %v907
        %v1444 = vpop.f32.mrb[0].mxu0
        %v1445 = vadd.f32 %v988, %v1444
        %v1446 = vpop.f32.mrb[0].mxu0
        %v1447 = vadd.f32 %v992, %v1446
        %v1448 = vpop.f32.mrb[0].mxu0
        %v1449 = vadd.f32 %v988, %v1448
        %v1450 = vpop.f32.mrb[0].mxu0
        %v1451 = vadd.f32 %v992, %v1450
        %1452 = vmatprep.mubr.bf16.mxu0 0
        %1453 = vmatmul.mubr.bf16.gmra.mrb[0].mxu0 %v908
        %v1454 = vpop.f32.mrb[0].mxu0
        %v1455 = vadd.f32 %v988, %v1454
        %v1456 = vpop.f32.mrb[0].mxu0
        %v1457 = vadd.f32 %v992, %v1456
        %v1458 = vpop.f32.mrb[0].mxu0
        %v1459 = vadd.f32 %v988, %v1458
        %v1460 = vpop.f32.mrb[0].mxu0
        %v1461 = vadd.f32 %v992, %v1460
        %1462 = vmatprep.mubr.bf16.mxu0 0
        %1463 = vmatmul.mubr.bf16.gmra.mrb[0].mxu0 %v909
        %v1464 = vpop.f32.mrb[0].mxu0
        %v1465 = vadd.f32 %v988, %v1464
        %v1466 = vpop.f32.mrb[0].mxu0
        %v1467 = vadd.f32 %v992, %v1466
        %v1468 = vpop.f32.mrb[0].mxu0
        %v1469 = vadd.f32 %v988, %v1468
        %v1470 = vpop.f32.mrb[0].mxu0
        %v1471 = vadd.f32 %v992, %v1470
        %1472 = vmatprep.mubr.bf16.mxu0 0
        %1473 = vmatmul.mubr.bf16.gmra.mrb[0].mxu0 %v910
        %v1474 = vpop.f32.mrb[0].mxu0
        %v1475 = vadd.f32 %v988, %v1474
        %v1476 = vpop.f32.mrb[0].mxu0
        %v1477 = vadd.f32 %v992, %v1476
        %v1478 = vpop.f32.mrb[0].mxu0
        %v1479 = vadd.f32 %v988, %v1478
        %v1480 = vpop.f32.mrb[0].mxu0
        %v1481 = vadd.f32 %v992, %v1480
        %1482 = vdwg.mxu0
        %1483 = vmatprep.subr.bf16.mxu0 %v1214
        %1484 = vmatpush1.bf16.msra.mxu0 %v1213
        %1485 = vmatprep.subr.bf16.mxu0 %v1222
        %1486 = vmatpush1.bf16.msra.mxu0 %v1221
        %1487 = vmatprep.subr.bf16.mxu0 %v1230
        %1488 = vmatpush1.bf16.msra.mxu0 %v1229
        %1489 = vmatprep.subr.bf16.mxu0 %v1238
        %1490 = vmatpush1.bf16.msra.mxu0 %v1237
        %1491 = vmatprep.subr.bf16.mxu0 %v1246
        %1492 = vmatpush1.bf16.msra.mxu0 %v1245
        %1493 = vmatprep.subr.bf16.mxu0 %v1254
        %1494 = vmatpush1.bf16.msra.mxu0 %v1253
        %1495 = vmatprep.subr.bf16.mxu0 %v1262
        %1496 = vmatpush1.bf16.msra.mxu0 %v1261
        %1497 = vmatprep.subr.bf16.mxu0 %v1270
        %1498 = vmatpush1.bf16.msra.mxu0 %v1269
        %1499 = vmatprep.subr.bf16.mxu0 0
        %1500 = vmatpush1.bf16.msra.mxu0 0
        %1501 = vmatprep.subr.bf16.mxu0 0
        %1502 = vmatpush1.bf16.msra.mxu0 0
        %1503 = vmatprep.subr.bf16.mxu0 0
        %1504 = vmatpush1.bf16.msra.mxu0 0
        %1505 = vmatprep.subr.bf16.mxu0 0
        %1506 = vmatpush1.bf16.msra.mxu0 0
        %1507 = vmatprep.subr.bf16.mxu0 0
        %1508 = vmatpush1.bf16.msra.mxu0 0
        %1509 = vmatprep.subr.bf16.mxu0 0
        %1510 = vmatpush1.bf16.msra.mxu0 0
        %1511 = vmatprep.subr.bf16.mxu0 0
        %1512 = vmatpush1.bf16.msra.mxu0 0
        %1513 = vmatprep.subr.bf16.mxu0 0
        %1514 = vmatpush1.bf16.msra.mxu0 0
        %1515 = vmatprep.mubr.bf16.mxu0 0
        %1516 = vmatmul.mubr.bf16.gmra.mrb[0].mxu0 %v907
        %v1517 = vpop.f32.mrb[0].mxu0
        %v1518 = vadd.f32 %v996, %v1517
        %v1519 = vpop.f32.mrb[0].mxu0
        %v1520 = vadd.f32 %v1000, %v1519
        %v1521 = vpop.f32.mrb[0].mxu0
        %v1522 = vadd.f32 %v996, %v1521
        %v1523 = vpop.f32.mrb[0].mxu0
        %v1524 = vadd.f32 %v1000, %v1523
        %1525 = vmatprep.mubr.bf16.mxu0 0
        %1526 = vmatmul.mubr.bf16.gmra.mrb[0].mxu0 %v908
        %v1527 = vpop.f32.mrb[0].mxu0
        %v1528 = vadd.f32 %v996, %v1527
        %v1529 = vpop.f32.mrb[0].mxu0
        %v1530 = vadd.f32 %v1000, %v1529
        %v1531 = vpop.f32.mrb[0].mxu0
        %v1532 = vadd.f32 %v996, %v1531
        %v1533 = vpop.f32.mrb[0].mxu0
        %v1534 = vadd.f32 %v1000, %v1533
        %1535 = vmatprep.mubr.bf16.mxu0 0
        %1536 = vmatmul.mubr.bf16.gmra.mrb[0].mxu0 %v909
        %v1537 = vpop.f32.mrb[0].mxu0
        %v1538 = vadd.f32 %v996, %v1537
        %v1539 = vpop.f32.mrb[0].mxu0
        %v1540 = vadd.f32 %v1000, %v1539
        %v1541 = vpop.f32.mrb[0].mxu0
        %v1542 = vadd.f32 %v996, %v1541
        %v1543 = vpop.f32.mrb[0].mxu0
        %v1544 = vadd.f32 %v1000, %v1543
        %1545 = vmatprep.mubr.bf16.mxu0 0
        %1546 = vmatmul.mubr.bf16.gmra.mrb[0].mxu0 %v910
        %v1547 = vpop.f32.mrb[0].mxu0
        %v1548 = vadd.f32 %v996, %v1547
        %v1549 = vpop.f32.mrb[0].mxu0
        %v1550 = vadd.f32 %v1000, %v1549
        %v1551 = vpop.f32.mrb[0].mxu0
        %v1552 = vadd.f32 %v996, %v1551
        %v1553 = vpop.f32.mrb[0].mxu0
        %v1554 = vadd.f32 %v1000, %v1553
        %1555 = vdwg.mxu0
        %1556 = vmatprep.subr.bf16.mxu0 %v1216
        %1557 = vmatpush1.bf16.msra.mxu0 %v1215
        %1558 = vmatprep.subr.bf16.mxu0 %v1224
        %1559 = vmatpush1.bf16.msra.mxu0 %v1223
        %1560 = vmatprep.subr.bf16.mxu0 %v1232
        %1561 = vmatpush1.bf16.msra.mxu0 %v1231
        %1562 = vmatprep.subr.bf16.mxu0 %v1240
        %1563 = vmatpush1.bf16.msra.mxu0 %v1239
        %1564 = vmatprep.subr.bf16.mxu0 %v1248
        %1565 = vmatpush1.bf16.msra.mxu0 %v1247
        %1566 = vmatprep.subr.bf16.mxu0 %v1256
        %1567 = vmatpush1.bf16.msra.mxu0 %v1255
        %1568 = vmatprep.subr.bf16.mxu0 %v1264
        %1569 = vmatpush1.bf16.msra.mxu0 %v1263
        %1570 = vmatprep.subr.bf16.mxu0 %v1272
        %1571 = vmatpush1.bf16.msra.mxu0 %v1271
        %1572 = vmatprep.subr.bf16.mxu0 0
        %1573 = vmatpush1.bf16.msra.mxu0 0
        %1574 = vmatprep.subr.bf16.mxu0 0
        %1575 = vmatpush1.bf16.msra.mxu0 0
        %1576 = vmatprep.subr.bf16.mxu0 0
        %1577 = vmatpush1.bf16.msra.mxu0 0
        %1578 = vmatprep.subr.bf16.mxu0 0
        %1579 = vmatpush1.bf16.msra.mxu0 0
        %1580 = vmatprep.subr.bf16.mxu0 0
        %1581 = vmatpush1.bf16.msra.mxu0 0
        %1582 = vmatprep.subr.bf16.mxu0 0
        %1583 = vmatpush1.bf16.msra.mxu0 0
        %1584 = vmatprep.subr.bf16.mxu0 0
        %1585 = vmatpush1.bf16.msra.mxu0 0
        %1586 = vmatprep.subr.bf16.mxu0 0
        %1587 = vmatpush1.bf16.msra.mxu0 0
        %1588 = vmatprep.mubr.bf16.mxu0 0
        %1589 = vmatmul.mubr.bf16.gmra.mrb[0].mxu0 %v907
        %v1590 = vpop.f32.mrb[0].mxu0
        %v1591 = vadd.f32 %v1004, %v1590
        %v1592 = vpop.f32.mrb[0].mxu0
        %v1593 = vadd.f32 %v1008, %v1592
        %v1594 = vpop.f32.mrb[0].mxu0
        %v1595 = vadd.f32 %v1004, %v1594
        %v1596 = vpop.f32.mrb[0].mxu0
        %v1597 = vadd.f32 %v1008, %v1596
        %1598 = vmatprep.mubr.bf16.mxu0 0
        %1599 = vmatmul.mubr.bf16.gmra.mrb[0].mxu0 %v908
        %v1600 = vpop.f32.mrb[0].mxu0
        %v1601 = vadd.f32 %v1004, %v1600
        %v1602 = vpop.f32.mrb[0].mxu0
        %v1603 = vadd.f32 %v1008, %v1602
        %v1604 = vpop.f32.mrb[0].mxu0
        %v1605 = vadd.f32 %v1004, %v1604
        %v1606 = vpop.f32.mrb[0].mxu0
        %v1607 = vadd.f32 %v1008, %v1606
        %1608 = vmatprep.mubr.bf16.mxu0 0
        %1609 = vmatmul.mubr.bf16.gmra.mrb[0].mxu0 %v909
        %v1610 = vpop.f32.mrb[0].mxu0
        %v1611 = vadd.f32 %v1004, %v1610
        %v1612 = vpop.f32.mrb[0].mxu0
        %v1613 = vadd.f32 %v1008, %v1612
        %v1614 = vpop.f32.mrb[0].mxu0
        %v1615 = vadd.f32 %v1004, %v1614
        %v1616 = vpop.f32.mrb[0].mxu0
        %v1617 = vadd.f32 %v1008, %v1616
        %1618 = vmatprep.mubr.bf16.mxu0 0
        %1619 = vmatmul.mubr.bf16.gmra.mrb[0].mxu0 %v910
        %v1620 = vpop.f32.mrb[0].mxu0
        %v1621 = vadd.f32 %v1004, %v1620
        %v1622 = vpop.f32.mrb[0].mxu0
        %v1623 = vadd.f32 %v1008, %v1622
        %v1624 = vpop.f32.mrb[0].mxu0
        %v1625 = vadd.f32 %v1004, %v1624
        %v1626 = vpop.f32.mrb[0].mxu0
        %v1627 = vadd.f32 %v1008, %v1626
        %1628 = vdwg.mxu0
        %v1629 = vmax.f32 %v1372, 0.0
        %v1630 = vmax.f32 %v1374, 0.0
        %v1631 = vmax.f32 %v1445, 0.0
        %v1632 = vmax.f32 %v1447, 0.0
        %v1633 = vmax.f32 %v1518, 0.0
        %v1634 = vmax.f32 %v1520, 0.0
        %v1635 = vmax.f32 %v1591, 0.0
        %v1636 = vmax.f32 %v1593, 0.0
        %v1637 = vmax.f32 %v1376, 0.0
        %v1638 = vmax.f32 %v1378, 0.0
        %v1639 = vmax.f32 %v1449, 0.0
        %v1640 = vmax.f32 %v1451, 0.0
        %v1641 = vmax.f32 %v1522, 0.0
        %v1642 = vmax.f32 %v1524, 0.0
        %v1643 = vmax.f32 %v1595, 0.0
        %v1644 = vmax.f32 %v1597, 0.0
        %v1645 = vmax.f32 %v1382, 0.0
        %v1646 = vmax.f32 %v1384, 0.0
        %v1647 = vmax.f32 %v1455, 0.0
        %v1648 = vmax.f32 %v1457, 0.0
        %v1649 = vmax.f32 %v1528, 0.0
        %v1650 = vmax.f32 %v1530, 0.0
        %v1651 = vmax.f32 %v1601, 0.0
        %v1652 = vmax.f32 %v1603, 0.0
        %v1653 = vmax.f32 %v1386, 0.0
        %v1654 = vmax.f32 %v1388, 0.0
        %v1655 = vmax.f32 %v1459, 0.0
        %v1656 = vmax.f32 %v1461, 0.0
        %v1657 = vmax.f32 %v1532, 0.0
        %v1658 = vmax.f32 %v1534, 0.0
        %v1659 = vmax.f32 %v1605, 0.0
        %v1660 = vmax.f32 %v1607, 0.0
        %v1661 = vmax.f32 %v1392, 0.0
        %v1662 = vmax.f32 %v1394, 0.0
        %v1663 = vmax.f32 %v1465, 0.0
        %v1664 = vmax.f32 %v1467, 0.0
        %v1665 = vmax.f32 %v1538, 0.0
        %v1666 = vmax.f32 %v1540, 0.0
        %v1667 = vmax.f32 %v1611, 0.0
        %v1668 = vmax.f32 %v1613, 0.0
        %v1669 = vmax.f32 %v1396, 0.0
        %v1670 = vmax.f32 %v1398, 0.0
        %v1671 = vmax.f32 %v1469, 0.0
        %v1672 = vmax.f32 %v1471, 0.0
        %v1673 = vmax.f32 %v1542, 0.0
        %v1674 = vmax.f32 %v1544, 0.0
        %v1675 = vmax.f32 %v1615, 0.0
        %v1676 = vmax.f32 %v1617, 0.0
        %v1677 = vmax.f32 %v1402, 0.0
        %v1678 = vmax.f32 %v1404, 0.0
        %v1679 = vmax.f32 %v1475, 0.0
        %v1680 = vmax.f32 %v1477, 0.0
        %v1681 = vmax.f32 %v1548, 0.0
        %v1682 = vmax.f32 %v1550, 0.0
        %v1683 = vmax.f32 %v1621, 0.0
        %v1684 = vmax.f32 %v1623, 0.0
        %v1685 = vmax.f32 %v1406, 0.0
        %v1686 = vmax.f32 %v1408, 0.0
        %v1687 = vmax.f32 %v1479, 0.0
        %v1688 = vmax.f32 %v1481, 0.0
        %v1689 = vmax.f32 %v1552, 0.0
        %v1690 = vmax.f32 %v1554, 0.0
        %v1691 = vmax.f32 %v1625, 0.0
        %v1692 = vmax.f32 %v1627, 0.0
        %v1693 = vpack.c.bf16 %v1637, %v1629
        %v1694 = vpack.c.bf16 %v1638, %v1630
        %v1695 = vpack.c.bf16 %v1639, %v1631
        %v1696 = vpack.c.bf16 %v1640, %v1632
        %v1697 = vpack.c.bf16 %v1641, %v1633
        %v1698 = vpack.c.bf16 %v1642, %v1634
        %v1699 = vpack.c.bf16 %v1643, %v1635
        %v1700 = vpack.c.bf16 %v1644, %v1636
        %v1701 = vpack.c.bf16 %v1653, %v1645
        %v1702 = vpack.c.bf16 %v1654, %v1646
        %v1703 = vpack.c.bf16 %v1655, %v1647
        %v1704 = vpack.c.bf16 %v1656, %v1648
        %v1705 = vpack.c.bf16 %v1657, %v1649
        %v1706 = vpack.c.bf16 %v1658, %v1650
        %v1707 = vpack.c.bf16 %v1659, %v1651
        %v1708 = vpack.c.bf16 %v1660, %v1652
        %v1709 = vpack.c.bf16 %v1669, %v1661
        %v1710 = vpack.c.bf16 %v1670, %v1662
        %v1711 = vpack.c.bf16 %v1671, %v1663
        %v1712 = vpack.c.bf16 %v1672, %v1664
        %v1713 = vpack.c.bf16 %v1673, %v1665
        %v1714 = vpack.c.bf16 %v1674, %v1666
        %v1715 = vpack.c.bf16 %v1675, %v1667
        %v1716 = vpack.c.bf16 %v1676, %v1668
        %v1717 = vpack.c.bf16 %v1685, %v1677
        %v1718 = vpack.c.bf16 %v1686, %v1678
        %v1719 = vpack.c.bf16 %v1687, %v1679
        %v1720 = vpack.c.bf16 %v1688, %v1680
        %v1721 = vpack.c.bf16 %v1689, %v1681
        %v1722 = vpack.c.bf16 %v1690, %v1682
        %v1723 = vpack.c.bf16 %v1691, %v1683
        %v1724 = vpack.c.bf16 %v1692, %v1684
        %v1757 = vunpack.c.l.b16 %v1693
        %v1758 = vunpack.c.l.b16 %v1694
        %v1759 = vunpack.c.l.b16 %v1695
        %v1760 = vunpack.c.l.b16 %v1696
        %v1761 = vunpack.c.l.b16 %v1697
        %v1762 = vunpack.c.l.b16 %v1698
        %v1763 = vunpack.c.l.b16 %v1699
        %v1764 = vunpack.c.l.b16 %v1700
        %v1765 = vunpack.c.h.b16 %v1693
        %v1766 = vunpack.c.h.b16 %v1694
        %v1767 = vunpack.c.h.b16 %v1695
        %v1768 = vunpack.c.h.b16 %v1696
        %v1769 = vunpack.c.h.b16 %v1697
        %v1770 = vunpack.c.h.b16 %v1698
        %v1771 = vunpack.c.h.b16 %v1699
        %v1772 = vunpack.c.h.b16 %v1700
        %v1773 = vunpack.c.l.b16 %v1701
        %v1774 = vunpack.c.l.b16 %v1702
        %v1775 = vunpack.c.l.b16 %v1703
        %v1776 = vunpack.c.l.b16 %v1704
        %v1777 = vunpack.c.l.b16 %v1705
        %v1778 = vunpack.c.l.b16 %v1706
        %v1779 = vunpack.c.l.b16 %v1707
        %v1780 = vunpack.c.l.b16 %v1708
        %v1781 = vunpack.c.h.b16 %v1701
        %v1782 = vunpack.c.h.b16 %v1702
        %v1783 = vunpack.c.h.b16 %v1703
        %v1784 = vunpack.c.h.b16 %v1704
        %v1785 = vunpack.c.h.b16 %v1705
        %v1786 = vunpack.c.h.b16 %v1706
        %v1787 = vunpack.c.h.b16 %v1707
        %v1788 = vunpack.c.h.b16 %v1708
        %v1789 = vunpack.c.l.b16 %v1709
        %v1790 = vunpack.c.l.b16 %v1710
        %v1791 = vunpack.c.l.b16 %v1711
        %v1792 = vunpack.c.l.b16 %v1712
        %v1793 = vunpack.c.l.b16 %v1713
        %v1794 = vunpack.c.l.b16 %v1714
        %v1795 = vunpack.c.l.b16 %v1715
        %v1796 = vunpack.c.l.b16 %v1716
        %v1797 = vunpack.c.h.b16 %v1709
        %v1798 = vunpack.c.h.b16 %v1710
        %v1799 = vunpack.c.h.b16 %v1711
        %v1800 = vunpack.c.h.b16 %v1712
        %v1801 = vunpack.c.h.b16 %v1713
        %v1802 = vunpack.c.h.b16 %v1714
        %v1803 = vunpack.c.h.b16 %v1715
        %v1804 = vunpack.c.h.b16 %v1716
        %v1805 = vunpack.c.l.b16 %v1717
        %v1806 = vunpack.c.l.b16 %v1718
        %v1807 = vunpack.c.l.b16 %v1719
        %v1808 = vunpack.c.l.b16 %v1720
        %v1809 = vunpack.c.l.b16 %v1721
        %v1810 = vunpack.c.l.b16 %v1722
        %v1811 = vunpack.c.l.b16 %v1723
        %v1812 = vunpack.c.l.b16 %v1724
        %v1813 = vunpack.c.h.b16 %v1717
        %v1814 = vunpack.c.h.b16 %v1718
        %v1815 = vunpack.c.h.b16 %v1719
        %v1816 = vunpack.c.h.b16 %v1720
        %v1817 = vunpack.c.h.b16 %v1721
        %v1818 = vunpack.c.h.b16 %v1722
        %v1819 = vunpack.c.h.b16 %v1723
        %v1820 = vunpack.c.h.b16 %v1724
        %v1821 = vpack.c.b16 %v1758, %v1757
        %v1822 = vpack.c.b16 %v1760, %v1759
        %v1823 = vpack.c.b16 %v1762, %v1761
        %v1824 = vpack.c.b16 %v1764, %v1763
        %v1825 = vpack.c.b16 %v1766, %v1765
        %v1826 = vpack.c.b16 %v1768, %v1767
        %v1827 = vpack.c.b16 %v1770, %v1769
        %v1828 = vpack.c.b16 %v1772, %v1771
        %v1829 = vpack.c.b16 %v1774, %v1773
        %v1830 = vpack.c.b16 %v1776, %v1775
        %v1831 = vpack.c.b16 %v1778, %v1777
        %v1832 = vpack.c.b16 %v1780, %v1779
        %v1833 = vpack.c.b16 %v1782, %v1781
        %v1834 = vpack.c.b16 %v1784, %v1783
        %v1835 = vpack.c.b16 %v1786, %v1785
        %v1836 = vpack.c.b16 %v1788, %v1787
        %v1837 = vpack.c.b16 %v1790, %v1789
        %v1838 = vpack.c.b16 %v1792, %v1791
        %v1839 = vpack.c.b16 %v1794, %v1793
        %v1840 = vpack.c.b16 %v1796, %v1795
        %v1841 = vpack.c.b16 %v1798, %v1797
        %v1842 = vpack.c.b16 %v1800, %v1799
        %v1843 = vpack.c.b16 %v1802, %v1801
        %v1844 = vpack.c.b16 %v1804, %v1803
        %v1845 = vpack.c.b16 %v1806, %v1805
        %v1846 = vpack.c.b16 %v1808, %v1807
        %v1847 = vpack.c.b16 %v1810, %v1809
        %v1848 = vpack.c.b16 %v1812, %v1811
        %v1849 = vpack.c.b16 %v1814, %v1813
        %v1850 = vpack.c.b16 %v1816, %v1815
        %v1851 = vpack.c.b16 %v1818, %v1817
        %v1852 = vpack.c.b16 %v1820, %v1819
        %s1885 = smul.u32 %s37, 8
        %v1886 = vlaneseq
        %v1887 = vshrl.u32 %v1886, 7
        %v1888 = vstv %s1885
        %v1889 = vadd.s32 %v1888, %v1887
        %vm1890 = vcmp.lt.s32.totalorder %v1889, 20
        %v1891 = vsel %vm1890, 1, 0
        %vm1892 = vcmp.eq.s32.totalorder %v1891, 1
        %vm1893 = vmpackc.low %vm1892, %vm1892
        %v1894 = vsel %vm1893, %v1821, 0
        %v1895 = vsel %vm1893, %v1822, 0
        %v1896 = vsel %vm1893, %v1823, 0
        %v1897 = vsel %vm1893, %v1824, 0
        %v1898 = vsel %vm1893, %v1825, 0
        %v1899 = vsel %vm1893, %v1826, 0
        %v1900 = vsel %vm1893, %v1827, 0
        %v1901 = vsel %vm1893, %v1828, 0
        %v1902 = vsel %vm1893, %v1829, 0
        %v1903 = vsel %vm1893, %v1830, 0
        %v1904 = vsel %vm1893, %v1831, 0
        %v1905 = vsel %vm1893, %v1832, 0
        %v1906 = vsel %vm1893, %v1833, 0
        %v1907 = vsel %vm1893, %v1834, 0
        %v1908 = vsel %vm1893, %v1835, 0
        %v1909 = vsel %vm1893, %v1836, 0
        %v1910 = vsel %vm1893, %v1837, 0
        %v1911 = vsel %vm1893, %v1838, 0
        %v1912 = vsel %vm1893, %v1839, 0
        %v1913 = vsel %vm1893, %v1840, 0
        %v1914 = vsel %vm1893, %v1841, 0
        %v1915 = vsel %vm1893, %v1842, 0
        %v1916 = vsel %vm1893, %v1843, 0
        %v1917 = vsel %vm1893, %v1844, 0
        %v1918 = vsel %vm1893, %v1845, 0
        %v1919 = vsel %vm1893, %v1846, 0
        %v1920 = vsel %vm1893, %v1847, 0
        %v1921 = vsel %vm1893, %v1848, 0
        %v1922 = vsel %vm1893, %v1849, 0
        %v1923 = vsel %vm1893, %v1850, 0
        %v1924 = vsel %vm1893, %v1851, 0
        %v1925 = vsel %vm1893, %v1852, 0
        %v1958 = vunpack.c.l.b16 %v1894
        %v1959 = vunpack.c.h.b16 %v1894
        %v1960 = vunpack.c.l.b16 %v1895
        %v1961 = vunpack.c.h.b16 %v1895
        %v1962 = vunpack.c.l.b16 %v1896
        %v1963 = vunpack.c.h.b16 %v1896
        %v1964 = vunpack.c.l.b16 %v1897
        %v1965 = vunpack.c.h.b16 %v1897
        %v1966 = vunpack.c.l.b16 %v1898
        %v1967 = vunpack.c.h.b16 %v1898
        %v1968 = vunpack.c.l.b16 %v1899
        %v1969 = vunpack.c.h.b16 %v1899
        %v1970 = vunpack.c.l.b16 %v1900
        %v1971 = vunpack.c.h.b16 %v1900
        %v1972 = vunpack.c.l.b16 %v1901
        %v1973 = vunpack.c.h.b16 %v1901
        %v1974 = vunpack.c.l.b16 %v1902
        %v1975 = vunpack.c.h.b16 %v1902
        %v1976 = vunpack.c.l.b16 %v1903
        %v1977 = vunpack.c.h.b16 %v1903
        %v1978 = vunpack.c.l.b16 %v1904
        %v1979 = vunpack.c.h.b16 %v1904
        %v1980 = vunpack.c.l.b16 %v1905
        %v1981 = vunpack.c.h.b16 %v1905
        %v1982 = vunpack.c.l.b16 %v1906
        %v1983 = vunpack.c.h.b16 %v1906
        %v1984 = vunpack.c.l.b16 %v1907
        %v1985 = vunpack.c.h.b16 %v1907
        %v1986 = vunpack.c.l.b16 %v1908
        %v1987 = vunpack.c.h.b16 %v1908
        %v1988 = vunpack.c.l.b16 %v1909
        %v1989 = vunpack.c.h.b16 %v1909
        %v1990 = vunpack.c.l.b16 %v1910
        %v1991 = vunpack.c.h.b16 %v1910
        %v1992 = vunpack.c.l.b16 %v1911
        %v1993 = vunpack.c.h.b16 %v1911
        %v1994 = vunpack.c.l.b16 %v1912
        %v1995 = vunpack.c.h.b16 %v1912
        %v1996 = vunpack.c.l.b16 %v1913
        %v1997 = vunpack.c.h.b16 %v1913
        %v1998 = vunpack.c.l.b16 %v1914
        %v1999 = vunpack.c.h.b16 %v1914
        %v2000 = vunpack.c.l.b16 %v1915
        %v2001 = vunpack.c.h.b16 %v1915
        %v2002 = vunpack.c.l.b16 %v1916
        %v2003 = vunpack.c.h.b16 %v1916
        %v2004 = vunpack.c.l.b16 %v1917
        %v2005 = vunpack.c.h.b16 %v1917
        %v2006 = vunpack.c.l.b16 %v1918
        %v2007 = vunpack.c.h.b16 %v1918
        %v2008 = vunpack.c.l.b16 %v1919
        %v2009 = vunpack.c.h.b16 %v1919
        %v2010 = vunpack.c.l.b16 %v1920
        %v2011 = vunpack.c.h.b16 %v1920
        %v2012 = vunpack.c.l.b16 %v1921
        %v2013 = vunpack.c.h.b16 %v1921
        %v2014 = vunpack.c.l.b16 %v1922
        %v2015 = vunpack.c.h.b16 %v1922
        %v2016 = vunpack.c.l.b16 %v1923
        %v2017 = vunpack.c.h.b16 %v1923
        %v2018 = vunpack.c.l.b16 %v1924
        %v2019 = vunpack.c.h.b16 %v1924
        %v2020 = vunpack.c.l.b16 %v1925
        %v2021 = vunpack.c.h.b16 %v1925
        %v2022 = vpack.c.b16 %v1958, %v1958
        %v2023 = vpack.c.b16 %v1959, %v1959
        %v2024 = vpack.c.b16 %v1960, %v1960
        %v2025 = vpack.c.b16 %v1961, %v1961
        %v2026 = vpack.c.b16 %v1962, %v1962
        %v2027 = vpack.c.b16 %v1963, %v1963
        %v2028 = vpack.c.b16 %v1964, %v1964
        %v2029 = vpack.c.b16 %v1965, %v1965
        %v2030 = vpack.c.b16 %v1966, %v1966
        %v2031 = vpack.c.b16 %v1967, %v1967
        %v2032 = vpack.c.b16 %v1968, %v1968
        %v2033 = vpack.c.b16 %v1969, %v1969
        %v2034 = vpack.c.b16 %v1970, %v1970
        %v2035 = vpack.c.b16 %v1971, %v1971
        %v2036 = vpack.c.b16 %v1972, %v1972
        %v2037 = vpack.c.b16 %v1973, %v1973
        %v2038 = vpack.c.b16 %v1974, %v1974
        %v2039 = vpack.c.b16 %v1975, %v1975
        %v2040 = vpack.c.b16 %v1976, %v1976
        %v2041 = vpack.c.b16 %v1977, %v1977
        %v2042 = vpack.c.b16 %v1978, %v1978
        %v2043 = vpack.c.b16 %v1979, %v1979
        %v2044 = vpack.c.b16 %v1980, %v1980
        %v2045 = vpack.c.b16 %v1981, %v1981
        %v2046 = vpack.c.b16 %v1982, %v1982
        %v2047 = vpack.c.b16 %v1983, %v1983
        %v2048 = vpack.c.b16 %v1984, %v1984
        %v2049 = vpack.c.b16 %v1985, %v1985
        %v2050 = vpack.c.b16 %v1986, %v1986
        %v2051 = vpack.c.b16 %v1987, %v1987
        %v2052 = vpack.c.b16 %v1988, %v1988
        %v2053 = vpack.c.b16 %v1989, %v1989
        %v2054 = vpack.c.b16 %v1990, %v1990
        %v2055 = vpack.c.b16 %v1991, %v1991
        %v2056 = vpack.c.b16 %v1992, %v1992
        %v2057 = vpack.c.b16 %v1993, %v1993
        %v2058 = vpack.c.b16 %v1994, %v1994
        %v2059 = vpack.c.b16 %v1995, %v1995
        %v2060 = vpack.c.b16 %v1996, %v1996
        %v2061 = vpack.c.b16 %v1997, %v1997
        %v2062 = vpack.c.b16 %v1998, %v1998
        %v2063 = vpack.c.b16 %v1999, %v1999
        %v2064 = vpack.c.b16 %v2000, %v2000
        %v2065 = vpack.c.b16 %v2001, %v2001
        %v2066 = vpack.c.b16 %v2002, %v2002
        %v2067 = vpack.c.b16 %v2003, %v2003
        %v2068 = vpack.c.b16 %v2004, %v2004
        %v2069 = vpack.c.b16 %v2005, %v2005
        %v2070 = vpack.c.b16 %v2006, %v2006
        %v2071 = vpack.c.b16 %v2007, %v2007
        %v2072 = vpack.c.b16 %v2008, %v2008
        %v2073 = vpack.c.b16 %v2009, %v2009
        %v2074 = vpack.c.b16 %v2010, %v2010
        %v2075 = vpack.c.b16 %v2011, %v2011
        %v2076 = vpack.c.b16 %v2012, %v2012
        %v2077 = vpack.c.b16 %v2013, %v2013
        %v2078 = vpack.c.b16 %v2014, %v2014
        %v2079 = vpack.c.b16 %v2015, %v2015
        %v2080 = vpack.c.b16 %v2016, %v2016
        %v2081 = vpack.c.b16 %v2017, %v2017
        %v2082 = vpack.c.b16 %v2018, %v2018
        %v2083 = vpack.c.b16 %v2019, %v2019
        %v2084 = vpack.c.b16 %v2020, %v2020
        %v2085 = vpack.c.b16 %v2021, %v2021
        %vm2086 = vcmask 1043456
        %v2089 = vsel %vm2086, %v2022, 4286644096
        %v2091 = vunpack.i.l.bf16 %v2089
        %v2092 = vunpack.i.h.bf16 %v2089
        %v2093 = vmax.f32 %v2091, %v2092
        %v2094 = vrot.slane %v2093, 4
        %v2095 = vmax.f32 %v2093, %v2094
        %v2096 = vrot.slane %v2095, 2
        %v2097 = vmax.f32 %v2095, %v2096
        %v2098 = vrot.slane %v2097, 1
        %v2099 = vmax.f32 %v2097, %v2098
        %v2100 = vpack.i.bf16 %v2099, %v2099
        %v2102 = vsel %vm2086, %v2023, 4286644096
        %v2104 = vunpack.i.l.bf16 %v2102
        %v2105 = vunpack.i.h.bf16 %v2102
        %v2106 = vmax.f32 %v2104, %v2105
        %v2107 = vrot.slane %v2106, 4
        %v2108 = vmax.f32 %v2106, %v2107
        %v2109 = vrot.slane %v2108, 2
        %v2110 = vmax.f32 %v2108, %v2109
        %v2111 = vrot.slane %v2110, 1
        %v2112 = vmax.f32 %v2110, %v2111
        %v2113 = vpack.i.bf16 %v2112, %v2112
        %v2115 = vsel %vm2086, %v2024, 4286644096
        %v2117 = vunpack.i.l.bf16 %v2115
        %v2118 = vunpack.i.h.bf16 %v2115
        %v2119 = vmax.f32 %v2117, %v2118
        %v2120 = vrot.slane %v2119, 4
        %v2121 = vmax.f32 %v2119, %v2120
        %v2122 = vrot.slane %v2121, 2
        %v2123 = vmax.f32 %v2121, %v2122
        %v2124 = vrot.slane %v2123, 1
        %v2125 = vmax.f32 %v2123, %v2124
        %v2126 = vpack.i.bf16 %v2125, %v2125
        %v2128 = vsel %vm2086, %v2025, 4286644096
        %v2130 = vunpack.i.l.bf16 %v2128
        %v2131 = vunpack.i.h.bf16 %v2128
        %v2132 = vmax.f32 %v2130, %v2131
        %v2133 = vrot.slane %v2132, 4
        %v2134 = vmax.f32 %v2132, %v2133
        %v2135 = vrot.slane %v2134, 2
        %v2136 = vmax.f32 %v2134, %v2135
        %v2137 = vrot.slane %v2136, 1
        %v2138 = vmax.f32 %v2136, %v2137
        %v2139 = vpack.i.bf16 %v2138, %v2138
        %v2141 = vsel %vm2086, %v2026, 4286644096
        %v2143 = vunpack.i.l.bf16 %v2141
        %v2144 = vunpack.i.h.bf16 %v2141
        %v2145 = vmax.f32 %v2143, %v2144
        %v2146 = vrot.slane %v2145, 4
        %v2147 = vmax.f32 %v2145, %v2146
        %v2148 = vrot.slane %v2147, 2
        %v2149 = vmax.f32 %v2147, %v2148
        %v2150 = vrot.slane %v2149, 1
        %v2151 = vmax.f32 %v2149, %v2150
        %v2152 = vpack.i.bf16 %v2151, %v2151
        %v2154 = vsel %vm2086, %v2027, 4286644096
        %v2156 = vunpack.i.l.bf16 %v2154
        %v2157 = vunpack.i.h.bf16 %v2154
        %v2158 = vmax.f32 %v2156, %v2157
        %v2159 = vrot.slane %v2158, 4
        %v2160 = vmax.f32 %v2158, %v2159
        %v2161 = vrot.slane %v2160, 2
        %v2162 = vmax.f32 %v2160, %v2161
        %v2163 = vrot.slane %v2162, 1
        %v2164 = vmax.f32 %v2162, %v2163
        %v2165 = vpack.i.bf16 %v2164, %v2164
        %v2167 = vsel %vm2086, %v2028, 4286644096
        %v2169 = vunpack.i.l.bf16 %v2167
        %v2170 = vunpack.i.h.bf16 %v2167
        %v2171 = vmax.f32 %v2169, %v2170
        %v2172 = vrot.slane %v2171, 4
        %v2173 = vmax.f32 %v2171, %v2172
        %v2174 = vrot.slane %v2173, 2
        %v2175 = vmax.f32 %v2173, %v2174
        %v2176 = vrot.slane %v2175, 1
        %v2177 = vmax.f32 %v2175, %v2176
        %v2178 = vpack.i.bf16 %v2177, %v2177
        %v2180 = vsel %vm2086, %v2029, 4286644096
        %v2182 = vunpack.i.l.bf16 %v2180
        %v2183 = vunpack.i.h.bf16 %v2180
        %v2184 = vmax.f32 %v2182, %v2183
        %v2185 = vrot.slane %v2184, 4
        %v2186 = vmax.f32 %v2184, %v2185
        %v2187 = vrot.slane %v2186, 2
        %v2188 = vmax.f32 %v2186, %v2187
        %v2189 = vrot.slane %v2188, 1
        %v2190 = vmax.f32 %v2188, %v2189
        %v2191 = vpack.i.bf16 %v2190, %v2190
        %v2193 = vsel %vm2086, %v2030, 4286644096
        %v2195 = vunpack.i.l.bf16 %v2193
        %v2196 = vunpack.i.h.bf16 %v2193
        %v2197 = vmax.f32 %v2195, %v2196
        %v2198 = vrot.slane %v2197, 4
        %v2199 = vmax.f32 %v2197, %v2198
        %v2200 = vrot.slane %v2199, 2
        %v2201 = vmax.f32 %v2199, %v2200
        %v2202 = vrot.slane %v2201, 1
        %v2203 = vmax.f32 %v2201, %v2202
        %v2204 = vpack.i.bf16 %v2203, %v2203
        %v2206 = vsel %vm2086, %v2031, 4286644096
        %v2208 = vunpack.i.l.bf16 %v2206
        %v2209 = vunpack.i.h.bf16 %v2206
        %v2210 = vmax.f32 %v2208, %v2209
        %v2211 = vrot.slane %v2210, 4
        %v2212 = vmax.f32 %v2210, %v2211
        %v2213 = vrot.slane %v2212, 2
        %v2214 = vmax.f32 %v2212, %v2213
        %v2215 = vrot.slane %v2214, 1
        %v2216 = vmax.f32 %v2214, %v2215
        %v2217 = vpack.i.bf16 %v2216, %v2216
        %v2219 = vsel %vm2086, %v2032, 4286644096
        %v2221 = vunpack.i.l.bf16 %v2219
        %v2222 = vunpack.i.h.bf16 %v2219
        %v2223 = vmax.f32 %v2221, %v2222
        %v2224 = vrot.slane %v2223, 4
        %v2225 = vmax.f32 %v2223, %v2224
        %v2226 = vrot.slane %v2225, 2
        %v2227 = vmax.f32 %v2225, %v2226
        %v2228 = vrot.slane %v2227, 1
        %v2229 = vmax.f32 %v2227, %v2228
        %v2230 = vpack.i.bf16 %v2229, %v2229
        %v2232 = vsel %vm2086, %v2033, 4286644096
        %v2234 = vunpack.i.l.bf16 %v2232
        %v2235 = vunpack.i.h.bf16 %v2232
        %v2236 = vmax.f32 %v2234, %v2235
        %v2237 = vrot.slane %v2236, 4
        %v2238 = vmax.f32 %v2236, %v2237
        %v2239 = vrot.slane %v2238, 2
        %v2240 = vmax.f32 %v2238, %v2239
        %v2241 = vrot.slane %v2240, 1
        %v2242 = vmax.f32 %v2240, %v2241
        %v2243 = vpack.i.bf16 %v2242, %v2242
        %v2245 = vsel %vm2086, %v2034, 4286644096
        %v2247 = vunpack.i.l.bf16 %v2245
        %v2248 = vunpack.i.h.bf16 %v2245
        %v2249 = vmax.f32 %v2247, %v2248
        %v2250 = vrot.slane %v2249, 4
        %v2251 = vmax.f32 %v2249, %v2250
        %v2252 = vrot.slane %v2251, 2
        %v2253 = vmax.f32 %v2251, %v2252
        %v2254 = vrot.slane %v2253, 1
        %v2255 = vmax.f32 %v2253, %v2254
        %v2256 = vpack.i.bf16 %v2255, %v2255
        %v2258 = vsel %vm2086, %v2035, 4286644096
        %v2260 = vunpack.i.l.bf16 %v2258
        %v2261 = vunpack.i.h.bf16 %v2258
        %v2262 = vmax.f32 %v2260, %v2261
        %v2263 = vrot.slane %v2262, 4
        %v2264 = vmax.f32 %v2262, %v2263
        %v2265 = vrot.slane %v2264, 2
        %v2266 = vmax.f32 %v2264, %v2265
        %v2267 = vrot.slane %v2266, 1
        %v2268 = vmax.f32 %v2266, %v2267
        %v2269 = vpack.i.bf16 %v2268, %v2268
        %v2271 = vsel %vm2086, %v2036, 4286644096
        %v2273 = vunpack.i.l.bf16 %v2271
        %v2274 = vunpack.i.h.bf16 %v2271
        %v2275 = vmax.f32 %v2273, %v2274
        %v2276 = vrot.slane %v2275, 4
        %v2277 = vmax.f32 %v2275, %v2276
        %v2278 = vrot.slane %v2277, 2
        %v2279 = vmax.f32 %v2277, %v2278
        %v2280 = vrot.slane %v2279, 1
        %v2281 = vmax.f32 %v2279, %v2280
        %v2282 = vpack.i.bf16 %v2281, %v2281
        %v2284 = vsel %vm2086, %v2037, 4286644096
        %v2286 = vunpack.i.l.bf16 %v2284
        %v2287 = vunpack.i.h.bf16 %v2284
        %v2288 = vmax.f32 %v2286, %v2287
        %v2289 = vrot.slane %v2288, 4
        %v2290 = vmax.f32 %v2288, %v2289
        %v2291 = vrot.slane %v2290, 2
        %v2292 = vmax.f32 %v2290, %v2291
        %v2293 = vrot.slane %v2292, 1
        %v2294 = vmax.f32 %v2292, %v2293
        %v2295 = vpack.i.bf16 %v2294, %v2294
        %v2297 = vsel %vm2086, %v2038, 4286644096
        %v2299 = vunpack.i.l.bf16 %v2297
        %v2300 = vunpack.i.h.bf16 %v2297
        %v2301 = vmax.f32 %v2299, %v2300
        %v2302 = vrot.slane %v2301, 4
        %v2303 = vmax.f32 %v2301, %v2302
        %v2304 = vrot.slane %v2303, 2
        %v2305 = vmax.f32 %v2303, %v2304
        %v2306 = vrot.slane %v2305, 1
        %v2307 = vmax.f32 %v2305, %v2306
        %v2308 = vpack.i.bf16 %v2307, %v2307
        %v2310 = vsel %vm2086, %v2039, 4286644096
        %v2312 = vunpack.i.l.bf16 %v2310
        %v2313 = vunpack.i.h.bf16 %v2310
        %v2314 = vmax.f32 %v2312, %v2313
        %v2315 = vrot.slane %v2314, 4
        %v2316 = vmax.f32 %v2314, %v2315
        %v2317 = vrot.slane %v2316, 2
        %v2318 = vmax.f32 %v2316, %v2317
        %v2319 = vrot.slane %v2318, 1
        %v2320 = vmax.f32 %v2318, %v2319
        %v2321 = vpack.i.bf16 %v2320, %v2320
        %v2323 = vsel %vm2086, %v2040, 4286644096
        %v2325 = vunpack.i.l.bf16 %v2323
        %v2326 = vunpack.i.h.bf16 %v2323
        %v2327 = vmax.f32 %v2325, %v2326
        %v2328 = vrot.slane %v2327, 4
        %v2329 = vmax.f32 %v2327, %v2328
        %v2330 = vrot.slane %v2329, 2
        %v2331 = vmax.f32 %v2329, %v2330
        %v2332 = vrot.slane %v2331, 1
        %v2333 = vmax.f32 %v2331, %v2332
        %v2334 = vpack.i.bf16 %v2333, %v2333
        %v2336 = vsel %vm2086, %v2041, 4286644096
        %v2338 = vunpack.i.l.bf16 %v2336
        %v2339 = vunpack.i.h.bf16 %v2336
        %v2340 = vmax.f32 %v2338, %v2339
        %v2341 = vrot.slane %v2340, 4
        %v2342 = vmax.f32 %v2340, %v2341
        %v2343 = vrot.slane %v2342, 2
        %v2344 = vmax.f32 %v2342, %v2343
        %v2345 = vrot.slane %v2344, 1
        %v2346 = vmax.f32 %v2344, %v2345
        %v2347 = vpack.i.bf16 %v2346, %v2346
        %v2349 = vsel %vm2086, %v2042, 4286644096
        %v2351 = vunpack.i.l.bf16 %v2349
        %v2352 = vunpack.i.h.bf16 %v2349
        %v2353 = vmax.f32 %v2351, %v2352
        %v2354 = vrot.slane %v2353, 4
        %v2355 = vmax.f32 %v2353, %v2354
        %v2356 = vrot.slane %v2355, 2
        %v2357 = vmax.f32 %v2355, %v2356
        %v2358 = vrot.slane %v2357, 1
        %v2359 = vmax.f32 %v2357, %v2358
        %v2360 = vpack.i.bf16 %v2359, %v2359
        %v2362 = vsel %vm2086, %v2043, 4286644096
        %v2364 = vunpack.i.l.bf16 %v2362
        %v2365 = vunpack.i.h.bf16 %v2362
        %v2366 = vmax.f32 %v2364, %v2365
        %v2367 = vrot.slane %v2366, 4
        %v2368 = vmax.f32 %v2366, %v2367
        %v2369 = vrot.slane %v2368, 2
        %v2370 = vmax.f32 %v2368, %v2369
        %v2371 = vrot.slane %v2370, 1
        %v2372 = vmax.f32 %v2370, %v2371
        %v2373 = vpack.i.bf16 %v2372, %v2372
        %v2375 = vsel %vm2086, %v2044, 4286644096
        %v2377 = vunpack.i.l.bf16 %v2375
        %v2378 = vunpack.i.h.bf16 %v2375
        %v2379 = vmax.f32 %v2377, %v2378
        %v2380 = vrot.slane %v2379, 4
        %v2381 = vmax.f32 %v2379, %v2380
        %v2382 = vrot.slane %v2381, 2
        %v2383 = vmax.f32 %v2381, %v2382
        %v2384 = vrot.slane %v2383, 1
        %v2385 = vmax.f32 %v2383, %v2384
        %v2386 = vpack.i.bf16 %v2385, %v2385
        %v2388 = vsel %vm2086, %v2045, 4286644096
        %v2390 = vunpack.i.l.bf16 %v2388
        %v2391 = vunpack.i.h.bf16 %v2388
        %v2392 = vmax.f32 %v2390, %v2391
        %v2393 = vrot.slane %v2392, 4
        %v2394 = vmax.f32 %v2392, %v2393
        %v2395 = vrot.slane %v2394, 2
        %v2396 = vmax.f32 %v2394, %v2395
        %v2397 = vrot.slane %v2396, 1
        %v2398 = vmax.f32 %v2396, %v2397
        %v2399 = vpack.i.bf16 %v2398, %v2398
        %v2401 = vsel %vm2086, %v2046, 4286644096
        %v2403 = vunpack.i.l.bf16 %v2401
        %v2404 = vunpack.i.h.bf16 %v2401
        %v2405 = vmax.f32 %v2403, %v2404
        %v2406 = vrot.slane %v2405, 4
        %v2407 = vmax.f32 %v2405, %v2406
        %v2408 = vrot.slane %v2407, 2
        %v2409 = vmax.f32 %v2407, %v2408
        %v2410 = vrot.slane %v2409, 1
        %v2411 = vmax.f32 %v2409, %v2410
        %v2412 = vpack.i.bf16 %v2411, %v2411
        %v2414 = vsel %vm2086, %v2047, 4286644096
        %v2416 = vunpack.i.l.bf16 %v2414
        %v2417 = vunpack.i.h.bf16 %v2414
        %v2418 = vmax.f32 %v2416, %v2417
        %v2419 = vrot.slane %v2418, 4
        %v2420 = vmax.f32 %v2418, %v2419
        %v2421 = vrot.slane %v2420, 2
        %v2422 = vmax.f32 %v2420, %v2421
        %v2423 = vrot.slane %v2422, 1
        %v2424 = vmax.f32 %v2422, %v2423
        %v2425 = vpack.i.bf16 %v2424, %v2424
        %v2427 = vsel %vm2086, %v2048, 4286644096
        %v2429 = vunpack.i.l.bf16 %v2427
        %v2430 = vunpack.i.h.bf16 %v2427
        %v2431 = vmax.f32 %v2429, %v2430
        %v2432 = vrot.slane %v2431, 4
        %v2433 = vmax.f32 %v2431, %v2432
        %v2434 = vrot.slane %v2433, 2
        %v2435 = vmax.f32 %v2433, %v2434
        %v2436 = vrot.slane %v2435, 1
        %v2437 = vmax.f32 %v2435, %v2436
        %v2438 = vpack.i.bf16 %v2437, %v2437
        %v2440 = vsel %vm2086, %v2049, 4286644096
        %v2442 = vunpack.i.l.bf16 %v2440
        %v2443 = vunpack.i.h.bf16 %v2440
        %v2444 = vmax.f32 %v2442, %v2443
        %v2445 = vrot.slane %v2444, 4
        %v2446 = vmax.f32 %v2444, %v2445
        %v2447 = vrot.slane %v2446, 2
        %v2448 = vmax.f32 %v2446, %v2447
        %v2449 = vrot.slane %v2448, 1
        %v2450 = vmax.f32 %v2448, %v2449
        %v2451 = vpack.i.bf16 %v2450, %v2450
        %v2453 = vsel %vm2086, %v2050, 4286644096
        %v2455 = vunpack.i.l.bf16 %v2453
        %v2456 = vunpack.i.h.bf16 %v2453
        %v2457 = vmax.f32 %v2455, %v2456
        %v2458 = vrot.slane %v2457, 4
        %v2459 = vmax.f32 %v2457, %v2458
        %v2460 = vrot.slane %v2459, 2
        %v2461 = vmax.f32 %v2459, %v2460
        %v2462 = vrot.slane %v2461, 1
        %v2463 = vmax.f32 %v2461, %v2462
        %v2464 = vpack.i.bf16 %v2463, %v2463
        %v2466 = vsel %vm2086, %v2051, 4286644096
        %v2468 = vunpack.i.l.bf16 %v2466
        %v2469 = vunpack.i.h.bf16 %v2466
        %v2470 = vmax.f32 %v2468, %v2469
        %v2471 = vrot.slane %v2470, 4
        %v2472 = vmax.f32 %v2470, %v2471
        %v2473 = vrot.slane %v2472, 2
        %v2474 = vmax.f32 %v2472, %v2473
        %v2475 = vrot.slane %v2474, 1
        %v2476 = vmax.f32 %v2474, %v2475
        %v2477 = vpack.i.bf16 %v2476, %v2476
        %v2479 = vsel %vm2086, %v2052, 4286644096
        %v2481 = vunpack.i.l.bf16 %v2479
        %v2482 = vunpack.i.h.bf16 %v2479
        %v2483 = vmax.f32 %v2481, %v2482
        %v2484 = vrot.slane %v2483, 4
        %v2485 = vmax.f32 %v2483, %v2484
        %v2486 = vrot.slane %v2485, 2
        %v2487 = vmax.f32 %v2485, %v2486
        %v2488 = vrot.slane %v2487, 1
        %v2489 = vmax.f32 %v2487, %v2488
        %v2490 = vpack.i.bf16 %v2489, %v2489
        %v2492 = vsel %vm2086, %v2053, 4286644096
        %v2494 = vunpack.i.l.bf16 %v2492
        %v2495 = vunpack.i.h.bf16 %v2492
        %v2496 = vmax.f32 %v2494, %v2495
        %v2497 = vrot.slane %v2496, 4
        %v2498 = vmax.f32 %v2496, %v2497
        %v2499 = vrot.slane %v2498, 2
        %v2500 = vmax.f32 %v2498, %v2499
        %v2501 = vrot.slane %v2500, 1
        %v2502 = vmax.f32 %v2500, %v2501
        %v2503 = vpack.i.bf16 %v2502, %v2502
        %v2505 = vsel %vm2086, %v2054, 4286644096
        %v2507 = vunpack.i.l.bf16 %v2505
        %v2508 = vunpack.i.h.bf16 %v2505
        %v2509 = vmax.f32 %v2507, %v2508
        %v2510 = vrot.slane %v2509, 4
        %v2511 = vmax.f32 %v2509, %v2510
        %v2512 = vrot.slane %v2511, 2
        %v2513 = vmax.f32 %v2511, %v2512
        %v2514 = vrot.slane %v2513, 1
        %v2515 = vmax.f32 %v2513, %v2514
        %v2516 = vpack.i.bf16 %v2515, %v2515
        %v2518 = vsel %vm2086, %v2055, 4286644096
        %v2520 = vunpack.i.l.bf16 %v2518
        %v2521 = vunpack.i.h.bf16 %v2518
        %v2522 = vmax.f32 %v2520, %v2521
        %v2523 = vrot.slane %v2522, 4
        %v2524 = vmax.f32 %v2522, %v2523
        %v2525 = vrot.slane %v2524, 2
        %v2526 = vmax.f32 %v2524, %v2525
        %v2527 = vrot.slane %v2526, 1
        %v2528 = vmax.f32 %v2526, %v2527
        %v2529 = vpack.i.bf16 %v2528, %v2528
        %v2531 = vsel %vm2086, %v2056, 4286644096
        %v2533 = vunpack.i.l.bf16 %v2531
        %v2534 = vunpack.i.h.bf16 %v2531
        %v2535 = vmax.f32 %v2533, %v2534
        %v2536 = vrot.slane %v2535, 4
        %v2537 = vmax.f32 %v2535, %v2536
        %v2538 = vrot.slane %v2537, 2
        %v2539 = vmax.f32 %v2537, %v2538
        %v2540 = vrot.slane %v2539, 1
        %v2541 = vmax.f32 %v2539, %v2540
        %v2542 = vpack.i.bf16 %v2541, %v2541
        %v2544 = vsel %vm2086, %v2057, 4286644096
        %v2546 = vunpack.i.l.bf16 %v2544
        %v2547 = vunpack.i.h.bf16 %v2544
        %v2548 = vmax.f32 %v2546, %v2547
        %v2549 = vrot.slane %v2548, 4
        %v2550 = vmax.f32 %v2548, %v2549
        %v2551 = vrot.slane %v2550, 2
        %v2552 = vmax.f32 %v2550, %v2551
        %v2553 = vrot.slane %v2552, 1
        %v2554 = vmax.f32 %v2552, %v2553
        %v2555 = vpack.i.bf16 %v2554, %v2554
        %v2557 = vsel %vm2086, %v2058, 4286644096
        %v2559 = vunpack.i.l.bf16 %v2557
        %v2560 = vunpack.i.h.bf16 %v2557
        %v2561 = vmax.f32 %v2559, %v2560
        %v2562 = vrot.slane %v2561, 4
        %v2563 = vmax.f32 %v2561, %v2562
        %v2564 = vrot.slane %v2563, 2
        %v2565 = vmax.f32 %v2563, %v2564
        %v2566 = vrot.slane %v2565, 1
        %v2567 = vmax.f32 %v2565, %v2566
        %v2568 = vpack.i.bf16 %v2567, %v2567
        %v2570 = vsel %vm2086, %v2059, 4286644096
        %v2572 = vunpack.i.l.bf16 %v2570
        %v2573 = vunpack.i.h.bf16 %v2570
        %v2574 = vmax.f32 %v2572, %v2573
        %v2575 = vrot.slane %v2574, 4
        %v2576 = vmax.f32 %v2574, %v2575
        %v2577 = vrot.slane %v2576, 2
        %v2578 = vmax.f32 %v2576, %v2577
        %v2579 = vrot.slane %v2578, 1
        %v2580 = vmax.f32 %v2578, %v2579
        %v2581 = vpack.i.bf16 %v2580, %v2580
        %v2583 = vsel %vm2086, %v2060, 4286644096
        %v2585 = vunpack.i.l.bf16 %v2583
        %v2586 = vunpack.i.h.bf16 %v2583
        %v2587 = vmax.f32 %v2585, %v2586
        %v2588 = vrot.slane %v2587, 4
        %v2589 = vmax.f32 %v2587, %v2588
        %v2590 = vrot.slane %v2589, 2
        %v2591 = vmax.f32 %v2589, %v2590
        %v2592 = vrot.slane %v2591, 1
        %v2593 = vmax.f32 %v2591, %v2592
        %v2594 = vpack.i.bf16 %v2593, %v2593
        %v2596 = vsel %vm2086, %v2061, 4286644096
        %v2598 = vunpack.i.l.bf16 %v2596
        %v2599 = vunpack.i.h.bf16 %v2596
        %v2600 = vmax.f32 %v2598, %v2599
        %v2601 = vrot.slane %v2600, 4
        %v2602 = vmax.f32 %v2600, %v2601
        %v2603 = vrot.slane %v2602, 2
        %v2604 = vmax.f32 %v2602, %v2603
        %v2605 = vrot.slane %v2604, 1
        %v2606 = vmax.f32 %v2604, %v2605
        %v2607 = vpack.i.bf16 %v2606, %v2606
        %v2609 = vsel %vm2086, %v2062, 4286644096
        %v2611 = vunpack.i.l.bf16 %v2609
        %v2612 = vunpack.i.h.bf16 %v2609
        %v2613 = vmax.f32 %v2611, %v2612
        %v2614 = vrot.slane %v2613, 4
        %v2615 = vmax.f32 %v2613, %v2614
        %v2616 = vrot.slane %v2615, 2
        %v2617 = vmax.f32 %v2615, %v2616
        %v2618 = vrot.slane %v2617, 1
        %v2619 = vmax.f32 %v2617, %v2618
        %v2620 = vpack.i.bf16 %v2619, %v2619
        %v2622 = vsel %vm2086, %v2063, 4286644096
        %v2624 = vunpack.i.l.bf16 %v2622
        %v2625 = vunpack.i.h.bf16 %v2622
        %v2626 = vmax.f32 %v2624, %v2625
        %v2627 = vrot.slane %v2626, 4
        %v2628 = vmax.f32 %v2626, %v2627
        %v2629 = vrot.slane %v2628, 2
        %v2630 = vmax.f32 %v2628, %v2629
        %v2631 = vrot.slane %v2630, 1
        %v2632 = vmax.f32 %v2630, %v2631
        %v2633 = vpack.i.bf16 %v2632, %v2632
        %v2635 = vsel %vm2086, %v2064, 4286644096
        %v2637 = vunpack.i.l.bf16 %v2635
        %v2638 = vunpack.i.h.bf16 %v2635
        %v2639 = vmax.f32 %v2637, %v2638
        %v2640 = vrot.slane %v2639, 4
        %v2641 = vmax.f32 %v2639, %v2640
        %v2642 = vrot.slane %v2641, 2
        %v2643 = vmax.f32 %v2641, %v2642
        %v2644 = vrot.slane %v2643, 1
        %v2645 = vmax.f32 %v2643, %v2644
        %v2646 = vpack.i.bf16 %v2645, %v2645
        %v2648 = vsel %vm2086, %v2065, 4286644096
        %v2650 = vunpack.i.l.bf16 %v2648
        %v2651 = vunpack.i.h.bf16 %v2648
        %v2652 = vmax.f32 %v2650, %v2651
        %v2653 = vrot.slane %v2652, 4
        %v2654 = vmax.f32 %v2652, %v2653
        %v2655 = vrot.slane %v2654, 2
        %v2656 = vmax.f32 %v2654, %v2655
        %v2657 = vrot.slane %v2656, 1
        %v2658 = vmax.f32 %v2656, %v2657
        %v2659 = vpack.i.bf16 %v2658, %v2658
        %v2661 = vsel %vm2086, %v2066, 4286644096
        %v2663 = vunpack.i.l.bf16 %v2661
        %v2664 = vunpack.i.h.bf16 %v2661
        %v2665 = vmax.f32 %v2663, %v2664
        %v2666 = vrot.slane %v2665, 4
        %v2667 = vmax.f32 %v2665, %v2666
        %v2668 = vrot.slane %v2667, 2
        %v2669 = vmax.f32 %v2667, %v2668
        %v2670 = vrot.slane %v2669, 1
        %v2671 = vmax.f32 %v2669, %v2670
        %v2672 = vpack.i.bf16 %v2671, %v2671
        %v2674 = vsel %vm2086, %v2067, 4286644096
        %v2676 = vunpack.i.l.bf16 %v2674
        %v2677 = vunpack.i.h.bf16 %v2674
        %v2678 = vmax.f32 %v2676, %v2677
        %v2679 = vrot.slane %v2678, 4
        %v2680 = vmax.f32 %v2678, %v2679
        %v2681 = vrot.slane %v2680, 2
        %v2682 = vmax.f32 %v2680, %v2681
        %v2683 = vrot.slane %v2682, 1
        %v2684 = vmax.f32 %v2682, %v2683
        %v2685 = vpack.i.bf16 %v2684, %v2684
        %v2687 = vsel %vm2086, %v2068, 4286644096
        %v2689 = vunpack.i.l.bf16 %v2687
        %v2690 = vunpack.i.h.bf16 %v2687
        %v2691 = vmax.f32 %v2689, %v2690
        %v2692 = vrot.slane %v2691, 4
        %v2693 = vmax.f32 %v2691, %v2692
        %v2694 = vrot.slane %v2693, 2
        %v2695 = vmax.f32 %v2693, %v2694
        %v2696 = vrot.slane %v2695, 1
        %v2697 = vmax.f32 %v2695, %v2696
        %v2698 = vpack.i.bf16 %v2697, %v2697
        %v2700 = vsel %vm2086, %v2069, 4286644096
        %v2702 = vunpack.i.l.bf16 %v2700
        %v2703 = vunpack.i.h.bf16 %v2700
        %v2704 = vmax.f32 %v2702, %v2703
        %v2705 = vrot.slane %v2704, 4
        %v2706 = vmax.f32 %v2704, %v2705
        %v2707 = vrot.slane %v2706, 2
        %v2708 = vmax.f32 %v2706, %v2707
        %v2709 = vrot.slane %v2708, 1
        %v2710 = vmax.f32 %v2708, %v2709
        %v2711 = vpack.i.bf16 %v2710, %v2710
        %v2713 = vsel %vm2086, %v2070, 4286644096
        %v2715 = vunpack.i.l.bf16 %v2713
        %v2716 = vunpack.i.h.bf16 %v2713
        %v2717 = vmax.f32 %v2715, %v2716
        %v2718 = vrot.slane %v2717, 4
        %v2719 = vmax.f32 %v2717, %v2718
        %v2720 = vrot.slane %v2719, 2
        %v2721 = vmax.f32 %v2719, %v2720
        %v2722 = vrot.slane %v2721, 1
        %v2723 = vmax.f32 %v2721, %v2722
        %v2724 = vpack.i.bf16 %v2723, %v2723
        %v2726 = vsel %vm2086, %v2071, 4286644096
        %v2728 = vunpack.i.l.bf16 %v2726
        %v2729 = vunpack.i.h.bf16 %v2726
        %v2730 = vmax.f32 %v2728, %v2729
        %v2731 = vrot.slane %v2730, 4
        %v2732 = vmax.f32 %v2730, %v2731
        %v2733 = vrot.slane %v2732, 2
        %v2734 = vmax.f32 %v2732, %v2733
        %v2735 = vrot.slane %v2734, 1
        %v2736 = vmax.f32 %v2734, %v2735
        %v2737 = vpack.i.bf16 %v2736, %v2736
        %v2739 = vsel %vm2086, %v2072, 4286644096
        %v2741 = vunpack.i.l.bf16 %v2739
        %v2742 = vunpack.i.h.bf16 %v2739
        %v2743 = vmax.f32 %v2741, %v2742
        %v2744 = vrot.slane %v2743, 4
        %v2745 = vmax.f32 %v2743, %v2744
        %v2746 = vrot.slane %v2745, 2
        %v2747 = vmax.f32 %v2745, %v2746
        %v2748 = vrot.slane %v2747, 1
        %v2749 = vmax.f32 %v2747, %v2748
        %v2750 = vpack.i.bf16 %v2749, %v2749
        %v2752 = vsel %vm2086, %v2073, 4286644096
        %v2754 = vunpack.i.l.bf16 %v2752
        %v2755 = vunpack.i.h.bf16 %v2752
        %v2756 = vmax.f32 %v2754, %v2755
        %v2757 = vrot.slane %v2756, 4
        %v2758 = vmax.f32 %v2756, %v2757
        %v2759 = vrot.slane %v2758, 2
        %v2760 = vmax.f32 %v2758, %v2759
        %v2761 = vrot.slane %v2760, 1
        %v2762 = vmax.f32 %v2760, %v2761
        %v2763 = vpack.i.bf16 %v2762, %v2762
        %v2765 = vsel %vm2086, %v2074, 4286644096
        %v2767 = vunpack.i.l.bf16 %v2765
        %v2768 = vunpack.i.h.bf16 %v2765
        %v2769 = vmax.f32 %v2767, %v2768
        %v2770 = vrot.slane %v2769, 4
        %v2771 = vmax.f32 %v2769, %v2770
        %v2772 = vrot.slane %v2771, 2
        %v2773 = vmax.f32 %v2771, %v2772
        %v2774 = vrot.slane %v2773, 1
        %v2775 = vmax.f32 %v2773, %v2774
        %v2776 = vpack.i.bf16 %v2775, %v2775
        %v2778 = vsel %vm2086, %v2075, 4286644096
        %v2780 = vunpack.i.l.bf16 %v2778
        %v2781 = vunpack.i.h.bf16 %v2778
        %v2782 = vmax.f32 %v2780, %v2781
        %v2783 = vrot.slane %v2782, 4
        %v2784 = vmax.f32 %v2782, %v2783
        %v2785 = vrot.slane %v2784, 2
        %v2786 = vmax.f32 %v2784, %v2785
        %v2787 = vrot.slane %v2786, 1
        %v2788 = vmax.f32 %v2786, %v2787
        %v2789 = vpack.i.bf16 %v2788, %v2788
        %v2791 = vsel %vm2086, %v2076, 4286644096
        %v2793 = vunpack.i.l.bf16 %v2791
        %v2794 = vunpack.i.h.bf16 %v2791
        %v2795 = vmax.f32 %v2793, %v2794
        %v2796 = vrot.slane %v2795, 4
        %v2797 = vmax.f32 %v2795, %v2796
        %v2798 = vrot.slane %v2797, 2
        %v2799 = vmax.f32 %v2797, %v2798
        %v2800 = vrot.slane %v2799, 1
        %v2801 = vmax.f32 %v2799, %v2800
        %v2802 = vpack.i.bf16 %v2801, %v2801
        %v2804 = vsel %vm2086, %v2077, 4286644096
        %v2806 = vunpack.i.l.bf16 %v2804
        %v2807 = vunpack.i.h.bf16 %v2804
        %v2808 = vmax.f32 %v2806, %v2807
        %v2809 = vrot.slane %v2808, 4
        %v2810 = vmax.f32 %v2808, %v2809
        %v2811 = vrot.slane %v2810, 2
        %v2812 = vmax.f32 %v2810, %v2811
        %v2813 = vrot.slane %v2812, 1
        %v2814 = vmax.f32 %v2812, %v2813
        %v2815 = vpack.i.bf16 %v2814, %v2814
        %v2817 = vsel %vm2086, %v2078, 4286644096
        %v2819 = vunpack.i.l.bf16 %v2817
        %v2820 = vunpack.i.h.bf16 %v2817
        %v2821 = vmax.f32 %v2819, %v2820
        %v2822 = vrot.slane %v2821, 4
        %v2823 = vmax.f32 %v2821, %v2822
        %v2824 = vrot.slane %v2823, 2
        %v2825 = vmax.f32 %v2823, %v2824
        %v2826 = vrot.slane %v2825, 1
        %v2827 = vmax.f32 %v2825, %v2826
        %v2828 = vpack.i.bf16 %v2827, %v2827
        %v2830 = vsel %vm2086, %v2079, 4286644096
        %v2832 = vunpack.i.l.bf16 %v2830
        %v2833 = vunpack.i.h.bf16 %v2830
        %v2834 = vmax.f32 %v2832, %v2833
        %v2835 = vrot.slane %v2834, 4
        %v2836 = vmax.f32 %v2834, %v2835
        %v2837 = vrot.slane %v2836, 2
        %v2838 = vmax.f32 %v2836, %v2837
        %v2839 = vrot.slane %v2838, 1
        %v2840 = vmax.f32 %v2838, %v2839
        %v2841 = vpack.i.bf16 %v2840, %v2840
        %v2843 = vsel %vm2086, %v2080, 4286644096
        %v2845 = vunpack.i.l.bf16 %v2843
        %v2846 = vunpack.i.h.bf16 %v2843
        %v2847 = vmax.f32 %v2845, %v2846
        %v2848 = vrot.slane %v2847, 4
        %v2849 = vmax.f32 %v2847, %v2848
        %v2850 = vrot.slane %v2849, 2
        %v2851 = vmax.f32 %v2849, %v2850
        %v2852 = vrot.slane %v2851, 1
        %v2853 = vmax.f32 %v2851, %v2852
        %v2854 = vpack.i.bf16 %v2853, %v2853
        %v2856 = vsel %vm2086, %v2081, 4286644096
        %v2858 = vunpack.i.l.bf16 %v2856
        %v2859 = vunpack.i.h.bf16 %v2856
        %v2860 = vmax.f32 %v2858, %v2859
        %v2861 = vrot.slane %v2860, 4
        %v2862 = vmax.f32 %v2860, %v2861
        %v2863 = vrot.slane %v2862, 2
        %v2864 = vmax.f32 %v2862, %v2863
        %v2865 = vrot.slane %v2864, 1
        %v2866 = vmax.f32 %v2864, %v2865
        %v2867 = vpack.i.bf16 %v2866, %v2866
        %v2869 = vsel %vm2086, %v2082, 4286644096
        %v2871 = vunpack.i.l.bf16 %v2869
        %v2872 = vunpack.i.h.bf16 %v2869
        %v2873 = vmax.f32 %v2871, %v2872
        %v2874 = vrot.slane %v2873, 4
        %v2875 = vmax.f32 %v2873, %v2874
        %v2876 = vrot.slane %v2875, 2
        %v2877 = vmax.f32 %v2875, %v2876
        %v2878 = vrot.slane %v2877, 1
        %v2879 = vmax.f32 %v2877, %v2878
        %v2880 = vpack.i.bf16 %v2879, %v2879
        %v2882 = vsel %vm2086, %v2083, 4286644096
        %v2884 = vunpack.i.l.bf16 %v2882
        %v2885 = vunpack.i.h.bf16 %v2882
        %v2886 = vmax.f32 %v2884, %v2885
        %v2887 = vrot.slane %v2886, 4
        %v2888 = vmax.f32 %v2886, %v2887
        %v2889 = vrot.slane %v2888, 2
        %v2890 = vmax.f32 %v2888, %v2889
        %v2891 = vrot.slane %v2890, 1
        %v2892 = vmax.f32 %v2890, %v2891
        %v2893 = vpack.i.bf16 %v2892, %v2892
        %v2895 = vsel %vm2086, %v2084, 4286644096
        %v2897 = vunpack.i.l.bf16 %v2895
        %v2898 = vunpack.i.h.bf16 %v2895
        %v2899 = vmax.f32 %v2897, %v2898
        %v2900 = vrot.slane %v2899, 4
        %v2901 = vmax.f32 %v2899, %v2900
        %v2902 = vrot.slane %v2901, 2
        %v2903 = vmax.f32 %v2901, %v2902
        %v2904 = vrot.slane %v2903, 1
        %v2905 = vmax.f32 %v2903, %v2904
        %v2906 = vpack.i.bf16 %v2905, %v2905
        %v2908 = vsel %vm2086, %v2085, 4286644096
        %v2910 = vunpack.i.l.bf16 %v2908
        %v2911 = vunpack.i.h.bf16 %v2908
        %v2912 = vmax.f32 %v2910, %v2911
        %v2913 = vrot.slane %v2912, 4
        %v2914 = vmax.f32 %v2912, %v2913
        %v2915 = vrot.slane %v2914, 2
        %v2916 = vmax.f32 %v2914, %v2915
        %v2917 = vrot.slane %v2916, 1
        %v2918 = vmax.f32 %v2916, %v2917
        %v2919 = vpack.i.bf16 %v2918, %v2918
        %v2920 = vunpack.c.l.bf16 %v2100
        %v2921 = vunpack.c.l.bf16 %v2113
        %v2922 = vunpack.c.l.bf16 %v2126
        %v2923 = vunpack.c.l.bf16 %v2139
        %v2924 = vunpack.c.l.bf16 %v2152
        %v2925 = vunpack.c.l.bf16 %v2165
        %v2926 = vunpack.c.l.bf16 %v2178
        %v2927 = vunpack.c.l.bf16 %v2191
        %v2928 = vunpack.c.l.bf16 %v2204
        %v2929 = vunpack.c.l.bf16 %v2217
        %v2930 = vunpack.c.l.bf16 %v2230
        %v2931 = vunpack.c.l.bf16 %v2243
        %v2932 = vunpack.c.l.bf16 %v2256
        %v2933 = vunpack.c.l.bf16 %v2269
        %v2934 = vunpack.c.l.bf16 %v2282
        %v2935 = vunpack.c.l.bf16 %v2295
        %v2936 = vunpack.c.l.bf16 %v2308
        %v2937 = vunpack.c.l.bf16 %v2321
        %v2938 = vunpack.c.l.bf16 %v2334
        %v2939 = vunpack.c.l.bf16 %v2347
        %v2940 = vunpack.c.l.bf16 %v2360
        %v2941 = vunpack.c.l.bf16 %v2373
        %v2942 = vunpack.c.l.bf16 %v2386
        %v2943 = vunpack.c.l.bf16 %v2399
        %v2944 = vunpack.c.l.bf16 %v2412
        %v2945 = vunpack.c.l.bf16 %v2425
        %v2946 = vunpack.c.l.bf16 %v2438
        %v2947 = vunpack.c.l.bf16 %v2451
        %v2948 = vunpack.c.l.bf16 %v2464
        %v2949 = vunpack.c.l.bf16 %v2477
        %v2950 = vunpack.c.l.bf16 %v2490
        %v2951 = vunpack.c.l.bf16 %v2503
        %v2952 = vunpack.c.l.bf16 %v2516
        %v2953 = vunpack.c.l.bf16 %v2529
        %v2954 = vunpack.c.l.bf16 %v2542
        %v2955 = vunpack.c.l.bf16 %v2555
        %v2956 = vunpack.c.l.bf16 %v2568
        %v2957 = vunpack.c.l.bf16 %v2581
        %v2958 = vunpack.c.l.bf16 %v2594
        %v2959 = vunpack.c.l.bf16 %v2607
        %v2960 = vunpack.c.l.bf16 %v2620
        %v2961 = vunpack.c.l.bf16 %v2633
        %v2962 = vunpack.c.l.bf16 %v2646
        %v2963 = vunpack.c.l.bf16 %v2659
        %v2964 = vunpack.c.l.bf16 %v2672
        %v2965 = vunpack.c.l.bf16 %v2685
        %v2966 = vunpack.c.l.bf16 %v2698
        %v2967 = vunpack.c.l.bf16 %v2711
        %v2968 = vunpack.c.l.bf16 %v2724
        %v2969 = vunpack.c.l.bf16 %v2737
        %v2970 = vunpack.c.l.bf16 %v2750
        %v2971 = vunpack.c.l.bf16 %v2763
        %v2972 = vunpack.c.l.bf16 %v2776
        %v2973 = vunpack.c.l.bf16 %v2789
        %v2974 = vunpack.c.l.bf16 %v2802
        %v2975 = vunpack.c.l.bf16 %v2815
        %v2976 = vunpack.c.l.bf16 %v2828
        %v2977 = vunpack.c.l.bf16 %v2841
        %v2978 = vunpack.c.l.bf16 %v2854
        %v2979 = vunpack.c.l.bf16 %v2867
        %v2980 = vunpack.c.l.bf16 %v2880
        %v2981 = vunpack.c.l.bf16 %v2893
        %v2982 = vunpack.c.l.bf16 %v2906
        %v2983 = vunpack.c.l.bf16 %v2919
        %p2984 = scmp.eq.s32.totalorder %s37, 0
        // Predicated region
        $region150: #{tpu_custom_call.1} parent=108 // pred_check
          %p2985 = pneg %p2984
        $region151: #{tpu_custom_call.1} parent=108 // pred_check_branch
          %2987 = sbr.rel (%p2985) target = $region153
        $region152: #{tpu_custom_call.1} parent=108 // pred_region
          %2988 = vst [vmem:[#allocation2] sm:$0xff] 0.0
          %2989 = vst [vmem:[#allocation2 + $0x8] sm:$0xff] 0.0
          %2990 = vst [vmem:[#allocation2 + $0x10] sm:$0xff] 0.0
          %2991 = vst [vmem:[#allocation2 + $0x18] sm:$0xff] 0.0
          %2992 = vst [vmem:[#allocation2 + $0x20] sm:$0xff] 0.0
          %2993 = vst [vmem:[#allocation2 + $0x28] sm:$0xff] 0.0
          %2994 = vst [vmem:[#allocation2 + $0x30] sm:$0xff] 0.0
          %2995 = vst [vmem:[#allocation2 + $0x38] sm:$0xff] 0.0
        $region153: #{tpu_custom_call.1} parent=108 // pred_fallthru
          _
        %v2996 = vld [vmem:[#allocation2] sm:$0xff]
        %v2997 = vld [vmem:[#allocation2 + $0x8] sm:$0xff]
        %v2998 = vld [vmem:[#allocation2 + $0x10] sm:$0xff]
        %v2999 = vld [vmem:[#allocation2 + $0x18] sm:$0xff]
        %v3000 = vld [vmem:[#allocation2 + $0x20] sm:$0xff]
        %v3001 = vld [vmem:[#allocation2 + $0x28] sm:$0xff]
        %v3002 = vld [vmem:[#allocation2 + $0x30] sm:$0xff]
        %v3003 = vld [vmem:[#allocation2 + $0x38] sm:$0xff]
        %vm3068 = vcmask 1041409
        %v3069 = vsel %vm3068, %v2928, %v2920
        %vm3070 = vcmask 1042434
        %v3071 = vsel %vm3070, %v2936, %v3069
        %vm3072 = vcmask 1043459
        %v3073 = vsel %vm3072, %v2944, %v3071
        %vm3074 = vcmask 1044484
        %v3075 = vsel %vm3074, %v2952, %v3073
        %vm3076 = vcmask 1045509
        %v3077 = vsel %vm3076, %v2960, %v3075
        %vm3078 = vcmask 1046534
        %v3079 = vsel %vm3078, %v2968, %v3077
        %vm3080 = vcmask 1047559
        %v3081 = vsel %vm3080, %v2976, %v3079
        %v3082 = vsel %vm3068, %v2929, %v2921
        %v3083 = vsel %vm3070, %v2937, %v3082
        %v3084 = vsel %vm3072, %v2945, %v3083
        %v3085 = vsel %vm3074, %v2953, %v3084
        %v3086 = vsel %vm3076, %v2961, %v3085
        %v3087 = vsel %vm3078, %v2969, %v3086
        %v3088 = vsel %vm3080, %v2977, %v3087
        %v3089 = vsel %vm3068, %v2930, %v2922
        %v3090 = vsel %vm3070, %v2938, %v3089
        %v3091 = vsel %vm3072, %v2946, %v3090
        %v3092 = vsel %vm3074, %v2954, %v3091
        %v3093 = vsel %vm3076, %v2962, %v3092
        %v3094 = vsel %vm3078, %v2970, %v3093
        %v3095 = vsel %vm3080, %v2978, %v3094
        %v3096 = vsel %vm3068, %v2931, %v2923
        %v3097 = vsel %vm3070, %v2939, %v3096
        %v3098 = vsel %vm3072, %v2947, %v3097
        %v3099 = vsel %vm3074, %v2955, %v3098
        %v3100 = vsel %vm3076, %v2963, %v3099
        %v3101 = vsel %vm3078, %v2971, %v3100
        %v3102 = vsel %vm3080, %v2979, %v3101
        %v3103 = vsel %vm3068, %v2932, %v2924
        %v3104 = vsel %vm3070, %v2940, %v3103
        %v3105 = vsel %vm3072, %v2948, %v3104
        %v3106 = vsel %vm3074, %v2956, %v3105
        %v3107 = vsel %vm3076, %v2964, %v3106
        %v3108 = vsel %vm3078, %v2972, %v3107
        %v3109 = vsel %vm3080, %v2980, %v3108
        %v3110 = vsel %vm3068, %v2933, %v2925
        %v3111 = vsel %vm3070, %v2941, %v3110
        %v3112 = vsel %vm3072, %v2949, %v3111
        %v3113 = vsel %vm3074, %v2957, %v3112
        %v3114 = vsel %vm3076, %v2965, %v3113
        %v3115 = vsel %vm3078, %v2973, %v3114
        %v3116 = vsel %vm3080, %v2981, %v3115
        %v3117 = vsel %vm3068, %v2934, %v2926
        %v3118 = vsel %vm3070, %v2942, %v3117
        %v3119 = vsel %vm3072, %v2950, %v3118
        %v3120 = vsel %vm3074, %v2958, %v3119
        %v3121 = vsel %vm3076, %v2966, %v3120
        %v3122 = vsel %vm3078, %v2974, %v3121
        %v3123 = vsel %vm3080, %v2982, %v3122
        %v3124 = vsel %vm3068, %v2935, %v2927
        %v3125 = vsel %vm3070, %v2943, %v3124
        %v3126 = vsel %vm3072, %v2951, %v3125
        %v3127 = vsel %vm3074, %v2959, %v3126
        %v3128 = vsel %vm3076, %v2967, %v3127
        %v3129 = vsel %vm3078, %v2975, %v3128
        %v3130 = vsel %vm3080, %v2983, %v3129
        %v3139 = vmax.f32 %v2996, %v3081
        %v3140 = vmax.f32 %v2997, %v3088
        %v3141 = vmax.f32 %v2998, %v3095
        %v3142 = vmax.f32 %v2999, %v3102
        %v3143 = vmax.f32 %v3000, %v3109
        %v3144 = vmax.f32 %v3001, %v3116
        %v3145 = vmax.f32 %v3002, %v3123
        %v3146 = vmax.f32 %v3003, %v3130
        %3147 = vst [vmem:[#allocation2] sm:$0xff] %v3139
        %3148 = vst [vmem:[#allocation2 + $0x8] sm:$0xff] %v3140
        %3149 = vst [vmem:[#allocation2 + $0x10] sm:$0xff] %v3141
        %3150 = vst [vmem:[#allocation2 + $0x18] sm:$0xff] %v3142
        %3151 = vst [vmem:[#allocation2 + $0x20] sm:$0xff] %v3143
        %3152 = vst [vmem:[#allocation2 + $0x28] sm:$0xff] %v3144
        %3153 = vst [vmem:[#allocation2 + $0x30] sm:$0xff] %v3145
        %3154 = vst [vmem:[#allocation2 + $0x38] sm:$0xff] %v3146
        %p3155 = scmp.eq.s32.totalorder %s37, 2
        // Predicated region
        $region154: #{tpu_custom_call.1} parent=108 // pred_check
          %p3156 = pneg %p3155
        $region155: #{tpu_custom_call.1} parent=108 // pred_check_branch
          %3158 = sbr.rel (%p3156) target = $region157
        $region156: #{tpu_custom_call.1} parent=108 // pred_region
          %v3159 = vld [vmem:[#allocation2] sm:$0xff]
          %v3160 = vld [vmem:[#allocation2 + $0x8] sm:$0xff]
          %v3161 = vld [vmem:[#allocation2 + $0x10] sm:$0xff]
          %v3162 = vld [vmem:[#allocation2 + $0x18] sm:$0xff]
          %v3163 = vld [vmem:[#allocation2 + $0x20] sm:$0xff]
          %v3164 = vld [vmem:[#allocation2 + $0x28] sm:$0xff]
          %v3165 = vld [vmem:[#allocation2 + $0x30] sm:$0xff]
          %v3166 = vld [vmem:[#allocation2 + $0x38] sm:$0xff]
          %v3167 = vpack.c.bf16 %v3159, %v3159
          %v3168 = vpack.c.bf16 %v3160, %v3160
          %v3169 = vpack.c.bf16 %v3161, %v3161
          %v3170 = vpack.c.bf16 %v3162, %v3162
          %v3171 = vpack.c.bf16 %v3163, %v3163
          %v3172 = vpack.c.bf16 %v3164, %v3164
          %v3173 = vpack.c.bf16 %v3165, %v3165
          %v3174 = vpack.c.bf16 %v3166, %v3166
          %v3175 = vld [vmem:[#allocation13] sm:$0xff]
          %v3176 = vld [vmem:[#allocation13 + $0x8] sm:$0xff]
          %v3177 = vld [vmem:[#allocation13 + $0x10] sm:$0xff]
          %v3178 = vld [vmem:[#allocation13 + $0x18] sm:$0xff]
          %v3179 = vld [vmem:[#allocation13 + $0x20] sm:$0xff]
          %v3180 = vld [vmem:[#allocation13 + $0x28] sm:$0xff]
          %v3181 = vld [vmem:[#allocation13 + $0x30] sm:$0xff]
          %v3182 = vld [vmem:[#allocation13 + $0x38] sm:$0xff]
          %v3183 = vld [vmem:[#allocation13 + $0x40] sm:$0xff]
          %v3184 = vld [vmem:[#allocation13 + $0x48] sm:$0xff]
          %v3185 = vld [vmem:[#allocation13 + $0x50] sm:$0xff]
          %v3186 = vld [vmem:[#allocation13 + $0x58] sm:$0xff]
          %v3187 = vld [vmem:[#allocation13 + $0x60] sm:$0xff]
          %v3188 = vld [vmem:[#allocation13 + $0x68] sm:$0xff]
          %v3189 = vld [vmem:[#allocation13 + $0x70] sm:$0xff]
          %v3190 = vld [vmem:[#allocation13 + $0x78] sm:$0xff]
          %v3191 = vld [vmem:[#allocation13 + $0x80] sm:$0xff]
          %v3192 = vld [vmem:[#allocation13 + $0x88] sm:$0xff]
          %v3193 = vld [vmem:[#allocation13 + $0x90] sm:$0xff]
          %v3194 = vld [vmem:[#allocation13 + $0x98] sm:$0xff]
          %v3195 = vld [vmem:[#allocation13 + $0xa0] sm:$0xff]
          %v3196 = vld [vmem:[#allocation13 + $0xa8] sm:$0xff]
          %v3197 = vld [vmem:[#allocation13 + $0xb0] sm:$0xff]
          %v3198 = vld [vmem:[#allocation13 + $0xb8] sm:$0xff]
          %v3199 = vld [vmem:[#allocation13 + $0xc0] sm:$0xff]
          %v3200 = vld [vmem:[#allocation13 + $0xc8] sm:$0xff]
          %v3201 = vld [vmem:[#allocation13 + $0xd0] sm:$0xff]
          %v3202 = vld [vmem:[#allocation13 + $0xd8] sm:$0xff]
          %v3203 = vld [vmem:[#allocation13 + $0xe0] sm:$0xff]
          %v3204 = vld [vmem:[#allocation13 + $0xe8] sm:$0xff]
          %v3205 = vld [vmem:[#allocation13 + $0xf0] sm:$0xff]
          %v3206 = vld [vmem:[#allocation13 + $0xf8] sm:$0xff]
          %v3207 = vld [vmem:[#allocation13 + $0x100] sm:$0xff]
          %v3208 = vld [vmem:[#allocation13 + $0x108] sm:$0xff]
          %v3209 = vld [vmem:[#allocation13 + $0x110] sm:$0xff]
          %v3210 = vld [vmem:[#allocation13 + $0x118] sm:$0xff]
          %v3211 = vld [vmem:[#allocation13 + $0x120] sm:$0xff]
          %v3212 = vld [vmem:[#allocation13 + $0x128] sm:$0xff]
          %v3213 = vld [vmem:[#allocation13 + $0x130] sm:$0xff]
          %v3214 = vld [vmem:[#allocation13 + $0x138] sm:$0xff]
          %v3215 = vld [vmem:[#allocation13 + $0x140] sm:$0xff]
          %v3216 = vld [vmem:[#allocation13 + $0x148] sm:$0xff]
          %v3217 = vld [vmem:[#allocation13 + $0x150] sm:$0xff]
          %v3218 = vld [vmem:[#allocation13 + $0x158] sm:$0xff]
          %v3219 = vld [vmem:[#allocation13 + $0x160] sm:$0xff]
          %v3220 = vld [vmem:[#allocation13 + $0x168] sm:$0xff]
          %v3221 = vld [vmem:[#allocation13 + $0x170] sm:$0xff]
          %v3222 = vld [vmem:[#allocation13 + $0x178] sm:$0xff]
          %v3223 = vld [vmem:[#allocation13 + $0x180] sm:$0xff]
          %v3224 = vld [vmem:[#allocation13 + $0x188] sm:$0xff]
          %v3225 = vld [vmem:[#allocation13 + $0x190] sm:$0xff]
          %v3226 = vld [vmem:[#allocation13 + $0x198] sm:$0xff]
          %v3227 = vld [vmem:[#allocation13 + $0x1a0] sm:$0xff]
          %v3228 = vld [vmem:[#allocation13 + $0x1a8] sm:$0xff]
          %v3229 = vld [vmem:[#allocation13 + $0x1b0] sm:$0xff]
          %v3230 = vld [vmem:[#allocation13 + $0x1b8] sm:$0xff]
          %v3231 = vld [vmem:[#allocation13 + $0x1c0] sm:$0xff]
          %v3232 = vld [vmem:[#allocation13 + $0x1c8] sm:$0xff]
          %v3233 = vld [vmem:[#allocation13 + $0x1d0] sm:$0xff]
          %v3234 = vld [vmem:[#allocation13 + $0x1d8] sm:$0xff]
          %v3235 = vld [vmem:[#allocation13 + $0x1e0] sm:$0xff]
          %v3236 = vld [vmem:[#allocation13 + $0x1e8] sm:$0xff]
          %v3237 = vld [vmem:[#allocation13 + $0x1f0] sm:$0xff]
          %v3238 = vld [vmem:[#allocation13 + $0x1f8] sm:$0xff]
          %v3239 = vld [vmem:[#allocation13 + $0x200] sm:$0xff]
          %v3240 = vld [vmem:[#allocation13 + $0x208] sm:$0xff]
          %v3241 = vld [vmem:[#allocation13 + $0x210] sm:$0xff]
          %v3242 = vld [vmem:[#allocation13 + $0x218] sm:$0xff]
          %v3243 = vld [vmem:[#allocation13 + $0x220] sm:$0xff]
          %v3244 = vld [vmem:[#allocation13 + $0x228] sm:$0xff]
          %v3245 = vld [vmem:[#allocation13 + $0x230] sm:$0xff]
          %v3246 = vld [vmem:[#allocation13 + $0x238] sm:$0xff]
          %v3247 = vld [vmem:[#allocation13 + $0x240] sm:$0xff]
          %v3248 = vld [vmem:[#allocation13 + $0x248] sm:$0xff]
          %v3249 = vld [vmem:[#allocation13 + $0x250] sm:$0xff]
          %v3250 = vld [vmem:[#allocation13 + $0x258] sm:$0xff]
          %v3251 = vld [vmem:[#allocation13 + $0x260] sm:$0xff]
          %v3252 = vld [vmem:[#allocation13 + $0x268] sm:$0xff]
          %v3253 = vld [vmem:[#allocation13 + $0x270] sm:$0xff]
          %v3254 = vld [vmem:[#allocation13 + $0x278] sm:$0xff]
          %v3255 = vld [vmem:[#allocation13 + $0x280] sm:$0xff]
          %v3256 = vld [vmem:[#allocation13 + $0x288] sm:$0xff]
          %v3257 = vld [vmem:[#allocation13 + $0x290] sm:$0xff]
          %v3258 = vld [vmem:[#allocation13 + $0x298] sm:$0xff]
          %v3259 = vld [vmem:[#allocation13 + $0x2a0] sm:$0xff]
          %v3260 = vld [vmem:[#allocation13 + $0x2a8] sm:$0xff]
          %v3261 = vld [vmem:[#allocation13 + $0x2b0] sm:$0xff]
          %v3262 = vld [vmem:[#allocation13 + $0x2b8] sm:$0xff]
          %v3263 = vld [vmem:[#allocation13 + $0x2c0] sm:$0xff]
          %v3264 = vld [vmem:[#allocation13 + $0x2c8] sm:$0xff]
          %v3265 = vld [vmem:[#allocation13 + $0x2d0] sm:$0xff]
          %v3266 = vld [vmem:[#allocation13 + $0x2d8] sm:$0xff]
          %v3267 = vld [vmem:[#allocation13 + $0x2e0] sm:$0xff]
          %v3268 = vld [vmem:[#allocation13 + $0x2e8] sm:$0xff]
          %v3269 = vld [vmem:[#allocation13 + $0x2f0] sm:$0xff]
          %v3270 = vld [vmem:[#allocation13 + $0x2f8] sm:$0xff]
          %v3271 = vld [vmem:[#allocation13 + $0x300] sm:$0xff]
          %v3272 = vld [vmem:[#allocation13 + $0x308] sm:$0xff]
          %v3273 = vld [vmem:[#allocation13 + $0x310] sm:$0xff]
          %v3274 = vld [vmem:[#allocation13 + $0x318] sm:$0xff]
          %v3275 = vld [vmem:[#allocation13 + $0x320] sm:$0xff]
          %v3276 = vld [vmem:[#allocation13 + $0x328] sm:$0xff]
          %v3277 = vld [vmem:[#allocation13 + $0x330] sm:$0xff]
          %v3278 = vld [vmem:[#allocation13 + $0x338] sm:$0xff]
          %v3279 = vld [vmem:[#allocation13 + $0x340] sm:$0xff]
          %v3280 = vld [vmem:[#allocation13 + $0x348] sm:$0xff]
          %v3281 = vld [vmem:[#allocation13 + $0x350] sm:$0xff]
          %v3282 = vld [vmem:[#allocation13 + $0x358] sm:$0xff]
          %v3283 = vld [vmem:[#allocation13 + $0x360] sm:$0xff]
          %v3284 = vld [vmem:[#allocation13 + $0x368] sm:$0xff]
          %v3285 = vld [vmem:[#allocation13 + $0x370] sm:$0xff]
          %v3286 = vld [vmem:[#allocation13 + $0x378] sm:$0xff]
          %v3287 = vld [vmem:[#allocation13 + $0x380] sm:$0xff]
          %v3288 = vld [vmem:[#allocation13 + $0x388] sm:$0xff]
          %v3289 = vld [vmem:[#allocation13 + $0x390] sm:$0xff]
          %v3290 = vld [vmem:[#allocation13 + $0x398] sm:$0xff]
          %v3291 = vld [vmem:[#allocation13 + $0x3a0] sm:$0xff]
          %v3292 = vld [vmem:[#allocation13 + $0x3a8] sm:$0xff]
          %v3293 = vld [vmem:[#allocation13 + $0x3b0] sm:$0xff]
          %v3294 = vld [vmem:[#allocation13 + $0x3b8] sm:$0xff]
          %v3295 = vld [vmem:[#allocation13 + $0x3c0] sm:$0xff]
          %v3296 = vld [vmem:[#allocation13 + $0x3c8] sm:$0xff]
          %v3297 = vld [vmem:[#allocation13 + $0x3d0] sm:$0xff]
          %v3298 = vld [vmem:[#allocation13 + $0x3d8] sm:$0xff]
          %v3299 = vld [vmem:[#allocation13 + $0x3e0] sm:$0xff]
          %v3300 = vld [vmem:[#allocation13 + $0x3e8] sm:$0xff]
          %v3301 = vld [vmem:[#allocation13 + $0x3f0] sm:$0xff]
          %v3302 = vld [vmem:[#allocation13 + $0x3f8] sm:$0xff]
          %v3303 = vld [vmem:[#allocation13 + $0x400] sm:$0xff]
          %v3304 = vld [vmem:[#allocation13 + $0x408] sm:$0xff]
          %v3305 = vld [vmem:[#allocation13 + $0x410] sm:$0xff]
          %v3306 = vld [vmem:[#allocation13 + $0x418] sm:$0xff]
          %v3307 = vld [vmem:[#allocation13 + $0x420] sm:$0xff]
          %v3308 = vld [vmem:[#allocation13 + $0x428] sm:$0xff]
          %v3309 = vld [vmem:[#allocation13 + $0x430] sm:$0xff]
          %v3310 = vld [vmem:[#allocation13 + $0x438] sm:$0xff]
          %v3311 = vld [vmem:[#allocation13 + $0x440] sm:$0xff]
          %v3312 = vld [vmem:[#allocation13 + $0x448] sm:$0xff]
          %v3313 = vld [vmem:[#allocation13 + $0x450] sm:$0xff]
          %v3314 = vld [vmem:[#allocation13 + $0x458] sm:$0xff]
          %v3315 = vld [vmem:[#allocation13 + $0x460] sm:$0xff]
          %v3316 = vld [vmem:[#allocation13 + $0x468] sm:$0xff]
          %v3317 = vld [vmem:[#allocation13 + $0x470] sm:$0xff]
          %v3318 = vld [vmem:[#allocation13 + $0x478] sm:$0xff]
          %v3319 = vld [vmem:[#allocation13 + $0x480] sm:$0xff]
          %v3320 = vld [vmem:[#allocation13 + $0x488] sm:$0xff]
          %v3321 = vld [vmem:[#allocation13 + $0x490] sm:$0xff]
          %v3322 = vld [vmem:[#allocation13 + $0x498] sm:$0xff]
          %v3323 = vld [vmem:[#allocation13 + $0x4a0] sm:$0xff]
          %v3324 = vld [vmem:[#allocation13 + $0x4a8] sm:$0xff]
          %v3325 = vld [vmem:[#allocation13 + $0x4b0] sm:$0xff]
          %v3326 = vld [vmem:[#allocation13 + $0x4b8] sm:$0xff]
          %v3327 = vld [vmem:[#allocation13 + $0x4c0] sm:$0xff]
          %v3328 = vld [vmem:[#allocation13 + $0x4c8] sm:$0xff]
          %v3329 = vld [vmem:[#allocation13 + $0x4d0] sm:$0xff]
          %v3330 = vld [vmem:[#allocation13 + $0x4d8] sm:$0xff]
          %v3331 = vld [vmem:[#allocation13 + $0x4e0] sm:$0xff]
          %v3332 = vld [vmem:[#allocation13 + $0x4e8] sm:$0xff]
          %v3333 = vld [vmem:[#allocation13 + $0x4f0] sm:$0xff]
          %v3334 = vld [vmem:[#allocation13 + $0x4f8] sm:$0xff]
          %v3335 = vld [vmem:[#allocation13 + $0x500] sm:$0xff]
          %v3336 = vld [vmem:[#allocation13 + $0x508] sm:$0xff]
          %v3337 = vld [vmem:[#allocation13 + $0x510] sm:$0xff]
          %v3338 = vld [vmem:[#allocation13 + $0x518] sm:$0xff]
          %v3339 = vld [vmem:[#allocation13 + $0x520] sm:$0xff]
          %v3340 = vld [vmem:[#allocation13 + $0x528] sm:$0xff]
          %v3341 = vld [vmem:[#allocation13 + $0x530] sm:$0xff]
          %v3342 = vld [vmem:[#allocation13 + $0x538] sm:$0xff]
          %v3343 = vld [vmem:[#allocation13 + $0x540] sm:$0xff]
          %v3344 = vld [vmem:[#allocation13 + $0x548] sm:$0xff]
          %v3345 = vld [vmem:[#allocation13 + $0x550] sm:$0xff]
          %v3346 = vld [vmem:[#allocation13 + $0x558] sm:$0xff]
          %v3347 = vld [vmem:[#allocation13 + $0x560] sm:$0xff]
          %v3348 = vld [vmem:[#allocation13 + $0x568] sm:$0xff]
          %v3349 = vld [vmem:[#allocation13 + $0x570] sm:$0xff]
          %v3350 = vld [vmem:[#allocation13 + $0x578] sm:$0xff]
          %v3351 = vld [vmem:[#allocation13 + $0x580] sm:$0xff]
          %v3352 = vld [vmem:[#allocation13 + $0x588] sm:$0xff]
          %v3353 = vld [vmem:[#allocation13 + $0x590] sm:$0xff]
          %v3354 = vld [vmem:[#allocation13 + $0x598] sm:$0xff]
          %v3355 = vld [vmem:[#allocation13 + $0x5a0] sm:$0xff]
          %v3356 = vld [vmem:[#allocation13 + $0x5a8] sm:$0xff]
          %v3357 = vld [vmem:[#allocation13 + $0x5b0] sm:$0xff]
          %v3358 = vld [vmem:[#allocation13 + $0x5b8] sm:$0xff]
          %v3359 = vld [vmem:[#allocation13 + $0x5c0] sm:$0xff]
          %v3360 = vld [vmem:[#allocation13 + $0x5c8] sm:$0xff]
          %v3361 = vld [vmem:[#allocation13 + $0x5d0] sm:$0xff]
          %v3362 = vld [vmem:[#allocation13 + $0x5d8] sm:$0xff]
          %v3363 = vld [vmem:[#allocation13 + $0x5e0] sm:$0xff]
          %v3364 = vld [vmem:[#allocation13 + $0x5e8] sm:$0xff]
          %v3365 = vld [vmem:[#allocation13 + $0x5f0] sm:$0xff]
          %v3366 = vld [vmem:[#allocation13 + $0x5f8] sm:$0xff]
          %v3367 = vld [vmem:[#allocation13 + $0x600] sm:$0xff]
          %v3368 = vld [vmem:[#allocation13 + $0x608] sm:$0xff]
          %v3369 = vld [vmem:[#allocation13 + $0x610] sm:$0xff]
          %v3370 = vld [vmem:[#allocation13 + $0x618] sm:$0xff]
          %v3371 = vld [vmem:[#allocation13 + $0x620] sm:$0xff]
          %v3372 = vld [vmem:[#allocation13 + $0x628] sm:$0xff]
          %v3373 = vld [vmem:[#allocation13 + $0x630] sm:$0xff]
          %v3374 = vld [vmem:[#allocation13 + $0x638] sm:$0xff]
          %v3375 = vld [vmem:[#allocation13 + $0x640] sm:$0xff]
          %v3376 = vld [vmem:[#allocation13 + $0x648] sm:$0xff]
          %v3377 = vld [vmem:[#allocation13 + $0x650] sm:$0xff]
          %v3378 = vld [vmem:[#allocation13 + $0x658] sm:$0xff]
          %v3379 = vld [vmem:[#allocation13 + $0x660] sm:$0xff]
          %v3380 = vld [vmem:[#allocation13 + $0x668] sm:$0xff]
          %v3381 = vld [vmem:[#allocation13 + $0x670] sm:$0xff]
          %v3382 = vld [vmem:[#allocation13 + $0x678] sm:$0xff]
          %v3383 = vld [vmem:[#allocation13 + $0x680] sm:$0xff]
          %v3384 = vld [vmem:[#allocation13 + $0x688] sm:$0xff]
          %v3385 = vld [vmem:[#allocation13 + $0x690] sm:$0xff]
          %v3386 = vld [vmem:[#allocation13 + $0x698] sm:$0xff]
          %v3387 = vld [vmem:[#allocation13 + $0x6a0] sm:$0xff]
          %v3388 = vld [vmem:[#allocation13 + $0x6a8] sm:$0xff]
          %v3389 = vld [vmem:[#allocation13 + $0x6b0] sm:$0xff]
          %v3390 = vld [vmem:[#allocation13 + $0x6b8] sm:$0xff]
          %v3391 = vld [vmem:[#allocation13 + $0x6c0] sm:$0xff]
          %v3392 = vld [vmem:[#allocation13 + $0x6c8] sm:$0xff]
          %v3393 = vld [vmem:[#allocation13 + $0x6d0] sm:$0xff]
          %v3394 = vld [vmem:[#allocation13 + $0x6d8] sm:$0xff]
          %v3395 = vld [vmem:[#allocation13 + $0x6e0] sm:$0xff]
          %v3396 = vld [vmem:[#allocation13 + $0x6e8] sm:$0xff]
          %v3397 = vld [vmem:[#allocation13 + $0x6f0] sm:$0xff]
          %v3398 = vld [vmem:[#allocation13 + $0x6f8] sm:$0xff]
          %v3399 = vld [vmem:[#allocation13 + $0x700] sm:$0xff]
          %v3400 = vld [vmem:[#allocation13 + $0x708] sm:$0xff]
          %v3401 = vld [vmem:[#allocation13 + $0x710] sm:$0xff]
          %v3402 = vld [vmem:[#allocation13 + $0x718] sm:$0xff]
          %v3403 = vld [vmem:[#allocation13 + $0x720] sm:$0xff]
          %v3404 = vld [vmem:[#allocation13 + $0x728] sm:$0xff]
          %v3405 = vld [vmem:[#allocation13 + $0x730] sm:$0xff]
          %v3406 = vld [vmem:[#allocation13 + $0x738] sm:$0xff]
          %v3407 = vld [vmem:[#allocation13 + $0x740] sm:$0xff]
          %v3408 = vld [vmem:[#allocation13 + $0x748] sm:$0xff]
          %v3409 = vld [vmem:[#allocation13 + $0x750] sm:$0xff]
          %v3410 = vld [vmem:[#allocation13 + $0x758] sm:$0xff]
          %v3411 = vld [vmem:[#allocation13 + $0x760] sm:$0xff]
          %v3412 = vld [vmem:[#allocation13 + $0x768] sm:$0xff]
          %v3413 = vld [vmem:[#allocation13 + $0x770] sm:$0xff]
          %v3414 = vld [vmem:[#allocation13 + $0x778] sm:$0xff]
          %v3415 = vld [vmem:[#allocation13 + $0x780] sm:$0xff]
          %v3416 = vld [vmem:[#allocation13 + $0x788] sm:$0xff]
          %v3417 = vld [vmem:[#allocation13 + $0x790] sm:$0xff]
          %v3418 = vld [vmem:[#allocation13 + $0x798] sm:$0xff]
          %v3419 = vld [vmem:[#allocation13 + $0x7a0] sm:$0xff]
          %v3420 = vld [vmem:[#allocation13 + $0x7a8] sm:$0xff]
          %v3421 = vld [vmem:[#allocation13 + $0x7b0] sm:$0xff]
          %v3422 = vld [vmem:[#allocation13 + $0x7b8] sm:$0xff]
          %v3423 = vld [vmem:[#allocation13 + $0x7c0] sm:$0xff]
          %v3424 = vld [vmem:[#allocation13 + $0x7c8] sm:$0xff]
          %v3425 = vld [vmem:[#allocation13 + $0x7d0] sm:$0xff]
          %v3426 = vld [vmem:[#allocation13 + $0x7d8] sm:$0xff]
          %v3427 = vld [vmem:[#allocation13 + $0x7e0] sm:$0xff]
          %v3428 = vld [vmem:[#allocation13 + $0x7e8] sm:$0xff]
          %v3429 = vld [vmem:[#allocation13 + $0x7f0] sm:$0xff]
          %v3430 = vld [vmem:[#allocation13 + $0x7f8] sm:$0xff]
          %v3431 = vld [vmem:[#allocation15] sm:$0xf]
          %v3433 = vlaneseq
          %v3434 = vshrl.u32 %v3433, 7
          %v3435 = vsub.s32 0, %v3434
          %v3436 = vrot.slane %v3431, %v3435
          %v3437 = vlaneseq
          %v3438 = vshrl.u32 %v3437, 7
          %v3439 = vsub.s32 1, %v3438
          %v3440 = vrot.slane %v3431, %v3439
          %v3441 = vlaneseq
          %v3442 = vshrl.u32 %v3441, 7
          %v3443 = vsub.s32 2, %v3442
          %v3444 = vrot.slane %v3431, %v3443
          %v3445 = vlaneseq
          %v3446 = vshrl.u32 %v3445, 7
          %v3447 = vsub.s32 3, %v3446
          %v3448 = vrot.slane %v3431, %v3447
          %v3709 = vunpack.c.l.b16 %v3175
          %v3710 = vunpack.c.h.b16 %v3175
          %v3711 = vunpack.c.l.b16 %v3176
          %v3712 = vunpack.c.h.b16 %v3176
          %v3713 = vunpack.c.l.b16 %v3177
          %v3714 = vunpack.c.h.b16 %v3177
          %v3715 = vunpack.c.l.b16 %v3178
          %v3716 = vunpack.c.h.b16 %v3178
          %v3717 = vunpack.c.l.b16 %v3179
          %v3718 = vunpack.c.h.b16 %v3179
          %v3719 = vunpack.c.l.b16 %v3180
          %v3720 = vunpack.c.h.b16 %v3180
          %v3721 = vunpack.c.l.b16 %v3181
          %v3722 = vunpack.c.h.b16 %v3181
          %v3723 = vunpack.c.l.b16 %v3182
          %v3724 = vunpack.c.h.b16 %v3182
          %v3725 = vunpack.c.l.b16 %v3183
          %v3726 = vunpack.c.h.b16 %v3183
          %v3727 = vunpack.c.l.b16 %v3184
          %v3728 = vunpack.c.h.b16 %v3184
          %v3729 = vunpack.c.l.b16 %v3185
          %v3730 = vunpack.c.h.b16 %v3185
          %v3731 = vunpack.c.l.b16 %v3186
          %v3732 = vunpack.c.h.b16 %v3186
          %v3733 = vunpack.c.l.b16 %v3187
          %v3734 = vunpack.c.h.b16 %v3187
          %v3735 = vunpack.c.l.b16 %v3188
          %v3736 = vunpack.c.h.b16 %v3188
          %v3737 = vunpack.c.l.b16 %v3189
          %v3738 = vunpack.c.h.b16 %v3189
          %v3739 = vunpack.c.l.b16 %v3190
          %v3740 = vunpack.c.h.b16 %v3190
          %v3741 = vunpack.c.l.b16 %v3191
          %v3742 = vunpack.c.h.b16 %v3191
          %v3743 = vunpack.c.l.b16 %v3192
          %v3744 = vunpack.c.h.b16 %v3192
          %v3745 = vunpack.c.l.b16 %v3193
          %v3746 = vunpack.c.h.b16 %v3193
          %v3747 = vunpack.c.l.b16 %v3194
          %v3748 = vunpack.c.h.b16 %v3194
          %v3749 = vunpack.c.l.b16 %v3195
          %v3750 = vunpack.c.h.b16 %v3195
          %v3751 = vunpack.c.l.b16 %v3196
          %v3752 = vunpack.c.h.b16 %v3196
          %v3753 = vunpack.c.l.b16 %v3197
          %v3754 = vunpack.c.h.b16 %v3197
          %v3755 = vunpack.c.l.b16 %v3198
          %v3756 = vunpack.c.h.b16 %v3198
          %v3757 = vunpack.c.l.b16 %v3199
          %v3758 = vunpack.c.h.b16 %v3199
          %v3759 = vunpack.c.l.b16 %v3200
          %v3760 = vunpack.c.h.b16 %v3200
          %v3761 = vunpack.c.l.b16 %v3201
          %v3762 = vunpack.c.h.b16 %v3201
          %v3763 = vunpack.c.l.b16 %v3202
          %v3764 = vunpack.c.h.b16 %v3202
          %v3765 = vunpack.c.l.b16 %v3203
          %v3766 = vunpack.c.h.b16 %v3203
          %v3767 = vunpack.c.l.b16 %v3204
          %v3768 = vunpack.c.h.b16 %v3204
          %v3769 = vunpack.c.l.b16 %v3205
          %v3770 = vunpack.c.h.b16 %v3205
          %v3771 = vunpack.c.l.b16 %v3206
          %v3772 = vunpack.c.h.b16 %v3206
          %v3773 = vunpack.c.l.b16 %v3207
          %v3774 = vunpack.c.h.b16 %v3207
          %v3775 = vunpack.c.l.b16 %v3208
          %v3776 = vunpack.c.h.b16 %v3208
          %v3777 = vunpack.c.l.b16 %v3209
          %v3778 = vunpack.c.h.b16 %v3209
          %v3779 = vunpack.c.l.b16 %v3210
          %v3780 = vunpack.c.h.b16 %v3210
          %v3781 = vunpack.c.l.b16 %v3211
          %v3782 = vunpack.c.h.b16 %v3211
          %v3783 = vunpack.c.l.b16 %v3212
          %v3784 = vunpack.c.h.b16 %v3212
          %v3785 = vunpack.c.l.b16 %v3213
          %v3786 = vunpack.c.h.b16 %v3213
          %v3787 = vunpack.c.l.b16 %v3214
          %v3788 = vunpack.c.h.b16 %v3214
          %v3789 = vunpack.c.l.b16 %v3215
          %v3790 = vunpack.c.h.b16 %v3215
          %v3791 = vunpack.c.l.b16 %v3216
          %v3792 = vunpack.c.h.b16 %v3216
          %v3793 = vunpack.c.l.b16 %v3217
          %v3794 = vunpack.c.h.b16 %v3217
          %v3795 = vunpack.c.l.b16 %v3218
          %v3796 = vunpack.c.h.b16 %v3218
          %v3797 = vunpack.c.l.b16 %v3219
          %v3798 = vunpack.c.h.b16 %v3219
          %v3799 = vunpack.c.l.b16 %v3220
          %v3800 = vunpack.c.h.b16 %v3220
          %v3801 = vunpack.c.l.b16 %v3221
          %v3802 = vunpack.c.h.b16 %v3221
          %v3803 = vunpack.c.l.b16 %v3222
          %v3804 = vunpack.c.h.b16 %v3222
          %v3805 = vunpack.c.l.b16 %v3223
          %v3806 = vunpack.c.h.b16 %v3223
          %v3807 = vunpack.c.l.b16 %v3224
          %v3808 = vunpack.c.h.b16 %v3224
          %v3809 = vunpack.c.l.b16 %v3225
          %v3810 = vunpack.c.h.b16 %v3225
          %v3811 = vunpack.c.l.b16 %v3226
          %v3812 = vunpack.c.h.b16 %v3226
          %v3813 = vunpack.c.l.b16 %v3227
          %v3814 = vunpack.c.h.b16 %v3227
          %v3815 = vunpack.c.l.b16 %v3228
          %v3816 = vunpack.c.h.b16 %v3228
          %v3817 = vunpack.c.l.b16 %v3229
          %v3818 = vunpack.c.h.b16 %v3229
          %v3819 = vunpack.c.l.b16 %v3230
          %v3820 = vunpack.c.h.b16 %v3230
          %v3821 = vunpack.c.l.b16 %v3231
          %v3822 = vunpack.c.h.b16 %v3231
          %v3823 = vunpack.c.l.b16 %v3232
          %v3824 = vunpack.c.h.b16 %v3232
          %v3825 = vunpack.c.l.b16 %v3233
          %v3826 = vunpack.c.h.b16 %v3233
          %v3827 = vunpack.c.l.b16 %v3234
          %v3828 = vunpack.c.h.b16 %v3234
          %v3829 = vunpack.c.l.b16 %v3235
          %v3830 = vunpack.c.h.b16 %v3235
          %v3831 = vunpack.c.l.b16 %v3236
          %v3832 = vunpack.c.h.b16 %v3236
          %v3833 = vunpack.c.l.b16 %v3237
          %v3834 = vunpack.c.h.b16 %v3237
          %v3835 = vunpack.c.l.b16 %v3238
          %v3836 = vunpack.c.h.b16 %v3238
          %v3837 = vunpack.c.l.b16 %v3239
          %v3838 = vunpack.c.h.b16 %v3239
          %v3839 = vunpack.c.l.b16 %v3240
          %v3840 = vunpack.c.h.b16 %v3240
          %v3841 = vunpack.c.l.b16 %v3241
          %v3842 = vunpack.c.h.b16 %v3241
          %v3843 = vunpack.c.l.b16 %v3242
          %v3844 = vunpack.c.h.b16 %v3242
          %v3845 = vunpack.c.l.b16 %v3243
          %v3846 = vunpack.c.h.b16 %v3243
          %v3847 = vunpack.c.l.b16 %v3244
          %v3848 = vunpack.c.h.b16 %v3244
          %v3849 = vunpack.c.l.b16 %v3245
          %v3850 = vunpack.c.h.b16 %v3245
          %v3851 = vunpack.c.l.b16 %v3246
          %v3852 = vunpack.c.h.b16 %v3246
          %v3853 = vunpack.c.l.b16 %v3247
          %v3854 = vunpack.c.h.b16 %v3247
          %v3855 = vunpack.c.l.b16 %v3248
          %v3856 = vunpack.c.h.b16 %v3248
          %v3857 = vunpack.c.l.b16 %v3249
          %v3858 = vunpack.c.h.b16 %v3249
          %v3859 = vunpack.c.l.b16 %v3250
          %v3860 = vunpack.c.h.b16 %v3250
          %v3861 = vunpack.c.l.b16 %v3251
          %v3862 = vunpack.c.h.b16 %v3251
          %v3863 = vunpack.c.l.b16 %v3252
          %v3864 = vunpack.c.h.b16 %v3252
          %v3865 = vunpack.c.l.b16 %v3253
          %v3866 = vunpack.c.h.b16 %v3253
          %v3867 = vunpack.c.l.b16 %v3254
          %v3868 = vunpack.c.h.b16 %v3254
          %v3869 = vunpack.c.l.b16 %v3255
          %v3870 = vunpack.c.h.b16 %v3255
          %v3871 = vunpack.c.l.b16 %v3256
          %v3872 = vunpack.c.h.b16 %v3256
          %v3873 = vunpack.c.l.b16 %v3257
          %v3874 = vunpack.c.h.b16 %v3257
          %v3875 = vunpack.c.l.b16 %v3258
          %v3876 = vunpack.c.h.b16 %v3258
          %v3877 = vunpack.c.l.b16 %v3259
          %v3878 = vunpack.c.h.b16 %v3259
          %v3879 = vunpack.c.l.b16 %v3260
          %v3880 = vunpack.c.h.b16 %v3260
          %v3881 = vunpack.c.l.b16 %v3261
          %v3882 = vunpack.c.h.b16 %v3261
          %v3883 = vunpack.c.l.b16 %v3262
          %v3884 = vunpack.c.h.b16 %v3262
          %v3885 = vunpack.c.l.b16 %v3263
          %v3886 = vunpack.c.h.b16 %v3263
          %v3887 = vunpack.c.l.b16 %v3264
          %v3888 = vunpack.c.h.b16 %v3264
          %v3889 = vunpack.c.l.b16 %v3265
          %v3890 = vunpack.c.h.b16 %v3265
          %v3891 = vunpack.c.l.b16 %v3266
          %v3892 = vunpack.c.h.b16 %v3266
          %v3893 = vunpack.c.l.b16 %v3267
          %v3894 = vunpack.c.h.b16 %v3267
          %v3895 = vunpack.c.l.b16 %v3268
          %v3896 = vunpack.c.h.b16 %v3268
          %v3897 = vunpack.c.l.b16 %v3269
          %v3898 = vunpack.c.h.b16 %v3269
          %v3899 = vunpack.c.l.b16 %v3270
          %v3900 = vunpack.c.h.b16 %v3270
          %v3901 = vunpack.c.l.b16 %v3271
          %v3902 = vunpack.c.h.b16 %v3271
          %v3903 = vunpack.c.l.b16 %v3272
          %v3904 = vunpack.c.h.b16 %v3272
          %v3905 = vunpack.c.l.b16 %v3273
          %v3906 = vunpack.c.h.b16 %v3273
          %v3907 = vunpack.c.l.b16 %v3274
          %v3908 = vunpack.c.h.b16 %v3274
          %v3909 = vunpack.c.l.b16 %v3275
          %v3910 = vunpack.c.h.b16 %v3275
          %v3911 = vunpack.c.l.b16 %v3276
          %v3912 = vunpack.c.h.b16 %v3276
          %v3913 = vunpack.c.l.b16 %v3277
          %v3914 = vunpack.c.h.b16 %v3277
          %v3915 = vunpack.c.l.b16 %v3278
          %v3916 = vunpack.c.h.b16 %v3278
          %v3917 = vunpack.c.l.b16 %v3279
          %v3918 = vunpack.c.h.b16 %v3279
          %v3919 = vunpack.c.l.b16 %v3280
          %v3920 = vunpack.c.h.b16 %v3280
          %v3921 = vunpack.c.l.b16 %v3281
          %v3922 = vunpack.c.h.b16 %v3281
          %v3923 = vunpack.c.l.b16 %v3282
          %v3924 = vunpack.c.h.b16 %v3282
          %v3925 = vunpack.c.l.b16 %v3283
          %v3926 = vunpack.c.h.b16 %v3283
          %v3927 = vunpack.c.l.b16 %v3284
          %v3928 = vunpack.c.h.b16 %v3284
          %v3929 = vunpack.c.l.b16 %v3285
          %v3930 = vunpack.c.h.b16 %v3285
          %v3931 = vunpack.c.l.b16 %v3286
          %v3932 = vunpack.c.h.b16 %v3286
          %v3933 = vunpack.c.l.b16 %v3287
          %v3934 = vunpack.c.h.b16 %v3287
          %v3935 = vunpack.c.l.b16 %v3288
          %v3936 = vunpack.c.h.b16 %v3288
          %v3937 = vunpack.c.l.b16 %v3289
          %v3938 = vunpack.c.h.b16 %v3289
          %v3939 = vunpack.c.l.b16 %v3290
          %v3940 = vunpack.c.h.b16 %v3290
          %v3941 = vunpack.c.l.b16 %v3291
          %v3942 = vunpack.c.h.b16 %v3291
          %v3943 = vunpack.c.l.b16 %v3292
          %v3944 = vunpack.c.h.b16 %v3292
          %v3945 = vunpack.c.l.b16 %v3293
          %v3946 = vunpack.c.h.b16 %v3293
          %v3947 = vunpack.c.l.b16 %v3294
          %v3948 = vunpack.c.h.b16 %v3294
          %v3949 = vunpack.c.l.b16 %v3295
          %v3950 = vunpack.c.h.b16 %v3295
          %v3951 = vunpack.c.l.b16 %v3296
          %v3952 = vunpack.c.h.b16 %v3296
          %v3953 = vunpack.c.l.b16 %v3297
          %v3954 = vunpack.c.h.b16 %v3297
          %v3955 = vunpack.c.l.b16 %v3298
          %v3956 = vunpack.c.h.b16 %v3298
          %v3957 = vunpack.c.l.b16 %v3299
          %v3958 = vunpack.c.h.b16 %v3299
          %v3959 = vunpack.c.l.b16 %v3300
          %v3960 = vunpack.c.h.b16 %v3300
          %v3961 = vunpack.c.l.b16 %v3301
          %v3962 = vunpack.c.h.b16 %v3301
          %v3963 = vunpack.c.l.b16 %v3302
          %v3964 = vunpack.c.h.b16 %v3302
          %v3965 = vunpack.c.l.b16 %v3303
          %v3966 = vunpack.c.h.b16 %v3303
          %v3967 = vunpack.c.l.b16 %v3304
          %v3968 = vunpack.c.h.b16 %v3304
          %v3969 = vunpack.c.l.b16 %v3305
          %v3970 = vunpack.c.h.b16 %v3305
          %v3971 = vunpack.c.l.b16 %v3306
          %v3972 = vunpack.c.h.b16 %v3306
          %v3973 = vunpack.c.l.b16 %v3307
          %v3974 = vunpack.c.h.b16 %v3307
          %v3975 = vunpack.c.l.b16 %v3308
          %v3976 = vunpack.c.h.b16 %v3308
          %v3977 = vunpack.c.l.b16 %v3309
          %v3978 = vunpack.c.h.b16 %v3309
          %v3979 = vunpack.c.l.b16 %v3310
          %v3980 = vunpack.c.h.b16 %v3310
          %v3981 = vunpack.c.l.b16 %v3311
          %v3982 = vunpack.c.h.b16 %v3311
          %v3983 = vunpack.c.l.b16 %v3312
          %v3984 = vunpack.c.h.b16 %v3312
          %v3985 = vunpack.c.l.b16 %v3313
          %v3986 = vunpack.c.h.b16 %v3313
          %v3987 = vunpack.c.l.b16 %v3314
          %v3988 = vunpack.c.h.b16 %v3314
          %v3989 = vunpack.c.l.b16 %v3315
          %v3990 = vunpack.c.h.b16 %v3315
          %v3991 = vunpack.c.l.b16 %v3316
          %v3992 = vunpack.c.h.b16 %v3316
          %v3993 = vunpack.c.l.b16 %v3317
          %v3994 = vunpack.c.h.b16 %v3317
          %v3995 = vunpack.c.l.b16 %v3318
          %v3996 = vunpack.c.h.b16 %v3318
          %v3997 = vunpack.c.l.b16 %v3319
          %v3998 = vunpack.c.h.b16 %v3319
          %v3999 = vunpack.c.l.b16 %v3320
          %v4000 = vunpack.c.h.b16 %v3320
          %v4001 = vunpack.c.l.b16 %v3321
          %v4002 = vunpack.c.h.b16 %v3321
          %v4003 = vunpack.c.l.b16 %v3322
          %v4004 = vunpack.c.h.b16 %v3322
          %v4005 = vunpack.c.l.b16 %v3323
          %v4006 = vunpack.c.h.b16 %v3323
          %v4007 = vunpack.c.l.b16 %v3324
          %v4008 = vunpack.c.h.b16 %v3324
          %v4009 = vunpack.c.l.b16 %v3325
          %v4010 = vunpack.c.h.b16 %v3325
          %v4011 = vunpack.c.l.b16 %v3326
          %v4012 = vunpack.c.h.b16 %v3326
          %v4013 = vunpack.c.l.b16 %v3327
          %v4014 = vunpack.c.h.b16 %v3327
          %v4015 = vunpack.c.l.b16 %v3328
          %v4016 = vunpack.c.h.b16 %v3328
          %v4017 = vunpack.c.l.b16 %v3329
          %v4018 = vunpack.c.h.b16 %v3329
          %v4019 = vunpack.c.l.b16 %v3330
          %v4020 = vunpack.c.h.b16 %v3330
          %v4021 = vunpack.c.l.b16 %v3331
          %v4022 = vunpack.c.h.b16 %v3331
          %v4023 = vunpack.c.l.b16 %v3332
          %v4024 = vunpack.c.h.b16 %v3332
          %v4025 = vunpack.c.l.b16 %v3333
          %v4026 = vunpack.c.h.b16 %v3333
          %v4027 = vunpack.c.l.b16 %v3334
          %v4028 = vunpack.c.h.b16 %v3334
          %v4029 = vunpack.c.l.b16 %v3335
          %v4030 = vunpack.c.h.b16 %v3335
          %v4031 = vunpack.c.l.b16 %v3336
          %v4032 = vunpack.c.h.b16 %v3336
          %v4033 = vunpack.c.l.b16 %v3337
          %v4034 = vunpack.c.h.b16 %v3337
          %v4035 = vunpack.c.l.b16 %v3338
          %v4036 = vunpack.c.h.b16 %v3338
          %v4037 = vunpack.c.l.b16 %v3339
          %v4038 = vunpack.c.h.b16 %v3339
          %v4039 = vunpack.c.l.b16 %v3340
          %v4040 = vunpack.c.h.b16 %v3340
          %v4041 = vunpack.c.l.b16 %v3341
          %v4042 = vunpack.c.h.b16 %v3341
          %v4043 = vunpack.c.l.b16 %v3342
          %v4044 = vunpack.c.h.b16 %v3342
          %v4045 = vunpack.c.l.b16 %v3343
          %v4046 = vunpack.c.h.b16 %v3343
          %v4047 = vunpack.c.l.b16 %v3344
          %v4048 = vunpack.c.h.b16 %v3344
          %v4049 = vunpack.c.l.b16 %v3345
          %v4050 = vunpack.c.h.b16 %v3345
          %v4051 = vunpack.c.l.b16 %v3346
          %v4052 = vunpack.c.h.b16 %v3346
          %v4053 = vunpack.c.l.b16 %v3347
          %v4054 = vunpack.c.h.b16 %v3347
          %v4055 = vunpack.c.l.b16 %v3348
          %v4056 = vunpack.c.h.b16 %v3348
          %v4057 = vunpack.c.l.b16 %v3349
          %v4058 = vunpack.c.h.b16 %v3349
          %v4059 = vunpack.c.l.b16 %v3350
          %v4060 = vunpack.c.h.b16 %v3350
          %v4061 = vunpack.c.l.b16 %v3351
          %v4062 = vunpack.c.h.b16 %v3351
          %v4063 = vunpack.c.l.b16 %v3352
          %v4064 = vunpack.c.h.b16 %v3352
          %v4065 = vunpack.c.l.b16 %v3353
          %v4066 = vunpack.c.h.b16 %v3353
          %v4067 = vunpack.c.l.b16 %v3354
          %v4068 = vunpack.c.h.b16 %v3354
          %v4069 = vunpack.c.l.b16 %v3355
          %v4070 = vunpack.c.h.b16 %v3355
          %v4071 = vunpack.c.l.b16 %v3356
          %v4072 = vunpack.c.h.b16 %v3356
          %v4073 = vunpack.c.l.b16 %v3357
          %v4074 = vunpack.c.h.b16 %v3357
          %v4075 = vunpack.c.l.b16 %v3358
          %v4076 = vunpack.c.h.b16 %v3358
          %v4077 = vunpack.c.l.b16 %v3359
          %v4078 = vunpack.c.h.b16 %v3359
          %v4079 = vunpack.c.l.b16 %v3360
          %v4080 = vunpack.c.h.b16 %v3360
          %v4081 = vunpack.c.l.b16 %v3361
          %v4082 = vunpack.c.h.b16 %v3361
          %v4083 = vunpack.c.l.b16 %v3362
          %v4084 = vunpack.c.h.b16 %v3362
          %v4085 = vunpack.c.l.b16 %v3363
          %v4086 = vunpack.c.h.b16 %v3363
          %v4087 = vunpack.c.l.b16 %v3364
          %v4088 = vunpack.c.h.b16 %v3364
          %v4089 = vunpack.c.l.b16 %v3365
          %v4090 = vunpack.c.h.b16 %v3365
          %v4091 = vunpack.c.l.b16 %v3366
          %v4092 = vunpack.c.h.b16 %v3366
          %v4093 = vunpack.c.l.b16 %v3367
          %v4094 = vunpack.c.h.b16 %v3367
          %v4095 = vunpack.c.l.b16 %v3368
          %v4096 = vunpack.c.h.b16 %v3368
          %v4097 = vunpack.c.l.b16 %v3369
          %v4098 = vunpack.c.h.b16 %v3369
          %v4099 = vunpack.c.l.b16 %v3370
          %v4100 = vunpack.c.h.b16 %v3370
          %v4101 = vunpack.c.l.b16 %v3371
          %v4102 = vunpack.c.h.b16 %v3371
          %v4103 = vunpack.c.l.b16 %v3372
          %v4104 = vunpack.c.h.b16 %v3372
          %v4105 = vunpack.c.l.b16 %v3373
          %v4106 = vunpack.c.h.b16 %v3373
          %v4107 = vunpack.c.l.b16 %v3374
          %v4108 = vunpack.c.h.b16 %v3374
          %v4109 = vunpack.c.l.b16 %v3375
          %v4110 = vunpack.c.h.b16 %v3375
          %v4111 = vunpack.c.l.b16 %v3376
          %v4112 = vunpack.c.h.b16 %v3376
          %v4113 = vunpack.c.l.b16 %v3377
          %v4114 = vunpack.c.h.b16 %v3377
          %v4115 = vunpack.c.l.b16 %v3378
          %v4116 = vunpack.c.h.b16 %v3378
          %v4117 = vunpack.c.l.b16 %v3379
          %v4118 = vunpack.c.h.b16 %v3379
          %v4119 = vunpack.c.l.b16 %v3380
          %v4120 = vunpack.c.h.b16 %v3380
          %v4121 = vunpack.c.l.b16 %v3381
          %v4122 = vunpack.c.h.b16 %v3381
          %v4123 = vunpack.c.l.b16 %v3382
          %v4124 = vunpack.c.h.b16 %v3382
          %v4125 = vunpack.c.l.b16 %v3383
          %v4126 = vunpack.c.h.b16 %v3383
          %v4127 = vunpack.c.l.b16 %v3384
          %v4128 = vunpack.c.h.b16 %v3384
          %v4129 = vunpack.c.l.b16 %v3385
          %v4130 = vunpack.c.h.b16 %v3385
          %v4131 = vunpack.c.l.b16 %v3386
          %v4132 = vunpack.c.h.b16 %v3386
          %v4133 = vunpack.c.l.b16 %v3387
          %v4134 = vunpack.c.h.b16 %v3387
          %v4135 = vunpack.c.l.b16 %v3388
          %v4136 = vunpack.c.h.b16 %v3388
          %v4137 = vunpack.c.l.b16 %v3389
          %v4138 = vunpack.c.h.b16 %v3389
          %v4139 = vunpack.c.l.b16 %v3390
          %v4140 = vunpack.c.h.b16 %v3390
          %v4141 = vunpack.c.l.b16 %v3391
          %v4142 = vunpack.c.h.b16 %v3391
          %v4143 = vunpack.c.l.b16 %v3392
          %v4144 = vunpack.c.h.b16 %v3392
          %v4145 = vunpack.c.l.b16 %v3393
          %v4146 = vunpack.c.h.b16 %v3393
          %v4147 = vunpack.c.l.b16 %v3394
          %v4148 = vunpack.c.h.b16 %v3394
          %v4149 = vunpack.c.l.b16 %v3395
          %v4150 = vunpack.c.h.b16 %v3395
          %v4151 = vunpack.c.l.b16 %v3396
          %v4152 = vunpack.c.h.b16 %v3396
          %v4153 = vunpack.c.l.b16 %v3397
          %v4154 = vunpack.c.h.b16 %v3397
          %v4155 = vunpack.c.l.b16 %v3398
          %v4156 = vunpack.c.h.b16 %v3398
          %v4157 = vunpack.c.l.b16 %v3399
          %v4158 = vunpack.c.h.b16 %v3399
          %v4159 = vunpack.c.l.b16 %v3400
          %v4160 = vunpack.c.h.b16 %v3400
          %v4161 = vunpack.c.l.b16 %v3401
          %v4162 = vunpack.c.h.b16 %v3401
          %v4163 = vunpack.c.l.b16 %v3402
          %v4164 = vunpack.c.h.b16 %v3402
          %v4165 = vunpack.c.l.b16 %v3403
          %v4166 = vunpack.c.h.b16 %v3403
          %v4167 = vunpack.c.l.b16 %v3404
          %v4168 = vunpack.c.h.b16 %v3404
          %v4169 = vunpack.c.l.b16 %v3405
          %v4170 = vunpack.c.h.b16 %v3405
          %v4171 = vunpack.c.l.b16 %v3406
          %v4172 = vunpack.c.h.b16 %v3406
          %v4173 = vunpack.c.l.b16 %v3407
          %v4174 = vunpack.c.h.b16 %v3407
          %v4175 = vunpack.c.l.b16 %v3408
          %v4176 = vunpack.c.h.b16 %v3408
          %v4177 = vunpack.c.l.b16 %v3409
          %v4178 = vunpack.c.h.b16 %v3409
          %v4179 = vunpack.c.l.b16 %v3410
          %v4180 = vunpack.c.h.b16 %v3410
          %v4181 = vunpack.c.l.b16 %v3411
          %v4182 = vunpack.c.h.b16 %v3411
          %v4183 = vunpack.c.l.b16 %v3412
          %v4184 = vunpack.c.h.b16 %v3412
          %v4185 = vunpack.c.l.b16 %v3413
          %v4186 = vunpack.c.h.b16 %v3413
          %v4187 = vunpack.c.l.b16 %v3414
          %v4188 = vunpack.c.h.b16 %v3414
          %v4189 = vunpack.c.l.b16 %v3415
          %v4190 = vunpack.c.h.b16 %v3415
          %v4191 = vunpack.c.l.b16 %v3416
          %v4192 = vunpack.c.h.b16 %v3416
          %v4193 = vunpack.c.l.b16 %v3417
          %v4194 = vunpack.c.h.b16 %v3417
          %v4195 = vunpack.c.l.b16 %v3418
          %v4196 = vunpack.c.h.b16 %v3418
          %v4197 = vunpack.c.l.b16 %v3419
          %v4198 = vunpack.c.h.b16 %v3419
          %v4199 = vunpack.c.l.b16 %v3420
          %v4200 = vunpack.c.h.b16 %v3420
          %v4201 = vunpack.c.l.b16 %v3421
          %v4202 = vunpack.c.h.b16 %v3421
          %v4203 = vunpack.c.l.b16 %v3422
          %v4204 = vunpack.c.h.b16 %v3422
          %v4205 = vunpack.c.l.b16 %v3423
          %v4206 = vunpack.c.h.b16 %v3423
          %v4207 = vunpack.c.l.b16 %v3424
          %v4208 = vunpack.c.h.b16 %v3424
          %v4209 = vunpack.c.l.b16 %v3425
          %v4210 = vunpack.c.h.b16 %v3425
          %v4211 = vunpack.c.l.b16 %v3426
          %v4212 = vunpack.c.h.b16 %v3426
          %v4213 = vunpack.c.l.b16 %v3427
          %v4214 = vunpack.c.h.b16 %v3427
          %v4215 = vunpack.c.l.b16 %v3428
          %v4216 = vunpack.c.h.b16 %v3428
          %v4217 = vunpack.c.l.b16 %v3429
          %v4218 = vunpack.c.h.b16 %v3429
          %v4219 = vunpack.c.l.b16 %v3430
          %v4220 = vunpack.c.h.b16 %v3430
          %v4221 = vpack.c.b16 %v3713, %v3709
          %v4222 = vpack.c.b16 %v3714, %v3710
          %v4223 = vpack.c.b16 %v3715, %v3711
          %v4224 = vpack.c.b16 %v3716, %v3712
          %v4225 = vpack.c.b16 %v3721, %v3717
          %v4226 = vpack.c.b16 %v3722, %v3718
          %v4227 = vpack.c.b16 %v3723, %v3719
          %v4228 = vpack.c.b16 %v3724, %v3720
          %v4229 = vpack.c.b16 %v3729, %v3725
          %v4230 = vpack.c.b16 %v3730, %v3726
          %v4231 = vpack.c.b16 %v3731, %v3727
          %v4232 = vpack.c.b16 %v3732, %v3728
          %v4233 = vpack.c.b16 %v3737, %v3733
          %v4234 = vpack.c.b16 %v3738, %v3734
          %v4235 = vpack.c.b16 %v3739, %v3735
          %v4236 = vpack.c.b16 %v3740, %v3736
          %v4237 = vpack.c.b16 %v3745, %v3741
          %v4238 = vpack.c.b16 %v3746, %v3742
          %v4239 = vpack.c.b16 %v3747, %v3743
          %v4240 = vpack.c.b16 %v3748, %v3744
          %v4241 = vpack.c.b16 %v3753, %v3749
          %v4242 = vpack.c.b16 %v3754, %v3750
          %v4243 = vpack.c.b16 %v3755, %v3751
          %v4244 = vpack.c.b16 %v3756, %v3752
          %v4245 = vpack.c.b16 %v3761, %v3757
          %v4246 = vpack.c.b16 %v3762, %v3758
          %v4247 = vpack.c.b16 %v3763, %v3759
          %v4248 = vpack.c.b16 %v3764, %v3760
          %v4249 = vpack.c.b16 %v3769, %v3765
          %v4250 = vpack.c.b16 %v3770, %v3766
          %v4251 = vpack.c.b16 %v3771, %v3767
          %v4252 = vpack.c.b16 %v3772, %v3768
          %v4253 = vpack.c.b16 %v3777, %v3773
          %v4254 = vpack.c.b16 %v3778, %v3774
          %v4255 = vpack.c.b16 %v3779, %v3775
          %v4256 = vpack.c.b16 %v3780, %v3776
          %v4257 = vpack.c.b16 %v3785, %v3781
          %v4258 = vpack.c.b16 %v3786, %v3782
          %v4259 = vpack.c.b16 %v3787, %v3783
          %v4260 = vpack.c.b16 %v3788, %v3784
          %v4261 = vpack.c.b16 %v3793, %v3789
          %v4262 = vpack.c.b16 %v3794, %v3790
          %v4263 = vpack.c.b16 %v3795, %v3791
          %v4264 = vpack.c.b16 %v3796, %v3792
          %v4265 = vpack.c.b16 %v3801, %v3797
          %v4266 = vpack.c.b16 %v3802, %v3798
          %v4267 = vpack.c.b16 %v3803, %v3799
          %v4268 = vpack.c.b16 %v3804, %v3800
          %v4269 = vpack.c.b16 %v3809, %v3805
          %v4270 = vpack.c.b16 %v3810, %v3806
          %v4271 = vpack.c.b16 %v3811, %v3807
          %v4272 = vpack.c.b16 %v3812, %v3808
          %v4273 = vpack.c.b16 %v3817, %v3813
          %v4274 = vpack.c.b16 %v3818, %v3814
          %v4275 = vpack.c.b16 %v3819, %v3815
          %v4276 = vpack.c.b16 %v3820, %v3816
          %v4277 = vpack.c.b16 %v3825, %v3821
          %v4278 = vpack.c.b16 %v3826, %v3822
          %v4279 = vpack.c.b16 %v3827, %v3823
          %v4280 = vpack.c.b16 %v3828, %v3824
          %v4281 = vpack.c.b16 %v3833, %v3829
          %v4282 = vpack.c.b16 %v3834, %v3830
          %v4283 = vpack.c.b16 %v3835, %v3831
          %v4284 = vpack.c.b16 %v3836, %v3832
          %v4285 = vpack.c.b16 %v3841, %v3837
          %v4286 = vpack.c.b16 %v3842, %v3838
          %v4287 = vpack.c.b16 %v3843, %v3839
          %v4288 = vpack.c.b16 %v3844, %v3840
          %v4289 = vpack.c.b16 %v3849, %v3845
          %v4290 = vpack.c.b16 %v3850, %v3846
          %v4291 = vpack.c.b16 %v3851, %v3847
          %v4292 = vpack.c.b16 %v3852, %v3848
          %v4293 = vpack.c.b16 %v3857, %v3853
          %v4294 = vpack.c.b16 %v3858, %v3854
          %v4295 = vpack.c.b16 %v3859, %v3855
          %v4296 = vpack.c.b16 %v3860, %v3856
          %v4297 = vpack.c.b16 %v3865, %v3861
          %v4298 = vpack.c.b16 %v3866, %v3862
          %v4299 = vpack.c.b16 %v3867, %v3863
          %v4300 = vpack.c.b16 %v3868, %v3864
          %v4301 = vpack.c.b16 %v3873, %v3869
          %v4302 = vpack.c.b16 %v3874, %v3870
          %v4303 = vpack.c.b16 %v3875, %v3871
          %v4304 = vpack.c.b16 %v3876, %v3872
          %v4305 = vpack.c.b16 %v3881, %v3877
          %v4306 = vpack.c.b16 %v3882, %v3878
          %v4307 = vpack.c.b16 %v3883, %v3879
          %v4308 = vpack.c.b16 %v3884, %v3880
          %v4309 = vpack.c.b16 %v3889, %v3885
          %v4310 = vpack.c.b16 %v3890, %v3886
          %v4311 = vpack.c.b16 %v3891, %v3887
          %v4312 = vpack.c.b16 %v3892, %v3888
          %v4313 = vpack.c.b16 %v3897, %v3893
          %v4314 = vpack.c.b16 %v3898, %v3894
          %v4315 = vpack.c.b16 %v3899, %v3895
          %v4316 = vpack.c.b16 %v3900, %v3896
          %v4317 = vpack.c.b16 %v3905, %v3901
          %v4318 = vpack.c.b16 %v3906, %v3902
          %v4319 = vpack.c.b16 %v3907, %v3903
          %v4320 = vpack.c.b16 %v3908, %v3904
          %v4321 = vpack.c.b16 %v3913, %v3909
          %v4322 = vpack.c.b16 %v3914, %v3910
          %v4323 = vpack.c.b16 %v3915, %v3911
          %v4324 = vpack.c.b16 %v3916, %v3912
          %v4325 = vpack.c.b16 %v3921, %v3917
          %v4326 = vpack.c.b16 %v3922, %v3918
          %v4327 = vpack.c.b16 %v3923, %v3919
          %v4328 = vpack.c.b16 %v3924, %v3920
          %v4329 = vpack.c.b16 %v3929, %v3925
          %v4330 = vpack.c.b16 %v3930, %v3926
          %v4331 = vpack.c.b16 %v3931, %v3927
          %v4332 = vpack.c.b16 %v3932, %v3928
          %v4333 = vpack.c.b16 %v3937, %v3933
          %v4334 = vpack.c.b16 %v3938, %v3934
          %v4335 = vpack.c.b16 %v3939, %v3935
          %v4336 = vpack.c.b16 %v3940, %v3936
          %v4337 = vpack.c.b16 %v3945, %v3941
          %v4338 = vpack.c.b16 %v3946, %v3942
          %v4339 = vpack.c.b16 %v3947, %v3943
          %v4340 = vpack.c.b16 %v3948, %v3944
          %v4341 = vpack.c.b16 %v3953, %v3949
          %v4342 = vpack.c.b16 %v3954, %v3950
          %v4343 = vpack.c.b16 %v3955, %v3951
          %v4344 = vpack.c.b16 %v3956, %v3952
          %v4345 = vpack.c.b16 %v3961, %v3957
          %v4346 = vpack.c.b16 %v3962, %v3958
          %v4347 = vpack.c.b16 %v3963, %v3959
          %v4348 = vpack.c.b16 %v3964, %v3960
          %v4349 = vpack.c.b16 %v3969, %v3965
          %v4350 = vpack.c.b16 %v3970, %v3966
          %v4351 = vpack.c.b16 %v3971, %v3967
          %v4352 = vpack.c.b16 %v3972, %v3968
          %v4353 = vpack.c.b16 %v3977, %v3973
          %v4354 = vpack.c.b16 %v3978, %v3974
          %v4355 = vpack.c.b16 %v3979, %v3975
          %v4356 = vpack.c.b16 %v3980, %v3976
          %v4357 = vpack.c.b16 %v3985, %v3981
          %v4358 = vpack.c.b16 %v3986, %v3982
          %v4359 = vpack.c.b16 %v3987, %v3983
          %v4360 = vpack.c.b16 %v3988, %v3984
          %v4361 = vpack.c.b16 %v3993, %v3989
          %v4362 = vpack.c.b16 %v3994, %v3990
          %v4363 = vpack.c.b16 %v3995, %v3991
          %v4364 = vpack.c.b16 %v3996, %v3992
          %v4365 = vpack.c.b16 %v4001, %v3997
          %v4366 = vpack.c.b16 %v4002, %v3998
          %v4367 = vpack.c.b16 %v4003, %v3999
          %v4368 = vpack.c.b16 %v4004, %v4000
          %v4369 = vpack.c.b16 %v4009, %v4005
          %v4370 = vpack.c.b16 %v4010, %v4006
          %v4371 = vpack.c.b16 %v4011, %v4007
          %v4372 = vpack.c.b16 %v4012, %v4008
          %v4373 = vpack.c.b16 %v4017, %v4013
          %v4374 = vpack.c.b16 %v4018, %v4014
          %v4375 = vpack.c.b16 %v4019, %v4015
          %v4376 = vpack.c.b16 %v4020, %v4016
          %v4377 = vpack.c.b16 %v4025, %v4021
          %v4378 = vpack.c.b16 %v4026, %v4022
          %v4379 = vpack.c.b16 %v4027, %v4023
          %v4380 = vpack.c.b16 %v4028, %v4024
          %v4381 = vpack.c.b16 %v4033, %v4029
          %v4382 = vpack.c.b16 %v4034, %v4030
          %v4383 = vpack.c.b16 %v4035, %v4031
          %v4384 = vpack.c.b16 %v4036, %v4032
          %v4385 = vpack.c.b16 %v4041, %v4037
          %v4386 = vpack.c.b16 %v4042, %v4038
          %v4387 = vpack.c.b16 %v4043, %v4039
          %v4388 = vpack.c.b16 %v4044, %v4040
          %v4389 = vpack.c.b16 %v4049, %v4045
          %v4390 = vpack.c.b16 %v4050, %v4046
          %v4391 = vpack.c.b16 %v4051, %v4047
          %v4392 = vpack.c.b16 %v4052, %v4048
          %v4393 = vpack.c.b16 %v4057, %v4053
          %v4394 = vpack.c.b16 %v4058, %v4054
          %v4395 = vpack.c.b16 %v4059, %v4055
          %v4396 = vpack.c.b16 %v4060, %v4056
          %v4397 = vpack.c.b16 %v4065, %v4061
          %v4398 = vpack.c.b16 %v4066, %v4062
          %v4399 = vpack.c.b16 %v4067, %v4063
          %v4400 = vpack.c.b16 %v4068, %v4064
          %v4401 = vpack.c.b16 %v4073, %v4069
          %v4402 = vpack.c.b16 %v4074, %v4070
          %v4403 = vpack.c.b16 %v4075, %v4071
          %v4404 = vpack.c.b16 %v4076, %v4072
          %v4405 = vpack.c.b16 %v4081, %v4077
          %v4406 = vpack.c.b16 %v4082, %v4078
          %v4407 = vpack.c.b16 %v4083, %v4079
          %v4408 = vpack.c.b16 %v4084, %v4080
          %v4409 = vpack.c.b16 %v4089, %v4085
          %v4410 = vpack.c.b16 %v4090, %v4086
          %v4411 = vpack.c.b16 %v4091, %v4087
          %v4412 = vpack.c.b16 %v4092, %v4088
          %v4413 = vpack.c.b16 %v4097, %v4093
          %v4414 = vpack.c.b16 %v4098, %v4094
          %v4415 = vpack.c.b16 %v4099, %v4095
          %v4416 = vpack.c.b16 %v4100, %v4096
          %v4417 = vpack.c.b16 %v4105, %v4101
          %v4418 = vpack.c.b16 %v4106, %v4102
          %v4419 = vpack.c.b16 %v4107, %v4103
          %v4420 = vpack.c.b16 %v4108, %v4104
          %v4421 = vpack.c.b16 %v4113, %v4109
          %v4422 = vpack.c.b16 %v4114, %v4110
          %v4423 = vpack.c.b16 %v4115, %v4111
          %v4424 = vpack.c.b16 %v4116, %v4112
          %v4425 = vpack.c.b16 %v4121, %v4117
          %v4426 = vpack.c.b16 %v4122, %v4118
          %v4427 = vpack.c.b16 %v4123, %v4119
          %v4428 = vpack.c.b16 %v4124, %v4120
          %v4429 = vpack.c.b16 %v4129, %v4125
          %v4430 = vpack.c.b16 %v4130, %v4126
          %v4431 = vpack.c.b16 %v4131, %v4127
          %v4432 = vpack.c.b16 %v4132, %v4128
          %v4433 = vpack.c.b16 %v4137, %v4133
          %v4434 = vpack.c.b16 %v4138, %v4134
          %v4435 = vpack.c.b16 %v4139, %v4135
          %v4436 = vpack.c.b16 %v4140, %v4136
          %v4437 = vpack.c.b16 %v4145, %v4141
          %v4438 = vpack.c.b16 %v4146, %v4142
          %v4439 = vpack.c.b16 %v4147, %v4143
          %v4440 = vpack.c.b16 %v4148, %v4144
          %v4441 = vpack.c.b16 %v4153, %v4149
          %v4442 = vpack.c.b16 %v4154, %v4150
          %v4443 = vpack.c.b16 %v4155, %v4151
          %v4444 = vpack.c.b16 %v4156, %v4152
          %v4445 = vpack.c.b16 %v4161, %v4157
          %v4446 = vpack.c.b16 %v4162, %v4158
          %v4447 = vpack.c.b16 %v4163, %v4159
          %v4448 = vpack.c.b16 %v4164, %v4160
          %v4449 = vpack.c.b16 %v4169, %v4165
          %v4450 = vpack.c.b16 %v4170, %v4166
          %v4451 = vpack.c.b16 %v4171, %v4167
          %v4452 = vpack.c.b16 %v4172, %v4168
          %v4453 = vpack.c.b16 %v4177, %v4173
          %v4454 = vpack.c.b16 %v4178, %v4174
          %v4455 = vpack.c.b16 %v4179, %v4175
          %v4456 = vpack.c.b16 %v4180, %v4176
          %v4457 = vpack.c.b16 %v4185, %v4181
          %v4458 = vpack.c.b16 %v4186, %v4182
          %v4459 = vpack.c.b16 %v4187, %v4183
          %v4460 = vpack.c.b16 %v4188, %v4184
          %v4461 = vpack.c.b16 %v4193, %v4189
          %v4462 = vpack.c.b16 %v4194, %v4190
          %v4463 = vpack.c.b16 %v4195, %v4191
          %v4464 = vpack.c.b16 %v4196, %v4192
          %v4465 = vpack.c.b16 %v4201, %v4197
          %v4466 = vpack.c.b16 %v4202, %v4198
          %v4467 = vpack.c.b16 %v4203, %v4199
          %v4468 = vpack.c.b16 %v4204, %v4200
          %v4469 = vpack.c.b16 %v4209, %v4205
          %v4470 = vpack.c.b16 %v4210, %v4206
          %v4471 = vpack.c.b16 %v4211, %v4207
          %v4472 = vpack.c.b16 %v4212, %v4208
          %v4473 = vpack.c.b16 %v4217, %v4213
          %v4474 = vpack.c.b16 %v4218, %v4214
          %v4475 = vpack.c.b16 %v4219, %v4215
          %v4476 = vpack.c.b16 %v4220, %v4216
          %4733 = vmatprep.subr.bf16.mxu0 %v4222
          %4734 = vmatpush1.bf16.msra.mxu0 %v4221
          %4735 = vmatprep.subr.bf16.mxu0 %v4226
          %4736 = vmatpush1.bf16.msra.mxu0 %v4225
          %4737 = vmatprep.subr.bf16.mxu0 %v4230
          %4738 = vmatpush1.bf16.msra.mxu0 %v4229
          %4739 = vmatprep.subr.bf16.mxu0 %v4234
          %4740 = vmatpush1.bf16.msra.mxu0 %v4233
          %4741 = vmatprep.subr.bf16.mxu0 %v4238
          %4742 = vmatpush1.bf16.msra.mxu0 %v4237
          %4743 = vmatprep.subr.bf16.mxu0 %v4242
          %4744 = vmatpush1.bf16.msra.mxu0 %v4241
          %4745 = vmatprep.subr.bf16.mxu0 %v4246
          %4746 = vmatpush1.bf16.msra.mxu0 %v4245
          %4747 = vmatprep.subr.bf16.mxu0 %v4250
          %4748 = vmatpush1.bf16.msra.mxu0 %v4249
          %4749 = vmatprep.subr.bf16.mxu0 %v4254
          %4750 = vmatpush1.bf16.msra.mxu0 %v4253
          %4751 = vmatprep.subr.bf16.mxu0 %v4258
          %4752 = vmatpush1.bf16.msra.mxu0 %v4257
          %4753 = vmatprep.subr.bf16.mxu0 %v4262
          %4754 = vmatpush1.bf16.msra.mxu0 %v4261
          %4755 = vmatprep.subr.bf16.mxu0 %v4266
          %4756 = vmatpush1.bf16.msra.mxu0 %v4265
          %4757 = vmatprep.subr.bf16.mxu0 %v4270
          %4758 = vmatpush1.bf16.msra.mxu0 %v4269
          %4759 = vmatprep.subr.bf16.mxu0 %v4274
          %4760 = vmatpush1.bf16.msra.mxu0 %v4273
          %4761 = vmatprep.subr.bf16.mxu0 %v4278
          %4762 = vmatpush1.bf16.msra.mxu0 %v4277
          %4763 = vmatprep.subr.bf16.mxu0 %v4282
          %4764 = vmatpush1.bf16.msra.mxu0 %v4281
          %4765 = vmatprep.mubr.bf16.mxu0 %v3168
          %4766 = vmatmul.mubr.bf16.gmra.mrb[0].mxu0 %v3167
          %v4767 = vpop.f32.mrb[0].mxu0
          %v4768 = vadd.f32 %v3436, %v4767
          %v4769 = vpop.f32.mrb[0].mxu0
          %v4770 = vadd.f32 %v3440, %v4769
          %v4771 = vpop.f32.mrb[0].mxu0
          %v4772 = vpop.f32.mrb[0].mxu0
          %4773 = vdwg.mxu0
          %4774 = vmatprep.subr.bf16.mxu0 %v4286
          %4775 = vmatpush1.bf16.msra.mxu0 %v4285
          %4776 = vmatprep.subr.bf16.mxu0 %v4290
          %4777 = vmatpush1.bf16.msra.mxu0 %v4289
          %4778 = vmatprep.subr.bf16.mxu0 %v4294
          %4779 = vmatpush1.bf16.msra.mxu0 %v4293
          %4780 = vmatprep.subr.bf16.mxu0 %v4298
          %4781 = vmatpush1.bf16.msra.mxu0 %v4297
          %4782 = vmatprep.subr.bf16.mxu0 %v4302
          %4783 = vmatpush1.bf16.msra.mxu0 %v4301
          %4784 = vmatprep.subr.bf16.mxu0 %v4306
          %4785 = vmatpush1.bf16.msra.mxu0 %v4305
          %4786 = vmatprep.subr.bf16.mxu0 %v4310
          %4787 = vmatpush1.bf16.msra.mxu0 %v4309
          %4788 = vmatprep.subr.bf16.mxu0 %v4314
          %4789 = vmatpush1.bf16.msra.mxu0 %v4313
          %4790 = vmatprep.subr.bf16.mxu0 %v4318
          %4791 = vmatpush1.bf16.msra.mxu0 %v4317
          %4792 = vmatprep.subr.bf16.mxu0 %v4322
          %4793 = vmatpush1.bf16.msra.mxu0 %v4321
          %4794 = vmatprep.subr.bf16.mxu0 %v4326
          %4795 = vmatpush1.bf16.msra.mxu0 %v4325
          %4796 = vmatprep.subr.bf16.mxu0 %v4330
          %4797 = vmatpush1.bf16.msra.mxu0 %v4329
          %4798 = vmatprep.subr.bf16.mxu0 %v4334
          %4799 = vmatpush1.bf16.msra.mxu0 %v4333
          %4800 = vmatprep.subr.bf16.mxu0 %v4338
          %4801 = vmatpush1.bf16.msra.mxu0 %v4337
          %4802 = vmatprep.subr.bf16.mxu0 %v4342
          %4803 = vmatpush1.bf16.msra.mxu0 %v4341
          %4804 = vmatprep.subr.bf16.mxu0 %v4346
          %4805 = vmatpush1.bf16.msra.mxu0 %v4345
          %4806 = vmatprep.mubr.bf16.mxu0 %v3170
          %4807 = vmatmul.mubr.bf16.gmra.mrb[0].mxu0 %v3169
          %v4808 = vpop.f32.mrb[0].mxu0
          %v4809 = vadd.f32 %v4768, %v4808
          %v4810 = vpop.f32.mrb[0].mxu0
          %v4811 = vadd.f32 %v4770, %v4810
          %v4812 = vpop.f32.mrb[0].mxu0
          %v4813 = vpop.f32.mrb[0].mxu0
          %4814 = vdwg.mxu0
          %4815 = vmatprep.subr.bf16.mxu0 %v4350
          %4816 = vmatpush1.bf16.msra.mxu0 %v4349
          %4817 = vmatprep.subr.bf16.mxu0 %v4354
          %4818 = vmatpush1.bf16.msra.mxu0 %v4353
          %4819 = vmatprep.subr.bf16.mxu0 %v4358
          %4820 = vmatpush1.bf16.msra.mxu0 %v4357
          %4821 = vmatprep.subr.bf16.mxu0 %v4362
          %4822 = vmatpush1.bf16.msra.mxu0 %v4361
          %4823 = vmatprep.subr.bf16.mxu0 %v4366
          %4824 = vmatpush1.bf16.msra.mxu0 %v4365
          %4825 = vmatprep.subr.bf16.mxu0 %v4370
          %4826 = vmatpush1.bf16.msra.mxu0 %v4369
          %4827 = vmatprep.subr.bf16.mxu0 %v4374
          %4828 = vmatpush1.bf16.msra.mxu0 %v4373
          %4829 = vmatprep.subr.bf16.mxu0 %v4378
          %4830 = vmatpush1.bf16.msra.mxu0 %v4377
          %4831 = vmatprep.subr.bf16.mxu0 %v4382
          %4832 = vmatpush1.bf16.msra.mxu0 %v4381
          %4833 = vmatprep.subr.bf16.mxu0 %v4386
          %4834 = vmatpush1.bf16.msra.mxu0 %v4385
          %4835 = vmatprep.subr.bf16.mxu0 %v4390
          %4836 = vmatpush1.bf16.msra.mxu0 %v4389
          %4837 = vmatprep.subr.bf16.mxu0 %v4394
          %4838 = vmatpush1.bf16.msra.mxu0 %v4393
          %4839 = vmatprep.subr.bf16.mxu0 %v4398
          %4840 = vmatpush1.bf16.msra.mxu0 %v4397
          %4841 = vmatprep.subr.bf16.mxu0 %v4402
          %4842 = vmatpush1.bf16.msra.mxu0 %v4401
          %4843 = vmatprep.subr.bf16.mxu0 %v4406
          %4844 = vmatpush1.bf16.msra.mxu0 %v4405
          %4845 = vmatprep.subr.bf16.mxu0 %v4410
          %4846 = vmatpush1.bf16.msra.mxu0 %v4409
          %4847 = vmatprep.mubr.bf16.mxu0 %v3172
          %4848 = vmatmul.mubr.bf16.gmra.mrb[0].mxu0 %v3171
          %v4849 = vpop.f32.mrb[0].mxu0
          %v4850 = vadd.f32 %v4809, %v4849
          %v4851 = vpop.f32.mrb[0].mxu0
          %v4852 = vadd.f32 %v4811, %v4851
          %v4853 = vpop.f32.mrb[0].mxu0
          %v4854 = vpop.f32.mrb[0].mxu0
          %4855 = vdwg.mxu0
          %4856 = vmatprep.subr.bf16.mxu0 %v4414
          %4857 = vmatpush1.bf16.msra.mxu0 %v4413
          %4858 = vmatprep.subr.bf16.mxu0 %v4418
          %4859 = vmatpush1.bf16.msra.mxu0 %v4417
          %4860 = vmatprep.subr.bf16.mxu0 %v4422
          %4861 = vmatpush1.bf16.msra.mxu0 %v4421
          %4862 = vmatprep.subr.bf16.mxu0 %v4426
          %4863 = vmatpush1.bf16.msra.mxu0 %v4425
          %4864 = vmatprep.subr.bf16.mxu0 %v4430
          %4865 = vmatpush1.bf16.msra.mxu0 %v4429
          %4866 = vmatprep.subr.bf16.mxu0 %v4434
          %4867 = vmatpush1.bf16.msra.mxu0 %v4433
          %4868 = vmatprep.subr.bf16.mxu0 %v4438
          %4869 = vmatpush1.bf16.msra.mxu0 %v4437
          %4870 = vmatprep.subr.bf16.mxu0 %v4442
          %4871 = vmatpush1.bf16.msra.mxu0 %v4441
          %4872 = vmatprep.subr.bf16.mxu0 %v4446
          %4873 = vmatpush1.bf16.msra.mxu0 %v4445
          %4874 = vmatprep.subr.bf16.mxu0 %v4450
          %4875 = vmatpush1.bf16.msra.mxu0 %v4449
          %4876 = vmatprep.subr.bf16.mxu0 %v4454
          %4877 = vmatpush1.bf16.msra.mxu0 %v4453
          %4878 = vmatprep.subr.bf16.mxu0 %v4458
          %4879 = vmatpush1.bf16.msra.mxu0 %v4457
          %4880 = vmatprep.subr.bf16.mxu0 %v4462
          %4881 = vmatpush1.bf16.msra.mxu0 %v4461
          %4882 = vmatprep.subr.bf16.mxu0 %v4466
          %4883 = vmatpush1.bf16.msra.mxu0 %v4465
          %4884 = vmatprep.subr.bf16.mxu0 %v4470
          %4885 = vmatpush1.bf16.msra.mxu0 %v4469
          %4886 = vmatprep.subr.bf16.mxu0 %v4474
          %4887 = vmatpush1.bf16.msra.mxu0 %v4473
          %4888 = vmatprep.mubr.bf16.mxu0 %v3174
          %4889 = vmatmul.mubr.bf16.gmra.mrb[0].mxu0 %v3173
          %v4890 = vpop.f32.mrb[0].mxu0
          %v4891 = vadd.f32 %v4850, %v4890
          %v4892 = vpop.f32.mrb[0].mxu0
          %v4893 = vadd.f32 %v4852, %v4892
          %v4894 = vpop.f32.mrb[0].mxu0
          %v4895 = vpop.f32.mrb[0].mxu0
          %4896 = vdwg.mxu0
          %4897 = vmatprep.subr.bf16.mxu0 %v4224
          %4898 = vmatpush1.bf16.msra.mxu0 %v4223
          %4899 = vmatprep.subr.bf16.mxu0 %v4228
          %4900 = vmatpush1.bf16.msra.mxu0 %v4227
          %4901 = vmatprep.subr.bf16.mxu0 %v4232
          %4902 = vmatpush1.bf16.msra.mxu0 %v4231
          %4903 = vmatprep.subr.bf16.mxu0 %v4236
          %4904 = vmatpush1.bf16.msra.mxu0 %v4235
          %4905 = vmatprep.subr.bf16.mxu0 %v4240
          %4906 = vmatpush1.bf16.msra.mxu0 %v4239
          %4907 = vmatprep.subr.bf16.mxu0 %v4244
          %4908 = vmatpush1.bf16.msra.mxu0 %v4243
          %4909 = vmatprep.subr.bf16.mxu0 %v4248
          %4910 = vmatpush1.bf16.msra.mxu0 %v4247
          %4911 = vmatprep.subr.bf16.mxu0 %v4252
          %4912 = vmatpush1.bf16.msra.mxu0 %v4251
          %4913 = vmatprep.subr.bf16.mxu0 %v4256
          %4914 = vmatpush1.bf16.msra.mxu0 %v4255
          %4915 = vmatprep.subr.bf16.mxu0 %v4260
          %4916 = vmatpush1.bf16.msra.mxu0 %v4259
          %4917 = vmatprep.subr.bf16.mxu0 %v4264
          %4918 = vmatpush1.bf16.msra.mxu0 %v4263
          %4919 = vmatprep.subr.bf16.mxu0 %v4268
          %4920 = vmatpush1.bf16.msra.mxu0 %v4267
          %4921 = vmatprep.subr.bf16.mxu0 %v4272
          %4922 = vmatpush1.bf16.msra.mxu0 %v4271
          %4923 = vmatprep.subr.bf16.mxu0 %v4276
          %4924 = vmatpush1.bf16.msra.mxu0 %v4275
          %4925 = vmatprep.subr.bf16.mxu0 %v4280
          %4926 = vmatpush1.bf16.msra.mxu0 %v4279
          %4927 = vmatprep.subr.bf16.mxu0 %v4284
          %4928 = vmatpush1.bf16.msra.mxu0 %v4283
          %4929 = vmatprep.mubr.bf16.mxu0 %v3168
          %4930 = vmatmul.mubr.bf16.gmra.mrb[0].mxu0 %v3167
          %v4931 = vpop.f32.mrb[0].mxu0
          %v4932 = vadd.f32 %v3444, %v4931
          %v4933 = vpop.f32.mrb[0].mxu0
          %v4934 = vadd.f32 %v3448, %v4933
          %v4935 = vpop.f32.mrb[0].mxu0
          %v4936 = vpop.f32.mrb[0].mxu0
          %4937 = vdwg.mxu0
          %4938 = vmatprep.subr.bf16.mxu0 %v4288
          %4939 = vmatpush1.bf16.msra.mxu0 %v4287
          %4940 = vmatprep.subr.bf16.mxu0 %v4292
          %4941 = vmatpush1.bf16.msra.mxu0 %v4291
          %4942 = vmatprep.subr.bf16.mxu0 %v4296
          %4943 = vmatpush1.bf16.msra.mxu0 %v4295
          %4944 = vmatprep.subr.bf16.mxu0 %v4300
          %4945 = vmatpush1.bf16.msra.mxu0 %v4299
          %4946 = vmatprep.subr.bf16.mxu0 %v4304
          %4947 = vmatpush1.bf16.msra.mxu0 %v4303
          %4948 = vmatprep.subr.bf16.mxu0 %v4308
          %4949 = vmatpush1.bf16.msra.mxu0 %v4307
          %4950 = vmatprep.subr.bf16.mxu0 %v4312
          %4951 = vmatpush1.bf16.msra.mxu0 %v4311
          %4952 = vmatprep.subr.bf16.mxu0 %v4316
          %4953 = vmatpush1.bf16.msra.mxu0 %v4315
          %4954 = vmatprep.subr.bf16.mxu0 %v4320
          %4955 = vmatpush1.bf16.msra.mxu0 %v4319
          %4956 = vmatprep.subr.bf16.mxu0 %v4324
          %4957 = vmatpush1.bf16.msra.mxu0 %v4323
          %4958 = vmatprep.subr.bf16.mxu0 %v4328
          %4959 = vmatpush1.bf16.msra.mxu0 %v4327
          %4960 = vmatprep.subr.bf16.mxu0 %v4332
          %4961 = vmatpush1.bf16.msra.mxu0 %v4331
          %4962 = vmatprep.subr.bf16.mxu0 %v4336
          %4963 = vmatpush1.bf16.msra.mxu0 %v4335
          %4964 = vmatprep.subr.bf16.mxu0 %v4340
          %4965 = vmatpush1.bf16.msra.mxu0 %v4339
          %4966 = vmatprep.subr.bf16.mxu0 %v4344
          %4967 = vmatpush1.bf16.msra.mxu0 %v4343
          %4968 = vmatprep.subr.bf16.mxu0 %v4348
          %4969 = vmatpush1.bf16.msra.mxu0 %v4347
          %4970 = vmatprep.mubr.bf16.mxu0 %v3170
          %4971 = vmatmul.mubr.bf16.gmra.mrb[0].mxu0 %v3169
          %v4972 = vpop.f32.mrb[0].mxu0
          %v4973 = vadd.f32 %v4932, %v4972
          %v4974 = vpop.f32.mrb[0].mxu0
          %v4975 = vadd.f32 %v4934, %v4974
          %v4976 = vpop.f32.mrb[0].mxu0
          %v4977 = vpop.f32.mrb[0].mxu0
          %4978 = vdwg.mxu0
          %4979 = vmatprep.subr.bf16.mxu0 %v4352
          %4980 = vmatpush1.bf16.msra.mxu0 %v4351
          %4981 = vmatprep.subr.bf16.mxu0 %v4356
          %4982 = vmatpush1.bf16.msra.mxu0 %v4355
          %4983 = vmatprep.subr.bf16.mxu0 %v4360
          %4984 = vmatpush1.bf16.msra.mxu0 %v4359
          %4985 = vmatprep.subr.bf16.mxu0 %v4364
          %4986 = vmatpush1.bf16.msra.mxu0 %v4363
          %4987 = vmatprep.subr.bf16.mxu0 %v4368
          %4988 = vmatpush1.bf16.msra.mxu0 %v4367
          %4989 = vmatprep.subr.bf16.mxu0 %v4372
          %4990 = vmatpush1.bf16.msra.mxu0 %v4371
          %4991 = vmatprep.subr.bf16.mxu0 %v4376
          %4992 = vmatpush1.bf16.msra.mxu0 %v4375
          %4993 = vmatprep.subr.bf16.mxu0 %v4380
          %4994 = vmatpush1.bf16.msra.mxu0 %v4379
          %4995 = vmatprep.subr.bf16.mxu0 %v4384
          %4996 = vmatpush1.bf16.msra.mxu0 %v4383
          %4997 = vmatprep.subr.bf16.mxu0 %v4388
          %4998 = vmatpush1.bf16.msra.mxu0 %v4387
          %4999 = vmatprep.subr.bf16.mxu0 %v4392
          %5000 = vmatpush1.bf16.msra.mxu0 %v4391
          %5001 = vmatprep.subr.bf16.mxu0 %v4396
          %5002 = vmatpush1.bf16.msra.mxu0 %v4395
          %5003 = vmatprep.subr.bf16.mxu0 %v4400
          %5004 = vmatpush1.bf16.msra.mxu0 %v4399
          %5005 = vmatprep.subr.bf16.mxu0 %v4404
          %5006 = vmatpush1.bf16.msra.mxu0 %v4403
          %5007 = vmatprep.subr.bf16.mxu0 %v4408
          %5008 = vmatpush1.bf16.msra.mxu0 %v4407
          %5009 = vmatprep.subr.bf16.mxu0 %v4412
          %5010 = vmatpush1.bf16.msra.mxu0 %v4411
          %5011 = vmatprep.mubr.bf16.mxu0 %v3172
          %5012 = vmatmul.mubr.bf16.gmra.mrb[0].mxu0 %v3171
          %v5013 = vpop.f32.mrb[0].mxu0
          %v5014 = vadd.f32 %v4973, %v5013
          %v5015 = vpop.f32.mrb[0].mxu0
          %v5016 = vadd.f32 %v4975, %v5015
          %v5017 = vpop.f32.mrb[0].mxu0
          %v5018 = vpop.f32.mrb[0].mxu0
          %5019 = vdwg.mxu0
          %5020 = vmatprep.subr.bf16.mxu0 %v4416
          %5021 = vmatpush1.bf16.msra.mxu0 %v4415
          %5022 = vmatprep.subr.bf16.mxu0 %v4420
          %5023 = vmatpush1.bf16.msra.mxu0 %v4419
          %5024 = vmatprep.subr.bf16.mxu0 %v4424
          %5025 = vmatpush1.bf16.msra.mxu0 %v4423
          %5026 = vmatprep.subr.bf16.mxu0 %v4428
          %5027 = vmatpush1.bf16.msra.mxu0 %v4427
          %5028 = vmatprep.subr.bf16.mxu0 %v4432
          %5029 = vmatpush1.bf16.msra.mxu0 %v4431
          %5030 = vmatprep.subr.bf16.mxu0 %v4436
          %5031 = vmatpush1.bf16.msra.mxu0 %v4435
          %5032 = vmatprep.subr.bf16.mxu0 %v4440
          %5033 = vmatpush1.bf16.msra.mxu0 %v4439
          %5034 = vmatprep.subr.bf16.mxu0 %v4444
          %5035 = vmatpush1.bf16.msra.mxu0 %v4443
          %5036 = vmatprep.subr.bf16.mxu0 %v4448
          %5037 = vmatpush1.bf16.msra.mxu0 %v4447
          %5038 = vmatprep.subr.bf16.mxu0 %v4452
          %5039 = vmatpush1.bf16.msra.mxu0 %v4451
          %5040 = vmatprep.subr.bf16.mxu0 %v4456
          %5041 = vmatpush1.bf16.msra.mxu0 %v4455
          %5042 = vmatprep.subr.bf16.mxu0 %v4460
          %5043 = vmatpush1.bf16.msra.mxu0 %v4459
          %5044 = vmatprep.subr.bf16.mxu0 %v4464
          %5045 = vmatpush1.bf16.msra.mxu0 %v4463
          %5046 = vmatprep.subr.bf16.mxu0 %v4468
          %5047 = vmatpush1.bf16.msra.mxu0 %v4467
          %5048 = vmatprep.subr.bf16.mxu0 %v4472
          %5049 = vmatpush1.bf16.msra.mxu0 %v4471
          %5050 = vmatprep.subr.bf16.mxu0 %v4476
          %5051 = vmatpush1.bf16.msra.mxu0 %v4475
          %5052 = vmatprep.mubr.bf16.mxu0 %v3174
          %5053 = vmatmul.mubr.bf16.gmra.mrb[0].mxu0 %v3173
          %v5054 = vpop.f32.mrb[0].mxu0
          %v5055 = vadd.f32 %v5014, %v5054
          %v5056 = vpop.f32.mrb[0].mxu0
          %v5057 = vadd.f32 %v5016, %v5056
          %v5058 = vpop.f32.mrb[0].mxu0
          %v5059 = vpop.f32.mrb[0].mxu0
          %5060 = vdwg.mxu0
          %v5061 = vmax.f32 %v4891, 0.0
          %v5062 = vmax.f32 %v4893, 0.0
          %v5063 = vmax.f32 %v5055, 0.0
          %v5064 = vmax.f32 %v5057, 0.0
          %v5065 = vpack.c.bf16 %v5061, %v5061
          %v5066 = vpack.c.bf16 %v5062, %v5062
          %v5067 = vpack.c.bf16 %v5063, %v5063
          %v5068 = vpack.c.bf16 %v5064, %v5064
          %v5069 = vld [vmem:[#allocation16] sm:$0xff]
          %v5070 = vld [vmem:[#allocation16 + $0x8] sm:$0xff]
          %v5071 = vld [vmem:[#allocation16 + $0x10] sm:$0xff]
          %v5072 = vld [vmem:[#allocation16 + $0x18] sm:$0xff]
          %v5073 = vld [vmem:[#allocation16 + $0x20] sm:$0xff]
          %v5074 = vld [vmem:[#allocation16 + $0x28] sm:$0xff]
          %v5075 = vld [vmem:[#allocation16 + $0x30] sm:$0xff]
          %v5076 = vld [vmem:[#allocation16 + $0x38] sm:$0xff]
          %v5077 = vld [vmem:[#allocation16 + $0x40] sm:$0xff]
          %v5078 = vld [vmem:[#allocation16 + $0x48] sm:$0xff]
          %v5079 = vld [vmem:[#allocation16 + $0x50] sm:$0xff]
          %v5080 = vld [vmem:[#allocation16 + $0x58] sm:$0xff]
          %v5081 = vld [vmem:[#allocation16 + $0x60] sm:$0xff]
          %v5082 = vld [vmem:[#allocation16 + $0x68] sm:$0xff]
          %v5083 = vld [vmem:[#allocation16 + $0x70] sm:$0xff]
          %v5084 = vld [vmem:[#allocation16 + $0x78] sm:$0xff]
          %v5085 = vld [vmem:[#allocation16 + $0x80] sm:$0xff]
          %v5086 = vld [vmem:[#allocation16 + $0x88] sm:$0xff]
          %v5087 = vld [vmem:[#allocation16 + $0x90] sm:$0xff]
          %v5088 = vld [vmem:[#allocation16 + $0x98] sm:$0xff]
          %v5089 = vld [vmem:[#allocation16 + $0xa0] sm:$0xff]
          %v5090 = vld [vmem:[#allocation16 + $0xa8] sm:$0xff]
          %v5091 = vld [vmem:[#allocation16 + $0xb0] sm:$0xff]
          %v5092 = vld [vmem:[#allocation16 + $0xb8] sm:$0xff]
          %v5093 = vld [vmem:[#allocation16 + $0xc0] sm:$0xff]
          %v5094 = vld [vmem:[#allocation16 + $0xc8] sm:$0xff]
          %v5095 = vld [vmem:[#allocation16 + $0xd0] sm:$0xff]
          %v5096 = vld [vmem:[#allocation16 + $0xd8] sm:$0xff]
          %v5097 = vld [vmem:[#allocation16 + $0xe0] sm:$0xff]
          %v5098 = vld [vmem:[#allocation16 + $0xe8] sm:$0xff]
          %v5099 = vld [vmem:[#allocation16 + $0xf0] sm:$0xff]
          %v5100 = vld [vmem:[#allocation16 + $0xf8] sm:$0xff]
          %v5101 = vld [vmem:[#allocation16 + $0x100] sm:$0xff]
          %v5102 = vld [vmem:[#allocation16 + $0x108] sm:$0xff]
          %v5103 = vld [vmem:[#allocation16 + $0x110] sm:$0xff]
          %v5104 = vld [vmem:[#allocation16 + $0x118] sm:$0xff]
          %v5105 = vld [vmem:[#allocation16 + $0x120] sm:$0xff]
          %v5106 = vld [vmem:[#allocation16 + $0x128] sm:$0xff]
          %v5107 = vld [vmem:[#allocation16 + $0x130] sm:$0xff]
          %v5108 = vld [vmem:[#allocation16 + $0x138] sm:$0xff]
          %v5109 = vld [vmem:[#allocation16 + $0x140] sm:$0xff]
          %v5110 = vld [vmem:[#allocation16 + $0x148] sm:$0xff]
          %v5111 = vld [vmem:[#allocation16 + $0x150] sm:$0xff]
          %v5112 = vld [vmem:[#allocation16 + $0x158] sm:$0xff]
          %v5113 = vld [vmem:[#allocation16 + $0x160] sm:$0xff]
          %v5114 = vld [vmem:[#allocation16 + $0x168] sm:$0xff]
          %v5115 = vld [vmem:[#allocation16 + $0x170] sm:$0xff]
          %v5116 = vld [vmem:[#allocation16 + $0x178] sm:$0xff]
          %v5117 = vld [vmem:[#allocation16 + $0x180] sm:$0xff]
          %v5118 = vld [vmem:[#allocation16 + $0x188] sm:$0xff]
          %v5119 = vld [vmem:[#allocation16 + $0x190] sm:$0xff]
          %v5120 = vld [vmem:[#allocation16 + $0x198] sm:$0xff]
          %v5121 = vld [vmem:[#allocation16 + $0x1a0] sm:$0xff]
          %v5122 = vld [vmem:[#allocation16 + $0x1a8] sm:$0xff]
          %v5123 = vld [vmem:[#allocation16 + $0x1b0] sm:$0xff]
          %v5124 = vld [vmem:[#allocation16 + $0x1b8] sm:$0xff]
          %v5125 = vld [vmem:[#allocation16 + $0x1c0] sm:$0xff]
          %v5126 = vld [vmem:[#allocation16 + $0x1c8] sm:$0xff]
          %v5127 = vld [vmem:[#allocation16 + $0x1d0] sm:$0xff]
          %v5128 = vld [vmem:[#allocation16 + $0x1d8] sm:$0xff]
          %v5129 = vld [vmem:[#allocation16 + $0x1e0] sm:$0xff]
          %v5130 = vld [vmem:[#allocation16 + $0x1e8] sm:$0xff]
          %v5131 = vld [vmem:[#allocation16 + $0x1f0] sm:$0xff]
          %v5132 = vld [vmem:[#allocation16 + $0x1f8] sm:$0xff]
          %v5133 = vld [vmem:[#allocation18] sm:$0x3]
          %v5135 = vlaneseq
          %v5136 = vshrl.u32 %v5135, 7
          %v5137 = vsub.s32 0, %v5136
          %v5138 = vrot.slane %v5133, %v5137
          %v5139 = vlaneseq
          %v5140 = vshrl.u32 %v5139, 7
          %v5141 = vsub.s32 1, %v5140
          %v5142 = vrot.slane %v5133, %v5141
          %v5209 = vunpack.c.l.b16 %v5069
          %v5210 = vunpack.c.h.b16 %v5069
          %v5211 = vunpack.c.l.b16 %v5070
          %v5212 = vunpack.c.h.b16 %v5070
          %v5213 = vunpack.c.l.b16 %v5071
          %v5214 = vunpack.c.h.b16 %v5071
          %v5215 = vunpack.c.l.b16 %v5072
          %v5216 = vunpack.c.h.b16 %v5072
          %v5217 = vunpack.c.l.b16 %v5073
          %v5218 = vunpack.c.h.b16 %v5073
          %v5219 = vunpack.c.l.b16 %v5074
          %v5220 = vunpack.c.h.b16 %v5074
          %v5221 = vunpack.c.l.b16 %v5075
          %v5222 = vunpack.c.h.b16 %v5075
          %v5223 = vunpack.c.l.b16 %v5076
          %v5224 = vunpack.c.h.b16 %v5076
          %v5225 = vunpack.c.l.b16 %v5077
          %v5226 = vunpack.c.h.b16 %v5077
          %v5227 = vunpack.c.l.b16 %v5078
          %v5228 = vunpack.c.h.b16 %v5078
          %v5229 = vunpack.c.l.b16 %v5079
          %v5230 = vunpack.c.h.b16 %v5079
          %v5231 = vunpack.c.l.b16 %v5080
          %v5232 = vunpack.c.h.b16 %v5080
          %v5233 = vunpack.c.l.b16 %v5081
          %v5234 = vunpack.c.h.b16 %v5081
          %v5235 = vunpack.c.l.b16 %v5082
          %v5236 = vunpack.c.h.b16 %v5082
          %v5237 = vunpack.c.l.b16 %v5083
          %v5238 = vunpack.c.h.b16 %v5083
          %v5239 = vunpack.c.l.b16 %v5084
          %v5240 = vunpack.c.h.b16 %v5084
          %v5241 = vunpack.c.l.b16 %v5085
          %v5242 = vunpack.c.h.b16 %v5085
          %v5243 = vunpack.c.l.b16 %v5086
          %v5244 = vunpack.c.h.b16 %v5086
          %v5245 = vunpack.c.l.b16 %v5087
          %v5246 = vunpack.c.h.b16 %v5087
          %v5247 = vunpack.c.l.b16 %v5088
          %v5248 = vunpack.c.h.b16 %v5088
          %v5249 = vunpack.c.l.b16 %v5089
          %v5250 = vunpack.c.h.b16 %v5089
          %v5251 = vunpack.c.l.b16 %v5090
          %v5252 = vunpack.c.h.b16 %v5090
          %v5253 = vunpack.c.l.b16 %v5091
          %v5254 = vunpack.c.h.b16 %v5091
          %v5255 = vunpack.c.l.b16 %v5092
          %v5256 = vunpack.c.h.b16 %v5092
          %v5257 = vunpack.c.l.b16 %v5093
          %v5258 = vunpack.c.h.b16 %v5093
          %v5259 = vunpack.c.l.b16 %v5094
          %v5260 = vunpack.c.h.b16 %v5094
          %v5261 = vunpack.c.l.b16 %v5095
          %v5262 = vunpack.c.h.b16 %v5095
          %v5263 = vunpack.c.l.b16 %v5096
          %v5264 = vunpack.c.h.b16 %v5096
          %v5265 = vunpack.c.l.b16 %v5097
          %v5266 = vunpack.c.h.b16 %v5097
          %v5267 = vunpack.c.l.b16 %v5098
          %v5268 = vunpack.c.h.b16 %v5098
          %v5269 = vunpack.c.l.b16 %v5099
          %v5270 = vunpack.c.h.b16 %v5099
          %v5271 = vunpack.c.l.b16 %v5100
          %v5272 = vunpack.c.h.b16 %v5100
          %v5273 = vunpack.c.l.b16 %v5101
          %v5274 = vunpack.c.h.b16 %v5101
          %v5275 = vunpack.c.l.b16 %v5102
          %v5276 = vunpack.c.h.b16 %v5102
          %v5277 = vunpack.c.l.b16 %v5103
          %v5278 = vunpack.c.h.b16 %v5103
          %v5279 = vunpack.c.l.b16 %v5104
          %v5280 = vunpack.c.h.b16 %v5104
          %v5281 = vunpack.c.l.b16 %v5105
          %v5282 = vunpack.c.h.b16 %v5105
          %v5283 = vunpack.c.l.b16 %v5106
          %v5284 = vunpack.c.h.b16 %v5106
          %v5285 = vunpack.c.l.b16 %v5107
          %v5286 = vunpack.c.h.b16 %v5107
          %v5287 = vunpack.c.l.b16 %v5108
          %v5288 = vunpack.c.h.b16 %v5108
          %v5289 = vunpack.c.l.b16 %v5109
          %v5290 = vunpack.c.h.b16 %v5109
          %v5291 = vunpack.c.l.b16 %v5110
          %v5292 = vunpack.c.h.b16 %v5110
          %v5293 = vunpack.c.l.b16 %v5111
          %v5294 = vunpack.c.h.b16 %v5111
          %v5295 = vunpack.c.l.b16 %v5112
          %v5296 = vunpack.c.h.b16 %v5112
          %v5297 = vunpack.c.l.b16 %v5113
          %v5298 = vunpack.c.h.b16 %v5113
          %v5299 = vunpack.c.l.b16 %v5114
          %v5300 = vunpack.c.h.b16 %v5114
          %v5301 = vunpack.c.l.b16 %v5115
          %v5302 = vunpack.c.h.b16 %v5115
          %v5303 = vunpack.c.l.b16 %v5116
          %v5304 = vunpack.c.h.b16 %v5116
          %v5305 = vunpack.c.l.b16 %v5117
          %v5306 = vunpack.c.h.b16 %v5117
          %v5307 = vunpack.c.l.b16 %v5118
          %v5308 = vunpack.c.h.b16 %v5118
          %v5309 = vunpack.c.l.b16 %v5119
          %v5310 = vunpack.c.h.b16 %v5119
          %v5311 = vunpack.c.l.b16 %v5120
          %v5312 = vunpack.c.h.b16 %v5120
          %v5313 = vunpack.c.l.b16 %v5121
          %v5314 = vunpack.c.h.b16 %v5121
          %v5315 = vunpack.c.l.b16 %v5122
          %v5316 = vunpack.c.h.b16 %v5122
          %v5317 = vunpack.c.l.b16 %v5123
          %v5318 = vunpack.c.h.b16 %v5123
          %v5319 = vunpack.c.l.b16 %v5124
          %v5320 = vunpack.c.h.b16 %v5124
          %v5321 = vunpack.c.l.b16 %v5125
          %v5322 = vunpack.c.h.b16 %v5125
          %v5323 = vunpack.c.l.b16 %v5126
          %v5324 = vunpack.c.h.b16 %v5126
          %v5325 = vunpack.c.l.b16 %v5127
          %v5326 = vunpack.c.h.b16 %v5127
          %v5327 = vunpack.c.l.b16 %v5128
          %v5328 = vunpack.c.h.b16 %v5128
          %v5329 = vunpack.c.l.b16 %v5129
          %v5330 = vunpack.c.h.b16 %v5129
          %v5331 = vunpack.c.l.b16 %v5130
          %v5332 = vunpack.c.h.b16 %v5130
          %v5333 = vunpack.c.l.b16 %v5131
          %v5334 = vunpack.c.h.b16 %v5131
          %v5335 = vunpack.c.l.b16 %v5132
          %v5336 = vunpack.c.h.b16 %v5132
          %v5337 = vpack.c.b16 %v5211, %v5209
          %v5338 = vpack.c.b16 %v5212, %v5210
          %v5339 = vpack.c.b16 %v5215, %v5213
          %v5340 = vpack.c.b16 %v5216, %v5214
          %v5341 = vpack.c.b16 %v5219, %v5217
          %v5342 = vpack.c.b16 %v5220, %v5218
          %v5343 = vpack.c.b16 %v5223, %v5221
          %v5344 = vpack.c.b16 %v5224, %v5222
          %v5345 = vpack.c.b16 %v5227, %v5225
          %v5346 = vpack.c.b16 %v5228, %v5226
          %v5347 = vpack.c.b16 %v5231, %v5229
          %v5348 = vpack.c.b16 %v5232, %v5230
          %v5349 = vpack.c.b16 %v5235, %v5233
          %v5350 = vpack.c.b16 %v5236, %v5234
          %v5351 = vpack.c.b16 %v5239, %v5237
          %v5352 = vpack.c.b16 %v5240, %v5238
          %v5353 = vpack.c.b16 %v5243, %v5241
          %v5354 = vpack.c.b16 %v5244, %v5242
          %v5355 = vpack.c.b16 %v5247, %v5245
          %v5356 = vpack.c.b16 %v5248, %v5246
          %v5357 = vpack.c.b16 %v5251, %v5249
          %v5358 = vpack.c.b16 %v5252, %v5250
          %v5359 = vpack.c.b16 %v5255, %v5253
          %v5360 = vpack.c.b16 %v5256, %v5254
          %v5361 = vpack.c.b16 %v5259, %v5257
          %v5362 = vpack.c.b16 %v5260, %v5258
          %v5363 = vpack.c.b16 %v5263, %v5261
          %v5364 = vpack.c.b16 %v5264, %v5262
          %v5365 = vpack.c.b16 %v5267, %v5265
          %v5366 = vpack.c.b16 %v5268, %v5266
          %v5367 = vpack.c.b16 %v5271, %v5269
          %v5368 = vpack.c.b16 %v5272, %v5270
          %v5369 = vpack.c.b16 %v5275, %v5273
          %v5370 = vpack.c.b16 %v5276, %v5274
          %v5371 = vpack.c.b16 %v5279, %v5277
          %v5372 = vpack.c.b16 %v5280, %v5278
          %v5373 = vpack.c.b16 %v5283, %v5281
          %v5374 = vpack.c.b16 %v5284, %v5282
          %v5375 = vpack.c.b16 %v5287, %v5285
          %v5376 = vpack.c.b16 %v5288, %v5286
          %v5377 = vpack.c.b16 %v5291, %v5289
          %v5378 = vpack.c.b16 %v5292, %v5290
          %v5379 = vpack.c.b16 %v5295, %v5293
          %v5380 = vpack.c.b16 %v5296, %v5294
          %v5381 = vpack.c.b16 %v5299, %v5297
          %v5382 = vpack.c.b16 %v5300, %v5298
          %v5383 = vpack.c.b16 %v5303, %v5301
          %v5384 = vpack.c.b16 %v5304, %v5302
          %v5385 = vpack.c.b16 %v5307, %v5305
          %v5386 = vpack.c.b16 %v5308, %v5306
          %v5387 = vpack.c.b16 %v5311, %v5309
          %v5388 = vpack.c.b16 %v5312, %v5310
          %v5389 = vpack.c.b16 %v5315, %v5313
          %v5390 = vpack.c.b16 %v5316, %v5314
          %v5391 = vpack.c.b16 %v5319, %v5317
          %v5392 = vpack.c.b16 %v5320, %v5318
          %v5393 = vpack.c.b16 %v5323, %v5321
          %v5394 = vpack.c.b16 %v5324, %v5322
          %v5395 = vpack.c.b16 %v5327, %v5325
          %v5396 = vpack.c.b16 %v5328, %v5326
          %v5397 = vpack.c.b16 %v5331, %v5329
          %v5398 = vpack.c.b16 %v5332, %v5330
          %v5399 = vpack.c.b16 %v5335, %v5333
          %v5400 = vpack.c.b16 %v5336, %v5334
          %5465 = vmatprep.subr.bf16.mxu0 %v5338
          %5466 = vmatpush1.bf16.msra.mxu0 %v5337
          %5467 = vmatprep.subr.bf16.mxu0 %v5340
          %5468 = vmatpush1.bf16.msra.mxu0 %v5339
          %5469 = vmatprep.subr.bf16.mxu0 %v5342
          %5470 = vmatpush1.bf16.msra.mxu0 %v5341
          %5471 = vmatprep.subr.bf16.mxu0 %v5344
          %5472 = vmatpush1.bf16.msra.mxu0 %v5343
          %5473 = vmatprep.subr.bf16.mxu0 %v5346
          %5474 = vmatpush1.bf16.msra.mxu0 %v5345
          %5475 = vmatprep.subr.bf16.mxu0 %v5348
          %5476 = vmatpush1.bf16.msra.mxu0 %v5347
          %5477 = vmatprep.subr.bf16.mxu0 %v5350
          %5478 = vmatpush1.bf16.msra.mxu0 %v5349
          %5479 = vmatprep.subr.bf16.mxu0 %v5352
          %5480 = vmatpush1.bf16.msra.mxu0 %v5351
          %5481 = vmatprep.subr.bf16.mxu0 %v5354
          %5482 = vmatpush1.bf16.msra.mxu0 %v5353
          %5483 = vmatprep.subr.bf16.mxu0 %v5356
          %5484 = vmatpush1.bf16.msra.mxu0 %v5355
          %5485 = vmatprep.subr.bf16.mxu0 %v5358
          %5486 = vmatpush1.bf16.msra.mxu0 %v5357
          %5487 = vmatprep.subr.bf16.mxu0 %v5360
          %5488 = vmatpush1.bf16.msra.mxu0 %v5359
          %5489 = vmatprep.subr.bf16.mxu0 %v5362
          %5490 = vmatpush1.bf16.msra.mxu0 %v5361
          %5491 = vmatprep.subr.bf16.mxu0 %v5364
          %5492 = vmatpush1.bf16.msra.mxu0 %v5363
          %5493 = vmatprep.subr.bf16.mxu0 %v5366
          %5494 = vmatpush1.bf16.msra.mxu0 %v5365
          %5495 = vmatprep.subr.bf16.mxu0 %v5368
          %5496 = vmatpush1.bf16.msra.mxu0 %v5367
          %5497 = vmatprep.mubr.bf16.mxu0 %v5066
          %5498 = vmatmul.mubr.bf16.gmra.mrb[0].mxu0 %v5065
          %v5499 = vpop.f32.mrb[0].mxu0
          %v5500 = vadd.f32 %v5138, %v5499
          %v5501 = vpop.f32.mrb[0].mxu0
          %v5502 = vadd.f32 %v5142, %v5501
          %v5503 = vpop.f32.mrb[0].mxu0
          %v5504 = vpop.f32.mrb[0].mxu0
          %5505 = vdwg.mxu0
          %5506 = vmatprep.subr.bf16.mxu0 %v5370
          %5507 = vmatpush1.bf16.msra.mxu0 %v5369
          %5508 = vmatprep.subr.bf16.mxu0 %v5372
          %5509 = vmatpush1.bf16.msra.mxu0 %v5371
          %5510 = vmatprep.subr.bf16.mxu0 %v5374
          %5511 = vmatpush1.bf16.msra.mxu0 %v5373
          %5512 = vmatprep.subr.bf16.mxu0 %v5376
          %5513 = vmatpush1.bf16.msra.mxu0 %v5375
          %5514 = vmatprep.subr.bf16.mxu0 %v5378
          %5515 = vmatpush1.bf16.msra.mxu0 %v5377
          %5516 = vmatprep.subr.bf16.mxu0 %v5380
          %5517 = vmatpush1.bf16.msra.mxu0 %v5379
          %5518 = vmatprep.subr.bf16.mxu0 %v5382
          %5519 = vmatpush1.bf16.msra.mxu0 %v5381
          %5520 = vmatprep.subr.bf16.mxu0 %v5384
          %5521 = vmatpush1.bf16.msra.mxu0 %v5383
          %5522 = vmatprep.subr.bf16.mxu0 %v5386
          %5523 = vmatpush1.bf16.msra.mxu0 %v5385
          %5524 = vmatprep.subr.bf16.mxu0 %v5388
          %5525 = vmatpush1.bf16.msra.mxu0 %v5387
          %5526 = vmatprep.subr.bf16.mxu0 %v5390
          %5527 = vmatpush1.bf16.msra.mxu0 %v5389
          %5528 = vmatprep.subr.bf16.mxu0 %v5392
          %5529 = vmatpush1.bf16.msra.mxu0 %v5391
          %5530 = vmatprep.subr.bf16.mxu0 %v5394
          %5531 = vmatpush1.bf16.msra.mxu0 %v5393
          %5532 = vmatprep.subr.bf16.mxu0 %v5396
          %5533 = vmatpush1.bf16.msra.mxu0 %v5395
          %5534 = vmatprep.subr.bf16.mxu0 %v5398
          %5535 = vmatpush1.bf16.msra.mxu0 %v5397
          %5536 = vmatprep.subr.bf16.mxu0 %v5400
          %5537 = vmatpush1.bf16.msra.mxu0 %v5399
          %5538 = vmatprep.mubr.bf16.mxu0 %v5068
          %5539 = vmatmul.mubr.bf16.gmra.mrb[0].mxu0 %v5067
          %v5540 = vpop.f32.mrb[0].mxu0
          %v5541 = vadd.f32 %v5500, %v5540
          %v5542 = vpop.f32.mrb[0].mxu0
          %v5543 = vadd.f32 %v5502, %v5542
          %v5544 = vpop.f32.mrb[0].mxu0
          %v5545 = vpop.f32.mrb[0].mxu0
          %5546 = vdwg.mxu0
          %v5547 = vmax.f32 %v5541, 0.0
          %v5548 = vmax.f32 %v5543, 0.0
          %v5549 = vld [vmem:[%s11] sm:$0xff]
          %v5550 = vld [vmem:[%s11 + $0x8] sm:$0xff]
          %v5551 = vld [vmem:[%s11 + $0x10] sm:$0xff]
          %v5552 = vld [vmem:[%s11 + $0x18] sm:$0xff]
          %v5553 = vld [vmem:[%s11 + $0x20] sm:$0xff]
          %v5554 = vld [vmem:[%s11 + $0x28] sm:$0xff]
          %v5555 = vld [vmem:[%s11 + $0x30] sm:$0xff]
          %v5556 = vld [vmem:[%s11 + $0x38] sm:$0xff]
          %v5557 = vld [vmem:[%s11 + $0x40] sm:$0xff]
          %v5558 = vld [vmem:[%s11 + $0x48] sm:$0xff]
          %v5559 = vld [vmem:[%s11 + $0x50] sm:$0xff]
          %v5560 = vld [vmem:[%s11 + $0x58] sm:$0xff]
          %v5561 = vld [vmem:[%s11 + $0x60] sm:$0xff]
          %v5562 = vld [vmem:[%s11 + $0x68] sm:$0xff]
          %v5563 = vld [vmem:[%s11 + $0x70] sm:$0xff]
          %v5564 = vld [vmem:[%s11 + $0x78] sm:$0xff]
          %v5565 = vld [vmem:[%s11 + $0x80] sm:$0xff]
          %v5566 = vld [vmem:[%s11 + $0x88] sm:$0xff]
          %v5567 = vld [vmem:[%s11 + $0x90] sm:$0xff]
          %v5568 = vld [vmem:[%s11 + $0x98] sm:$0xff]
          %v5569 = vld [vmem:[%s11 + $0xa0] sm:$0xff]
          %v5570 = vld [vmem:[%s11 + $0xa8] sm:$0xff]
          %v5571 = vld [vmem:[%s11 + $0xb0] sm:$0xff]
          %v5572 = vld [vmem:[%s11 + $0xb8] sm:$0xff]
          %v5573 = vld [vmem:[%s11 + $0xc0] sm:$0xff]
          %v5574 = vld [vmem:[%s11 + $0xc8] sm:$0xff]
          %v5575 = vld [vmem:[%s11 + $0xd0] sm:$0xff]
          %v5576 = vld [vmem:[%s11 + $0xd8] sm:$0xff]
          %v5577 = vld [vmem:[%s11 + $0xe0] sm:$0xff]
          %v5578 = vld [vmem:[%s11 + $0xe8] sm:$0xff]
          %v5579 = vld [vmem:[%s11 + $0xf0] sm:$0xff]
          %v5580 = vld [vmem:[%s11 + $0xf8] sm:$0xff]
          %v5581 = vld [vmem:[%s12] sm:$0x1]
          %v5583 = vlaneseq
          %v5584 = vshrl.u32 %v5583, 7
          %v5585 = vsub.s32 0, %v5584
          %v5586 = vrot.slane %v5581, %v5585
          %5588 = vmatprep.subr.mxu0 0.0
          %5589 = vmatpush1.msra.mxu0 %v5549
          %5590 = vmatprep.subr.mxu0 0.0
          %5591 = vmatpush1.msra.mxu0 %v5550
          %5592 = vmatprep.subr.mxu0 0.0
          %5593 = vmatpush1.msra.mxu0 %v5551
          %5594 = vmatprep.subr.mxu0 0.0
          %5595 = vmatpush1.msra.mxu0 %v5552
          %5596 = vmatprep.subr.mxu0 0.0
          %5597 = vmatpush1.msra.mxu0 %v5553
          %5598 = vmatprep.subr.mxu0 0.0
          %5599 = vmatpush1.msra.mxu0 %v5554
          %5600 = vmatprep.subr.mxu0 0.0
          %5601 = vmatpush1.msra.mxu0 %v5555
          %5602 = vmatprep.subr.mxu0 0.0
          %5603 = vmatpush1.msra.mxu0 %v5556
          %5604 = vmatprep.subr.mxu0 0.0
          %5605 = vmatpush1.msra.mxu0 %v5557
          %5606 = vmatprep.subr.mxu0 0.0
          %5607 = vmatpush1.msra.mxu0 %v5558
          %5608 = vmatprep.subr.mxu0 0.0
          %5609 = vmatpush1.msra.mxu0 %v5559
          %5610 = vmatprep.subr.mxu0 0.0
          %5611 = vmatpush1.msra.mxu0 %v5560
          %5612 = vmatprep.subr.mxu0 0.0
          %5613 = vmatpush1.msra.mxu0 %v5561
          %5614 = vmatprep.subr.mxu0 0.0
          %5615 = vmatpush1.msra.mxu0 %v5562
          %5616 = vmatprep.subr.mxu0 0.0
          %5617 = vmatpush1.msra.mxu0 %v5563
          %5618 = vmatprep.subr.mxu0 0.0
          %5619 = vmatpush1.msra.mxu0 %v5564
          %5620 = vmatprep.subr.mxu0 0.0
          %5621 = vmatpush1.msra.mxu0 %v5565
          %5622 = vmatprep.subr.mxu0 0.0
          %5623 = vmatpush1.msra.mxu0 %v5566
          %5624 = vmatprep.subr.mxu0 0.0
          %5625 = vmatpush1.msra.mxu0 %v5567
          %5626 = vmatprep.subr.mxu0 0.0
          %5627 = vmatpush1.msra.mxu0 %v5568
          %5628 = vmatprep.subr.mxu0 0.0
          %5629 = vmatpush1.msra.mxu0 %v5569
          %5630 = vmatprep.subr.mxu0 0.0
          %5631 = vmatpush1.msra.mxu0 %v5570
          %5632 = vmatprep.subr.mxu0 0.0
          %5633 = vmatpush1.msra.mxu0 %v5571
          %5634 = vmatprep.subr.mxu0 0.0
          %5635 = vmatpush1.msra.mxu0 %v5572
          %5636 = vmatprep.subr.mxu0 0.0
          %5637 = vmatpush1.msra.mxu0 %v5573
          %5638 = vmatprep.subr.mxu0 0.0
          %5639 = vmatpush1.msra.mxu0 %v5574
          %5640 = vmatprep.subr.mxu0 0.0
          %5641 = vmatpush1.msra.mxu0 %v5575
          %5642 = vmatprep.subr.mxu0 0.0
          %5643 = vmatpush1.msra.mxu0 %v5576
          %5644 = vmatprep.subr.mxu0 0.0
          %5645 = vmatpush1.msra.mxu0 %v5577
          %5646 = vmatprep.subr.mxu0 0.0
          %5647 = vmatpush1.msra.mxu0 %v5578
          %5648 = vmatprep.subr.mxu0 0.0
          %5649 = vmatpush1.msra.mxu0 %v5579
          %5650 = vmatprep.subr.mxu0 0.0
          %5651 = vmatpush1.msra.mxu0 %v5580
          %5652 = vmatprep.mubr.f32.mxu0 %v5548
          %5653 = vmatmul.mubr.f32.gmra.mrb[0].mxu0 %v5547
          %v5654 = vpop.f32.mrb[0].mxu0
          %v5655 = vadd.f32 %v5586, %v5654
          %v5656 = vpop.f32.mrb[0].mxu0
          %5657 = vdwg.mxu0
          %5658 = vst [vmem:[%s645] sm:$0xff] %v5655
        $region157: #{tpu_custom_call.1} parent=108 // pred_fallthru
          _
        %s5659 = sand.u32 %s332, 1
        %s5660 = scalar_lea.sflag [#allocation6], %s5659
        %s5661 = sand.u32 %s332, 1
        %s5662 = smul.addr %s5661, 8
        %s5663 = scalar_lea.vmem [#allocation19], %s5662
        // Predicated region
        $region158: #{tpu_custom_call.1} parent=108 // pred_check
          %p5664 = pneg %p342
        $region159: #{tpu_custom_call.1} parent=108 // pred_check_branch
          %5666 = sbr.rel (%p5664) target = $region161
        $region160: #{tpu_custom_call.1} parent=108 // pred_region
          %s5668 = ssub.s32 128, 128
          %5669 = vsyncadd %s5660, %s5668
          %s5670 = smul.addr %s36, 128
          %s5671 = scalar_lea.hbm %s13, %s5670
          %s5673 = sshll.u32 %s5663, 4
          %s5674 = int_to_ptr.vmem [resolvable:$true] %s5673
          %5676 = dma.vmem_to_hbm [thread:$0]  %s5674, 128, %s5671, %s5660
        $region161: #{tpu_custom_call.1} parent=108 // pred_fallthru
          _
      $region109: #{tpu_custom_call.1} parent=5 // pred_fallthru
        _
      %p5677 = scmp.le.s32.totalorder 2, %s27
      // Predicated region
      $region162: #{tpu_custom_call.1} parent=5 // pred_check
        %p5678 = pneg %p5677
      $region163: #{tpu_custom_call.1} parent=5 // pred_check_branch
        %5680 = sbr.rel (%p5678) target = $region165
      $region164: #{tpu_custom_call.1} parent=5 // pred_region
        %s5681 = ssub.s32 %s27, 2
        // Predicated region
        $region166: #{tpu_custom_call.1} parent=164 // pred_check
          %p5682 = pneg %p348
        $region167: #{tpu_custom_call.1} parent=164 // pred_check_branch
          %5684 = sbr.rel (%p5682) target = $region169
        $region168: #{tpu_custom_call.1} parent=164 // pred_region
          %s5685 = sand.u32 %s333, 1
          %s5686 = scalar_lea.sflag [#allocation6], %s5685
          %s5687 = sand.u32 %s333, 1
          %s5688 = smul.addr %s5687, 8
          %s5689 = scalar_lea.vmem [#allocation19], %s5688
          %5690 = dma.done %s5686, 128
        $region169: #{tpu_custom_call.1} parent=164 // pred_fallthru
          _
      $region165: #{tpu_custom_call.1} parent=5 // pred_fallthru
        _
    $region6: #{tpu_custom_call.1} parent=1 // loop_footer
      %s31 = sadd.s32 1, %s27
    $region7: #{tpu_custom_call.1} parent=1 // loop_footer_branch
      %26 = sbr.rel target = $region3
    $region8: #{tpu_custom_call.1} parent=1 // loop_exit
      _
    %5691 = vsyncpa [#allocation5], 1
    %s5692 = scalar_lea.sflag [#allocation5], 1
    %5693 = vsyncpa %s5692, 1
    %5694 = vsyncpa [#allocation8], 1
    %5695 = vsyncpa [#allocation11], 1
    %5696 = vsyncpa [#allocation14], 1
    %5697 = vsyncpa [#allocation17], 1
    %5698 = vsyncpa [#allocation6], 1
    %s5699 = scalar_lea.sflag [#allocation6], 1
    %5700 = vsyncpa %s5699, 1

</llo_original>
